<compile_context>
chip_gen: v5e
topology: v5e:2x2
jax: 0.10.0
libtpu: 0.0.40
codegen_flags: <defaults>
</compile_context>

<pallas_src>
import functools

import jax
import jax.numpy as jnp
import numpy as np
from jax import lax
from jax.experimental import pallas as pl
from jax.experimental.pallas import tpu as pltpu

_SQRT_HALF = 0.7071067811865476


def _round_up(n, m):
    return (n + m - 1) // m * m


def _erf_approx(x):
    # Abramowitz & Stegun 7.1.26, |error| <= 1.5e-7 over all x (f32).
    # Uses only mul/add/div/exp, all natively lowered by Mosaic (exp -> EUP slot).
    a1, a2, a3, a4, a5 = (0.254829592, -0.284496736, 1.421413741,
                          -1.453152027, 1.061405429)
    p = 0.3275911
    ax = jnp.abs(x)
    t = 1.0 / (1.0 + p * ax)
    poly = ((((a5 * t + a4) * t + a3) * t + a2) * t + a1) * t
    e = 1.0 - poly * jnp.exp(-ax * ax)
    return jnp.where(x < 0, -e, e)


# ----------------------------------------------------------------------------
# In-kernel building block: 3x3 "same" correlation from a zero-haloed scratch,
# + channel LayerNorm + exact (erf) GELU.   Returns (H, W, Cout) float32.
# ----------------------------------------------------------------------------
def _conv3x3_ln_gelu(pad_ref, w_ref, b_ref, g_ref, beta_ref, *, H, W, Wp, Cout, eps):
    # pad_ref : (H+2, Wp, Cin) VMEM scratch; image at [1:H+1, 1:W+1, :], zeros elsewhere
    # w_ref   : (3, Cin, 3*Cout); w_ref[dy][:, dx*Cout:(dx+1)*Cout] is tap (dy, dx)
    # b_ref, g_ref, beta_ref : (1, Cout) f32
    Cin = pad_ref.shape[-1]
    acc = None
    for dy in range(3):                                   # 3 MXU matmuls (unrolled)
        # contiguous leading-dim strip; Wp is sublane-tile aligned so reshape is free
        strip = pad_ref[dy:dy + H, :, :].reshape(H * Wp, Cin)
        r = jnp.dot(strip, w_ref[dy], preferred_element_type=jnp.float32)
        r = r.reshape(H, Wp, 3 * Cout)
        part = (r[:, 0:W, 0:Cout]
                + r[:, 1:W + 1, Cout:2 * Cout]
                + r[:, 2:W + 2, 2 * Cout:3 * Cout])
        acc = part if acc is None else acc + part
    acc = acc + b_ref[...]                                # conv bias, (1, Cout) broadcast

    # LayerNorm over the channel (last) dim, biased variance, eps = 1e-6
    mu = jnp.mean(acc, axis=-1, keepdims=True)
    var = jnp.mean((acc - mu) ** 2, axis=-1, keepdims=True)
    y = (acc - mu) * lax.rsqrt(var + eps)
    y = y * g_ref[...] + beta_ref[...]

    # exact (erf-based) GELU, matching torch.nn.GELU() default
    return 0.5 * y * (1.0 + _erf_approx(y * _SQRT_HALF))


# ----------------------------------------------------------------------------
# Fused kernel: conv1 + LN + GELU + conv2 + LN + GELU for one batch image.
# ----------------------------------------------------------------------------
def same_up_conv_kernel(x_ref, w1_ref, b1_ref, w2_ref, b2_ref, g_ref, beta_ref,
                        o_ref, xpad, midpad, *, H, W, Wp, Cout, eps):
    # Stage the (glue-padded) input into the Wp-wide zero-haloed VMEM scratch.
    # Scratches are re-zeroed every grid step so correctness holds if the batch axis
    # is split across TensorCores (each core owns its own scratch); the memsets are
    # a few tens of KB.
    xpad[...] = jnp.zeros_like(xpad)
    midpad[...] = jnp.zeros_like(midpad)
    xpad[:, : W + 2, :] = x_ref[0]                 # aligned sublane store (offset 0)

    y1 = _conv3x3_ln_gelu(xpad, w1_ref, b1_ref, g_ref, beta_ref,
                          H=H, W=W, Wp=Wp, Cout=Cout, eps=eps)
    # intermediate never leaves VMEM; kept in f32 (faithful to the f32 torch module)
    midpad[1:H + 1, 1:W + 1, :] = y1

    y2 = _conv3x3_ln_gelu(midpad, w2_ref, b2_ref, g_ref, beta_ref,
                          H=H, W=W, Wp=Wp, Cout=Cout, eps=eps)

    o_ref[...] = y2.reshape(1, H, W, Cout)         # NHWC block store, no in-kernel relayout


# ----------------------------------------------------------------------------
# Parameter handling / glue
# ----------------------------------------------------------------------------
def _convT_to_strip_layout(w_t, dtype):
    """PyTorch ConvTranspose2d weight (Cin, Cout, 3, 3) -> correlation weights laid out
    per row-strip: (3, Cin, 3*Cout), where [dy][:, dx*Cout:(dx+1)*Cout] = tap (dy, dx)."""
    w_hwio = jnp.transpose(jnp.flip(w_t, axis=(2, 3)), (2, 3, 0, 1))     # (3, 3, Cin, Cout)
    k, _, cin, cout = w_hwio.shape
    w = jnp.transpose(w_hwio, (0, 2, 1, 3)).reshape(k, cin, k * cout)    # (3, Cin, 3*Cout)
    return w.astype(dtype)


def init_params(key, mid_channels):
    k1, k2, k3, k4 = jax.random.split(key, 4)
    return {
        # PyTorch-shaped ConvTranspose2d weights: (in_channels, out_channels, 3, 3)
        "w1_t": 0.05 * jax.random.normal(k1, (192, mid_channels, 3, 3), jnp.float32),
        "b1":   0.05 * jax.random.normal(k2, (mid_channels,), jnp.float32),
        "w2_t": 0.05 * jax.random.normal(k3, (mid_channels, mid_channels, 3, 3), jnp.float32),
        "b2":   0.05 * jax.random.normal(k4, (mid_channels,), jnp.float32),
        # LayerNorm params (shared by both norm applications, as in the torch module)
        "gamma": jnp.ones((mid_channels,), jnp.float32),
        "beta":  jnp.zeros((mid_channels,), jnp.float32),
    }


def same_up_conv_forward(x_nchw, params, eps=1e-6):
    """Forward pass of same_Up_conv; input/output in PyTorch NCHW layout."""
    B, Cin, H, W = x_nchw.shape
    Cout = params["b1"].shape[0]
    Wp = _round_up(W + 2, 16)                     # sublane-tile-aligned padded width

    x = jnp.transpose(x_nchw, (0, 2, 3, 1)).astype(jnp.bfloat16)   # NCHW -> NHWC, bf16
    x = jnp.pad(x, ((0, 0), (1, 1), (1, 1), (0, 0)))               # spatial halo (cheap XLA pad)

    w1 = _convT_to_strip_layout(params["w1_t"], jnp.bfloat16)      # (3, Cin,  3*Cout) bf16
    w2 = _convT_to_strip_layout(params["w2_t"], jnp.float32)       # (3, Cout, 3*Cout) f32
    b1 = params["b1"].reshape(1, Cout).astype(jnp.float32)
    b2 = params["b2"].reshape(1, Cout).astype(jnp.float32)
    g = params["gamma"].reshape(1, Cout).astype(jnp.float32)
    be = params["beta"].reshape(1, Cout).astype(jnp.float32)

    kernel = functools.partial(same_up_conv_kernel, H=H, W=W, Wp=Wp, Cout=Cout, eps=eps)

    out = pl.pallas_call(
        kernel,
        out_shape=jax.ShapeDtypeStruct((B, H, W, Cout), jnp.float32),
        grid_spec=pltpu.PrefetchScalarGridSpec(
            num_scalar_prefetch=0,
            grid=(B,),
            in_specs=[
                pl.BlockSpec((1, H + 2, W + 2, Cin), lambda b: (b, 0, 0, 0)),
                pl.BlockSpec((3, Cin, 3 * Cout), lambda b: (0, 0, 0)),
                pl.BlockSpec((1, Cout), lambda b: (0, 0)),
                pl.BlockSpec((3, Cout, 3 * Cout), lambda b: (0, 0, 0)),
                pl.BlockSpec((1, Cout), lambda b: (0, 0)),
                pl.BlockSpec((1, Cout), lambda b: (0, 0)),
                pl.BlockSpec((1, Cout), lambda b: (0, 0)),
            ],
            out_specs=pl.BlockSpec((1, H, W, Cout), lambda b: (b, 0, 0, 0)),
            scratch_shapes=[
                pltpu.VMEM((H + 2, Wp, Cin), jnp.bfloat16),    # padded input staging
                pltpu.VMEM((H + 2, Wp, Cout), jnp.float32),    # padded intermediate
            ],
        ),
        compiler_params=pltpu.CompilerParams(
            dimension_semantics=("parallel",),
        ),
    )(x, w1, b1, w2, b2, g, be)

    return jnp.transpose(out, (0, 3, 1, 2))       # NHWC -> NCHW


# ----------------------------------------------------------------------------
# Pure-JAX reference (same numeric path: bf16 input/conv1-weights, f32 everything else)
# ----------------------------------------------------------------------------
def ref_forward(x_nchw, params, eps=1e-6):
    def bf16_round(a):
        return a.astype(jnp.bfloat16).astype(jnp.float32)

    def convT_w(w_t):
        return jnp.transpose(jnp.flip(w_t, axis=(2, 3)), (2, 3, 0, 1))   # (3,3,Cin,Cout) HWIO

    def block(x_nhwc, w_hwio, b):
        y = lax.conv_general_dilated(
            x_nhwc, w_hwio, window_strides=(1, 1), padding=((1, 1), (1, 1)),
            dimension_numbers=("NHWC", "HWIO", "NHWC"),
            precision=lax.Precision.HIGHEST)
        y = y + b
        mu = y.mean(-1, keepdims=True)
        var = ((y - mu) ** 2).mean(-1, keepdims=True)
        y = (y - mu) * lax.rsqrt(var + eps)
        y = y * params["gamma"] + params["beta"]
        return 0.5 * y * (1.0 + lax.erf(y * _SQRT_HALF))

    x = bf16_round(jnp.transpose(x_nchw, (0, 2, 3, 1)))
    y = block(x, bf16_round(convT_w(params["w1_t"])), params["b1"])
    y = block(y, convT_w(params["w2_t"]), params["b2"])
    return jnp.transpose(y, (0, 3, 1, 2))


# ----------------------------------------------------------------------------
if __name__ == "__main__":
    key = jax.random.PRNGKey(0)
    kx, kp = jax.random.split(key)

    mid_channels = 32
    B, Cin, H, W = 2, 192, 8, 8            # Cin fixed at 192 by the module definition
    x = jax.random.normal(kx, (B, Cin, H, W), jnp.float32)
    params = init_params(kp, mid_channels)

    out = jax.block_until_ready(same_up_conv_forward(x, params))
    assert out.shape == (B, mid_channels, H, W)

    ref = jax.block_until_ready(ref_forward(x, params))
    np.testing.assert_allclose(np.asarray(out), np.asarray(ref), rtol=2e-3, atol=2e-3)

    print("KERNEL_OK")
</pallas_src>

<mosaic_0001>
module attributes {stable_mosaic.version = 11 : i64} {
  func.func @same_up_conv_kernel(%arg0: i32, %arg1: memref<1x10x10x192xbf16, #tpu.memory_space<vmem>>, %arg2: memref<3x192x96xbf16, #tpu.memory_space<vmem>>, %arg3: memref<1x32xf32, #tpu.memory_space<vmem>>, %arg4: memref<3x32x96xf32, #tpu.memory_space<vmem>>, %arg5: memref<1x32xf32, #tpu.memory_space<vmem>>, %arg6: memref<1x32xf32, #tpu.memory_space<vmem>>, %arg7: memref<1x32xf32, #tpu.memory_space<vmem>>, %arg8: memref<1x8x8x32xf32, #tpu.memory_space<vmem>>, %arg9: memref<10x16x192xbf16, #tpu.memory_space<vmem>>, %arg10: memref<10x16x32xf32, #tpu.memory_space<vmem>>) attributes {dimension_semantics = [#tpu.dimension_semantics<parallel>], iteration_bounds = array<i64: 2>, scalar_prefetch = 0 : i64, scratch_operands = 2 : i64, tpu.core_type = #tpu.core_type<tc>, window_params = [{transform_indices = @transform_0, window_bounds = array<i64: 1, 10, 10, 192>}, {pipeline_mode = #tpu.pipeline_mode<synchronous>, transform_indices = @transform_1, window_bounds = array<i64: 3, 192, 96>}, {pipeline_mode = #tpu.pipeline_mode<synchronous>, transform_indices = @transform_2, window_bounds = array<i64: 1, 32>}, {pipeline_mode = #tpu.pipeline_mode<synchronous>, transform_indices = @transform_3, window_bounds = array<i64: 3, 32, 96>}, {pipeline_mode = #tpu.pipeline_mode<synchronous>, transform_indices = @transform_4, window_bounds = array<i64: 1, 32>}, {pipeline_mode = #tpu.pipeline_mode<synchronous>, transform_indices = @transform_5, window_bounds = array<i64: 1, 32>}, {pipeline_mode = #tpu.pipeline_mode<synchronous>, transform_indices = @transform_6, window_bounds = array<i64: 1, 32>}, {transform_indices = @transform_7, window_bounds = array<i64: 1, 8, 8, 32>}]} {
    %cst = arith.constant 0.000000e+00 : bf16
    %0 = vector.broadcast %cst : bf16 to vector<10x16x192xbf16>
    %c0 = arith.constant 0 : index
    %c0_0 = arith.constant 0 : index
    %c0_1 = arith.constant 0 : index
    %1 = vector.load %arg9[%c0, %c0_0, %c0_1] : memref<10x16x192xbf16, #tpu.memory_space<vmem>>, vector<10x16x192xbf16>
    tpu.vector_store %arg9[%c0, %c0_0, %c0_1], %0 {strides = array<i32>} : memref<10x16x192xbf16, #tpu.memory_space<vmem>>, vector<10x16x192xbf16>,
    %cst_2 = arith.constant 0.000000e+00 : f32
    %2 = vector.broadcast %cst_2 : f32 to vector<10x16x32xf32>
    %c0_3 = arith.constant 0 : index
    %c0_4 = arith.constant 0 : index
    %c0_5 = arith.constant 0 : index
    %3 = vector.load %arg10[%c0_3, %c0_4, %c0_5] : memref<10x16x32xf32, #tpu.memory_space<vmem>>, vector<10x16x32xf32>
    tpu.vector_store %arg10[%c0_3, %c0_4, %c0_5], %2 {strides = array<i32>} : memref<10x16x32xf32, #tpu.memory_space<vmem>>, vector<10x16x32xf32>,
    %c0_6 = arith.constant 0 : index
    %c0_7 = arith.constant 0 : index
    %c0_8 = arith.constant 0 : index
    %c0_9 = arith.constant 0 : index
    %4 = vector.load %arg1[%c0_6, %c0_7, %c0_8, %c0_9] : memref<1x10x10x192xbf16, #tpu.memory_space<vmem>>, vector<1x10x10x192xbf16>
    %5 = vector.shape_cast %4 : vector<1x10x10x192xbf16> to vector<10x10x192xbf16>
    %c0_10 = arith.constant 0 : index
    %c0_11 = arith.constant 0 : index
    %c0_12 = arith.constant 0 : index
    %6 = vector.load %arg9[%c0_10, %c0_11, %c0_12] : memref<10x16x192xbf16, #tpu.memory_space<vmem>>, vector<10x10x192xbf16>
    tpu.vector_store %arg9[%c0_10, %c0_11, %c0_12], %5 {strides = array<i32>} : memref<10x16x192xbf16, #tpu.memory_space<vmem>>, vector<10x10x192xbf16>,
    %c0_13 = arith.constant 0 : index
    %c0_14 = arith.constant 0 : index
    %c0_15 = arith.constant 0 : index
    %7 = vector.load %arg9[%c0_13, %c0_14, %c0_15] : memref<10x16x192xbf16, #tpu.memory_space<vmem>>, vector<8x16x192xbf16>
    %8 = vector.shape_cast %7 : vector<8x16x192xbf16> to vector<128x192xbf16>
    %c0_16 = arith.constant 0 : index
    %c0_17 = arith.constant 0 : index
    %c0_18 = arith.constant 0 : index
    %9 = vector.load %arg2[%c0_16, %c0_17, %c0_18] : memref<3x192x96xbf16, #tpu.memory_space<vmem>>, vector<1x192x96xbf16>
    %10 = vector.shape_cast %9 : vector<1x192x96xbf16> to vector<192x96xbf16>
    %cst_19 = arith.constant dense<0.000000e+00> : vector<128x96xf32>
    %11 = tpu.matmul %8, %10, %cst_19 {dimension_numbers = #tpu.dot_dimension_numbers<[1], [0], [0], [1], [0, 0, 1, 1], [], []>} : vector<128x192xbf16>, vector<192x96xbf16>, vector<128x96xf32> -> vector<128x96xf32>
    %12 = vector.shape_cast %11 : vector<128x96xf32> to vector<8x16x96xf32>
    %13 = vector.extract_strided_slice %12 {offsets = [0, 0, 0], sizes = [8, 8, 32], strides = [1, 1, 1]} : vector<8x16x96xf32> to vector<8x8x32xf32>
    %14 = vector.extract_strided_slice %12 {offsets = [0, 1, 32], sizes = [8, 8, 32], strides = [1, 1, 1]} : vector<8x16x96xf32> to vector<8x8x32xf32>
    %15 = arith.addf %13, %14 : vector<8x8x32xf32>
    %16 = vector.extract_strided_slice %12 {offsets = [0, 2, 64], sizes = [8, 8, 32], strides = [1, 1, 1]} : vector<8x16x96xf32> to vector<8x8x32xf32>
    %17 = arith.addf %15, %16 : vector<8x8x32xf32>
    %c1 = arith.constant 1 : index
    %c0_20 = arith.constant 0 : index
    %c0_21 = arith.constant 0 : index
    %18 = vector.load %arg9[%c1, %c0_20, %c0_21] : memref<10x16x192xbf16, #tpu.memory_space<vmem>>, vector<8x16x192xbf16>
    %19 = vector.shape_cast %18 : vector<8x16x192xbf16> to vector<128x192xbf16>
    %c1_22 = arith.constant 1 : index
    %c0_23 = arith.constant 0 : index
    %c0_24 = arith.constant 0 : index
    %20 = vector.load %arg2[%c1_22, %c0_23, %c0_24] : memref<3x192x96xbf16, #tpu.memory_space<vmem>>, vector<1x192x96xbf16>
    %21 = vector.shape_cast %20 : vector<1x192x96xbf16> to vector<192x96xbf16>
    %cst_25 = arith.constant dense<0.000000e+00> : vector<128x96xf32>
    %22 = tpu.matmul %19, %21, %cst_25 {dimension_numbers = #tpu.dot_dimension_numbers<[1], [0], [0], [1], [0, 0, 1, 1], [], []>} : vector<128x192xbf16>, vector<192x96xbf16>, vector<128x96xf32> -> vector<128x96xf32>
    %23 = vector.shape_cast %22 : vector<128x96xf32> to vector<8x16x96xf32>
    %24 = vector.extract_strided_slice %23 {offsets = [0, 0, 0], sizes = [8, 8, 32], strides = [1, 1, 1]} : vector<8x16x96xf32> to vector<8x8x32xf32>
    %25 = vector.extract_strided_slice %23 {offsets = [0, 1, 32], sizes = [8, 8, 32], strides = [1, 1, 1]} : vector<8x16x96xf32> to vector<8x8x32xf32>
    %26 = arith.addf %24, %25 : vector<8x8x32xf32>
    %27 = vector.extract_strided_slice %23 {offsets = [0, 2, 64], sizes = [8, 8, 32], strides = [1, 1, 1]} : vector<8x16x96xf32> to vector<8x8x32xf32>
    %28 = arith.addf %26, %27 : vector<8x8x32xf32>
    %29 = arith.addf %17, %28 : vector<8x8x32xf32>
    %c2 = arith.constant 2 : index
    %c0_26 = arith.constant 0 : index
    %c0_27 = arith.constant 0 : index
    %30 = vector.load %arg9[%c2, %c0_26, %c0_27] : memref<10x16x192xbf16, #tpu.memory_space<vmem>>, vector<8x16x192xbf16>
    %31 = vector.shape_cast %30 : vector<8x16x192xbf16> to vector<128x192xbf16>
    %c2_28 = arith.constant 2 : index
    %c0_29 = arith.constant 0 : index
    %c0_30 = arith.constant 0 : index
    %32 = vector.load %arg2[%c2_28, %c0_29, %c0_30] : memref<3x192x96xbf16, #tpu.memory_space<vmem>>, vector<1x192x96xbf16>
    %33 = vector.shape_cast %32 : vector<1x192x96xbf16> to vector<192x96xbf16>
    %cst_31 = arith.constant dense<0.000000e+00> : vector<128x96xf32>
    %34 = tpu.matmul %31, %33, %cst_31 {dimension_numbers = #tpu.dot_dimension_numbers<[1], [0], [0], [1], [0, 0, 1, 1], [], []>} : vector<128x192xbf16>, vector<192x96xbf16>, vector<128x96xf32> -> vector<128x96xf32>
    %35 = vector.shape_cast %34 : vector<128x96xf32> to vector<8x16x96xf32>
    %36 = vector.extract_strided_slice %35 {offsets = [0, 0, 0], sizes = [8, 8, 32], strides = [1, 1, 1]} : vector<8x16x96xf32> to vector<8x8x32xf32>
    %37 = vector.extract_strided_slice %35 {offsets = [0, 1, 32], sizes = [8, 8, 32], strides = [1, 1, 1]} : vector<8x16x96xf32> to vector<8x8x32xf32>
    %38 = arith.addf %36, %37 : vector<8x8x32xf32>
    %39 = vector.extract_strided_slice %35 {offsets = [0, 2, 64], sizes = [8, 8, 32], strides = [1, 1, 1]} : vector<8x16x96xf32> to vector<8x8x32xf32>
    %40 = arith.addf %38, %39 : vector<8x8x32xf32>
    %41 = arith.addf %29, %40 : vector<8x8x32xf32>
    %c0_32 = arith.constant 0 : index
    %c0_33 = arith.constant 0 : index
    %42 = vector.load %arg3[%c0_32, %c0_33] : memref<1x32xf32, #tpu.memory_space<vmem>>, vector<1x32xf32>
    %43 = vector.shape_cast %42 : vector<1x32xf32> to vector<1x1x32xf32>
    %44 = vector.broadcast %43 : vector<1x1x32xf32> to vector<8x8x32xf32>
    %45 = arith.addf %41, %44 : vector<8x8x32xf32>
    %cst_34 = arith.constant dense<0.000000e+00> : vector<8x8xf32>
    %46 = vector.multi_reduction <add>, %45, %cst_34 [2] : vector<8x8x32xf32> to vector<8x8xf32>
    %47 = vector.shape_cast %46 : vector<8x8xf32> to vector<8x8x1xf32>
    %cst_35 = arith.constant 3.200000e+01 : f32
    %48 = vector.broadcast %cst_35 : f32 to vector<8x8x1xf32>
    %49 = arith.divf %47, %48 : vector<8x8x1xf32>
    %50 = vector.broadcast %49 : vector<8x8x1xf32> to vector<8x8x32xf32>
    %51 = arith.subf %45, %50 : vector<8x8x32xf32>
    %52 = arith.mulf %51, %51 : vector<8x8x32xf32>
    %cst_36 = arith.constant dense<0.000000e+00> : vector<8x8xf32>
    %53 = vector.multi_reduction <add>, %52, %cst_36 [2] : vector<8x8x32xf32> to vector<8x8xf32>
    %54 = vector.shape_cast %53 : vector<8x8xf32> to vector<8x8x1xf32>
    %cst_37 = arith.constant 3.200000e+01 : f32
    %55 = vector.broadcast %cst_37 : f32 to vector<8x8x1xf32>
    %56 = arith.divf %54, %55 : vector<8x8x1xf32>
    %57 = vector.broadcast %49 : vector<8x8x1xf32> to vector<8x8x32xf32>
    %58 = arith.subf %45, %57 : vector<8x8x32xf32>
    %cst_38 = arith.constant 9.99999997E-7 : f32
    %59 = vector.broadcast %cst_38 : f32 to vector<8x8x1xf32>
    %60 = arith.addf %56, %59 : vector<8x8x1xf32>
    %61 = math.rsqrt %60 : vector<8x8x1xf32>
    %62 = vector.broadcast %61 : vector<8x8x1xf32> to vector<8x8x32xf32>
    %63 = arith.mulf %58, %62 : vector<8x8x32xf32>
    %c0_39 = arith.constant 0 : index
    %c0_40 = arith.constant 0 : index
    %64 = vector.load %arg6[%c0_39, %c0_40] : memref<1x32xf32, #tpu.memory_space<vmem>>, vector<1x32xf32>
    %65 = vector.shape_cast %64 : vector<1x32xf32> to vector<1x1x32xf32>
    %66 = vector.broadcast %65 : vector<1x1x32xf32> to vector<8x8x32xf32>
    %67 = arith.mulf %63, %66 : vector<8x8x32xf32>
    %c0_41 = arith.constant 0 : index
    %c0_42 = arith.constant 0 : index
    %68 = vector.load %arg7[%c0_41, %c0_42] : memref<1x32xf32, #tpu.memory_space<vmem>>, vector<1x32xf32>
    %69 = vector.shape_cast %68 : vector<1x32xf32> to vector<1x1x32xf32>
    %70 = vector.broadcast %69 : vector<1x1x32xf32> to vector<8x8x32xf32>
    %71 = arith.addf %67, %70 : vector<8x8x32xf32>
    %cst_43 = arith.constant 5.000000e-01 : f32
    %72 = vector.broadcast %cst_43 : f32 to vector<8x8x32xf32>
    %73 = arith.mulf %72, %71 : vector<8x8x32xf32>
    %cst_44 = arith.constant 0.707106769 : f32
    %74 = vector.broadcast %cst_44 : f32 to vector<8x8x32xf32>
    %75 = arith.mulf %71, %74 : vector<8x8x32xf32>
    %76 = math.absf %75 : vector<8x8x32xf32>
    %cst_45 = arith.constant 0.327591091 : f32
    %77 = vector.broadcast %cst_45 : f32 to vector<8x8x32xf32>
    %78 = arith.mulf %77, %76 : vector<8x8x32xf32>
    %cst_46 = arith.constant 1.000000e+00 : f32
    %79 = vector.broadcast %cst_46 : f32 to vector<8x8x32xf32>
    %80 = arith.addf %79, %78 : vector<8x8x32xf32>
    %cst_47 = arith.constant 1.000000e+00 : f32
    %81 = vector.broadcast %cst_47 : f32 to vector<8x8x32xf32>
    %82 = arith.divf %81, %80 : vector<8x8x32xf32>
    %cst_48 = arith.constant 1.06140542 : f32
    %83 = vector.broadcast %cst_48 : f32 to vector<8x8x32xf32>
    %84 = arith.mulf %83, %82 : vector<8x8x32xf32>
    %cst_49 = arith.constant -1.45315206 : f32
    %85 = vector.broadcast %cst_49 : f32 to vector<8x8x32xf32>
    %86 = arith.addf %84, %85 : vector<8x8x32xf32>
    %87 = arith.mulf %86, %82 : vector<8x8x32xf32>
    %cst_50 = arith.constant 1.42141378 : f32
    %88 = vector.broadcast %cst_50 : f32 to vector<8x8x32xf32>
    %89 = arith.addf %87, %88 : vector<8x8x32xf32>
    %90 = arith.mulf %89, %82 : vector<8x8x32xf32>
    %cst_51 = arith.constant -0.284496725 : f32
    %91 = vector.broadcast %cst_51 : f32 to vector<8x8x32xf32>
    %92 = arith.addf %90, %91 : vector<8x8x32xf32>
    %93 = arith.mulf %92, %82 : vector<8x8x32xf32>
    %cst_52 = arith.constant 0.254829586 : f32
    %94 = vector.broadcast %cst_52 : f32 to vector<8x8x32xf32>
    %95 = arith.addf %93, %94 : vector<8x8x32xf32>
    %96 = arith.mulf %95, %82 : vector<8x8x32xf32>
    %cst_53 = arith.constant 0.000000e+00 : f32
    %97 = vector.broadcast %cst_53 : f32 to vector<8x8x32xf32>
    %98 = arith.subf %97, %76 : vector<8x8x32xf32>
    %99 = arith.mulf %98, %76 : vector<8x8x32xf32>
    %100 = math.exp %99 : vector<8x8x32xf32>
    %101 = arith.mulf %96, %100 : vector<8x8x32xf32>
    %cst_54 = arith.constant 1.000000e+00 : f32
    %102 = vector.broadcast %cst_54 : f32 to vector<8x8x32xf32>
    %103 = arith.subf %102, %101 : vector<8x8x32xf32>
    %cst_55 = arith.constant 0.000000e+00 : f32
    %104 = vector.broadcast %cst_55 : f32 to vector<8x8x32xf32>
    %105 = arith.cmpf olt, %75, %104 : vector<8x8x32xf32>
    %cst_56 = arith.constant 0.000000e+00 : f32
    %106 = vector.broadcast %cst_56 : f32 to vector<8x8x32xf32>
    %107 = arith.subf %106, %103 : vector<8x8x32xf32>
    %108 = arith.select %105, %107, %103 : vector<8x8x32xi1>, vector<8x8x32xf32>
    %cst_57 = arith.constant 1.000000e+00 : f32
    %109 = vector.broadcast %cst_57 : f32 to vector<8x8x32xf32>
    %110 = arith.addf %109, %108 : vector<8x8x32xf32>
    %111 = arith.mulf %73, %110 : vector<8x8x32xf32>
    %c1_58 = arith.constant 1 : index
    %c1_59 = arith.constant 1 : index
    %c0_60 = arith.constant 0 : index
    %112 = vector.load %arg10[%c1_58, %c1_59, %c0_60] : memref<10x16x32xf32, #tpu.memory_space<vmem>>, vector<8x8x32xf32>
    tpu.vector_store %arg10[%c1_58, %c1_59, %c0_60], %111 {strides = array<i32>} : memref<10x16x32xf32, #tpu.memory_space<vmem>>, vector<8x8x32xf32>,
    %c0_61 = arith.constant 0 : index
    %c0_62 = arith.constant 0 : index
    %c0_63 = arith.constant 0 : index
    %113 = vector.load %arg10[%c0_61, %c0_62, %c0_63] : memref<10x16x32xf32, #tpu.memory_space<vmem>>, vector<8x16x32xf32>
    %114 = vector.shape_cast %113 : vector<8x16x32xf32> to vector<128x32xf32>
    %c0_64 = arith.constant 0 : index
    %c0_65 = arith.constant 0 : index
    %c0_66 = arith.constant 0 : index
    %115 = vector.load %arg4[%c0_64, %c0_65, %c0_66] : memref<3x32x96xf32, #tpu.memory_space<vmem>>, vector<1x32x96xf32>
    %116 = vector.shape_cast %115 : vector<1x32x96xf32> to vector<32x96xf32>
    %cst_67 = arith.constant dense<0.000000e+00> : vector<128x96xf32>
    %117 = tpu.matmul %114, %116, %cst_67 {dimension_numbers = #tpu.dot_dimension_numbers<[1], [0], [0], [1], [0, 0, 1, 1], [], []>} : vector<128x32xf32>, vector<32x96xf32>, vector<128x96xf32> -> vector<128x96xf32>
    %118 = vector.shape_cast %117 : vector<128x96xf32> to vector<8x16x96xf32>
    %119 = vector.extract_strided_slice %118 {offsets = [0, 0, 0], sizes = [8, 8, 32], strides = [1, 1, 1]} : vector<8x16x96xf32> to vector<8x8x32xf32>
    %120 = vector.extract_strided_slice %118 {offsets = [0, 1, 32], sizes = [8, 8, 32], strides = [1, 1, 1]} : vector<8x16x96xf32> to vector<8x8x32xf32>
    %121 = arith.addf %119, %120 : vector<8x8x32xf32>
    %122 = vector.extract_strided_slice %118 {offsets = [0, 2, 64], sizes = [8, 8, 32], strides = [1, 1, 1]} : vector<8x16x96xf32> to vector<8x8x32xf32>
    %123 = arith.addf %121, %122 : vector<8x8x32xf32>
    %c1_68 = arith.constant 1 : index
    %c0_69 = arith.constant 0 : index
    %c0_70 = arith.constant 0 : index
    %124 = vector.load %arg10[%c1_68, %c0_69, %c0_70] : memref<10x16x32xf32, #tpu.memory_space<vmem>>, vector<8x16x32xf32>
    %125 = vector.shape_cast %124 : vector<8x16x32xf32> to vector<128x32xf32>
    %c1_71 = arith.constant 1 : index
    %c0_72 = arith.constant 0 : index
    %c0_73 = arith.constant 0 : index
    %126 = vector.load %arg4[%c1_71, %c0_72, %c0_73] : memref<3x32x96xf32, #tpu.memory_space<vmem>>, vector<1x32x96xf32>
    %127 = vector.shape_cast %126 : vector<1x32x96xf32> to vector<32x96xf32>
    %cst_74 = arith.constant dense<0.000000e+00> : vector<128x96xf32>
    %128 = tpu.matmul %125, %127, %cst_74 {dimension_numbers = #tpu.dot_dimension_numbers<[1], [0], [0], [1], [0, 0, 1, 1], [], []>} : vector<128x32xf32>, vector<32x96xf32>, vector<128x96xf32> -> vector<128x96xf32>
    %129 = vector.shape_cast %128 : vector<128x96xf32> to vector<8x16x96xf32>
    %130 = vector.extract_strided_slice %129 {offsets = [0, 0, 0], sizes = [8, 8, 32], strides = [1, 1, 1]} : vector<8x16x96xf32> to vector<8x8x32xf32>
    %131 = vector.extract_strided_slice %129 {offsets = [0, 1, 32], sizes = [8, 8, 32], strides = [1, 1, 1]} : vector<8x16x96xf32> to vector<8x8x32xf32>
    %132 = arith.addf %130, %131 : vector<8x8x32xf32>
    %133 = vector.extract_strided_slice %129 {offsets = [0, 2, 64], sizes = [8, 8, 32], strides = [1, 1, 1]} : vector<8x16x96xf32> to vector<8x8x32xf32>
    %134 = arith.addf %132, %133 : vector<8x8x32xf32>
    %135 = arith.addf %123, %134 : vector<8x8x32xf32>
    %c2_75 = arith.constant 2 : index
    %c0_76 = arith.constant 0 : index
    %c0_77 = arith.constant 0 : index
    %136 = vector.load %arg10[%c2_75, %c0_76, %c0_77] : memref<10x16x32xf32, #tpu.memory_space<vmem>>, vector<8x16x32xf32>
    %137 = vector.shape_cast %136 : vector<8x16x32xf32> to vector<128x32xf32>
    %c2_78 = arith.constant 2 : index
    %c0_79 = arith.constant 0 : index
    %c0_80 = arith.constant 0 : index
    %138 = vector.load %arg4[%c2_78, %c0_79, %c0_80] : memref<3x32x96xf32, #tpu.memory_space<vmem>>, vector<1x32x96xf32>
    %139 = vector.shape_cast %138 : vector<1x32x96xf32> to vector<32x96xf32>
    %cst_81 = arith.constant dense<0.000000e+00> : vector<128x96xf32>
    %140 = tpu.matmul %137, %139, %cst_81 {dimension_numbers = #tpu.dot_dimension_numbers<[1], [0], [0], [1], [0, 0, 1, 1], [], []>} : vector<128x32xf32>, vector<32x96xf32>, vector<128x96xf32> -> vector<128x96xf32>
    %141 = vector.shape_cast %140 : vector<128x96xf32> to vector<8x16x96xf32>
    %142 = vector.extract_strided_slice %141 {offsets = [0, 0, 0], sizes = [8, 8, 32], strides = [1, 1, 1]} : vector<8x16x96xf32> to vector<8x8x32xf32>
    %143 = vector.extract_strided_slice %141 {offsets = [0, 1, 32], sizes = [8, 8, 32], strides = [1, 1, 1]} : vector<8x16x96xf32> to vector<8x8x32xf32>
    %144 = arith.addf %142, %143 : vector<8x8x32xf32>
    %145 = vector.extract_strided_slice %141 {offsets = [0, 2, 64], sizes = [8, 8, 32], strides = [1, 1, 1]} : vector<8x16x96xf32> to vector<8x8x32xf32>
    %146 = arith.addf %144, %145 : vector<8x8x32xf32>
    %147 = arith.addf %135, %146 : vector<8x8x32xf32>
    %c0_82 = arith.constant 0 : index
    %c0_83 = arith.constant 0 : index
    %148 = vector.load %arg5[%c0_82, %c0_83] : memref<1x32xf32, #tpu.memory_space<vmem>>, vector<1x32xf32>
    %149 = vector.shape_cast %148 : vector<1x32xf32> to vector<1x1x32xf32>
    %150 = vector.broadcast %149 : vector<1x1x32xf32> to vector<8x8x32xf32>
    %151 = arith.addf %147, %150 : vector<8x8x32xf32>
    %cst_84 = arith.constant dense<0.000000e+00> : vector<8x8xf32>
    %152 = vector.multi_reduction <add>, %151, %cst_84 [2] : vector<8x8x32xf32> to vector<8x8xf32>
    %153 = vector.shape_cast %152 : vector<8x8xf32> to vector<8x8x1xf32>
    %cst_85 = arith.constant 3.200000e+01 : f32
    %154 = vector.broadcast %cst_85 : f32 to vector<8x8x1xf32>
    %155 = arith.divf %153, %154 : vector<8x8x1xf32>
    %156 = vector.broadcast %155 : vector<8x8x1xf32> to vector<8x8x32xf32>
    %157 = arith.subf %151, %156 : vector<8x8x32xf32>
    %158 = arith.mulf %157, %157 : vector<8x8x32xf32>
    %cst_86 = arith.constant dense<0.000000e+00> : vector<8x8xf32>
    %159 = vector.multi_reduction <add>, %158, %cst_86 [2] : vector<8x8x32xf32> to vector<8x8xf32>
    %160 = vector.shape_cast %159 : vector<8x8xf32> to vector<8x8x1xf32>
    %cst_87 = arith.constant 3.200000e+01 : f32
    %161 = vector.broadcast %cst_87 : f32 to vector<8x8x1xf32>
    %162 = arith.divf %160, %161 : vector<8x8x1xf32>
    %163 = vector.broadcast %155 : vector<8x8x1xf32> to vector<8x8x32xf32>
    %164 = arith.subf %151, %163 : vector<8x8x32xf32>
    %cst_88 = arith.constant 9.99999997E-7 : f32
    %165 = vector.broadcast %cst_88 : f32 to vector<8x8x1xf32>
    %166 = arith.addf %162, %165 : vector<8x8x1xf32>
    %167 = math.rsqrt %166 : vector<8x8x1xf32>
    %168 = vector.broadcast %167 : vector<8x8x1xf32> to vector<8x8x32xf32>
    %169 = arith.mulf %164, %168 : vector<8x8x32xf32>
    %c0_89 = arith.constant 0 : index
    %c0_90 = arith.constant 0 : index
    %170 = vector.load %arg6[%c0_89, %c0_90] : memref<1x32xf32, #tpu.memory_space<vmem>>, vector<1x32xf32>
    %171 = vector.shape_cast %170 : vector<1x32xf32> to vector<1x1x32xf32>
    %172 = vector.broadcast %171 : vector<1x1x32xf32> to vector<8x8x32xf32>
    %173 = arith.mulf %169, %172 : vector<8x8x32xf32>
    %c0_91 = arith.constant 0 : index
    %c0_92 = arith.constant 0 : index
    %174 = vector.load %arg7[%c0_91, %c0_92] : memref<1x32xf32, #tpu.memory_space<vmem>>, vector<1x32xf32>
    %175 = vector.shape_cast %174 : vector<1x32xf32> to vector<1x1x32xf32>
    %176 = vector.broadcast %175 : vector<1x1x32xf32> to vector<8x8x32xf32>
    %177 = arith.addf %173, %176 : vector<8x8x32xf32>
    %cst_93 = arith.constant 5.000000e-01 : f32
    %178 = vector.broadcast %cst_93 : f32 to vector<8x8x32xf32>
    %179 = arith.mulf %178, %177 : vector<8x8x32xf32>
    %cst_94 = arith.constant 0.707106769 : f32
    %180 = vector.broadcast %cst_94 : f32 to vector<8x8x32xf32>
    %181 = arith.mulf %177, %180 : vector<8x8x32xf32>
    %182 = math.absf %181 : vector<8x8x32xf32>
    %cst_95 = arith.constant 0.327591091 : f32
    %183 = vector.broadcast %cst_95 : f32 to vector<8x8x32xf32>
    %184 = arith.mulf %183, %182 : vector<8x8x32xf32>
    %cst_96 = arith.constant 1.000000e+00 : f32
    %185 = vector.broadcast %cst_96 : f32 to vector<8x8x32xf32>
    %186 = arith.addf %185, %184 : vector<8x8x32xf32>
    %cst_97 = arith.constant 1.000000e+00 : f32
    %187 = vector.broadcast %cst_97 : f32 to vector<8x8x32xf32>
    %188 = arith.divf %187, %186 : vector<8x8x32xf32>
    %cst_98 = arith.constant 1.06140542 : f32
    %189 = vector.broadcast %cst_98 : f32 to vector<8x8x32xf32>
    %190 = arith.mulf %189, %188 : vector<8x8x32xf32>
    %cst_99 = arith.constant -1.45315206 : f32
    %191 = vector.broadcast %cst_99 : f32 to vector<8x8x32xf32>
    %192 = arith.addf %190, %191 : vector<8x8x32xf32>
    %193 = arith.mulf %192, %188 : vector<8x8x32xf32>
    %cst_100 = arith.constant 1.42141378 : f32
    %194 = vector.broadcast %cst_100 : f32 to vector<8x8x32xf32>
    %195 = arith.addf %193, %194 : vector<8x8x32xf32>
    %196 = arith.mulf %195, %188 : vector<8x8x32xf32>
    %cst_101 = arith.constant -0.284496725 : f32
    %197 = vector.broadcast %cst_101 : f32 to vector<8x8x32xf32>
    %198 = arith.addf %196, %197 : vector<8x8x32xf32>
    %199 = arith.mulf %198, %188 : vector<8x8x32xf32>
    %cst_102 = arith.constant 0.254829586 : f32
    %200 = vector.broadcast %cst_102 : f32 to vector<8x8x32xf32>
    %201 = arith.addf %199, %200 : vector<8x8x32xf32>
    %202 = arith.mulf %201, %188 : vector<8x8x32xf32>
    %cst_103 = arith.constant 0.000000e+00 : f32
    %203 = vector.broadcast %cst_103 : f32 to vector<8x8x32xf32>
    %204 = arith.subf %203, %182 : vector<8x8x32xf32>
    %205 = arith.mulf %204, %182 : vector<8x8x32xf32>
    %206 = math.exp %205 : vector<8x8x32xf32>
    %207 = arith.mulf %202, %206 : vector<8x8x32xf32>
    %cst_104 = arith.constant 1.000000e+00 : f32
    %208 = vector.broadcast %cst_104 : f32 to vector<8x8x32xf32>
    %209 = arith.subf %208, %207 : vector<8x8x32xf32>
    %cst_105 = arith.constant 0.000000e+00 : f32
    %210 = vector.broadcast %cst_105 : f32 to vector<8x8x32xf32>
    %211 = arith.cmpf olt, %181, %210 : vector<8x8x32xf32>
    %cst_106 = arith.constant 0.000000e+00 : f32
    %212 = vector.broadcast %cst_106 : f32 to vector<8x8x32xf32>
    %213 = arith.subf %212, %209 : vector<8x8x32xf32>
    %214 = arith.select %211, %213, %209 : vector<8x8x32xi1>, vector<8x8x32xf32>
    %cst_107 = arith.constant 1.000000e+00 : f32
    %215 = vector.broadcast %cst_107 : f32 to vector<8x8x32xf32>
    %216 = arith.addf %215, %214 : vector<8x8x32xf32>
    %217 = arith.mulf %179, %216 : vector<8x8x32xf32>
    %218 = vector.shape_cast %217 : vector<8x8x32xf32> to vector<1x8x8x32xf32>
    %c0_108 = arith.constant 0 : index
    %c0_109 = arith.constant 0 : index
    %c0_110 = arith.constant 0 : index
    %c0_111 = arith.constant 0 : index
    %219 = vector.load %arg8[%c0_108, %c0_109, %c0_110, %c0_111] : memref<1x8x8x32xf32, #tpu.memory_space<vmem>>, vector<1x8x8x32xf32>
    tpu.vector_store %arg8[%c0_108, %c0_109, %c0_110, %c0_111], %218 {strides = array<i32>} : memref<1x8x8x32xf32, #tpu.memory_space<vmem>>, vector<1x8x8x32xf32>,
    return
  }
  func.func @transform_0(%arg0: i32) -> (i32, i32, i32, i32) {
    %c0_i32 = arith.constant 0 : i32
    %c0_i32_0 = arith.constant 0 : i32
    %c0_i32_1 = arith.constant 0 : i32
    %c0_i32_2 = arith.constant 0 : i32
    return %arg0, %c0_i32, %c0_i32_0, %c0_i32_1 : i32, i32, i32, i32
  }
  func.func @transform_1(%arg0: i32) -> (i32, i32, i32) {
    %c0_i32 = arith.constant 0 : i32
    %c0_i32_0 = arith.constant 0 : i32
    %c0_i32_1 = arith.constant 0 : i32
    %c0_i32_2 = arith.constant 0 : i32
    return %c0_i32, %c0_i32_0, %c0_i32_1 : i32, i32, i32
  }
  func.func @transform_2(%arg0: i32) -> (i32, i32) {
    %c0_i32 = arith.constant 0 : i32
    %c0_i32_0 = arith.constant 0 : i32
    %c0_i32_1 = arith.constant 0 : i32
    return %c0_i32, %c0_i32_0 : i32, i32
  }
  func.func @transform_3(%arg0: i32) -> (i32, i32, i32) {
    %c0_i32 = arith.constant 0 : i32
    %c0_i32_0 = arith.constant 0 : i32
    %c0_i32_1 = arith.constant 0 : i32
    %c0_i32_2 = arith.constant 0 : i32
    return %c0_i32, %c0_i32_0, %c0_i32_1 : i32, i32, i32
  }
  func.func @transform_4(%arg0: i32) -> (i32, i32) {
    %c0_i32 = arith.constant 0 : i32
    %c0_i32_0 = arith.constant 0 : i32
    %c0_i32_1 = arith.constant 0 : i32
    return %c0_i32, %c0_i32_0 : i32, i32
  }
  func.func @transform_5(%arg0: i32) -> (i32, i32) {
    %c0_i32 = arith.constant 0 : i32
    %c0_i32_0 = arith.constant 0 : i32
    %c0_i32_1 = arith.constant 0 : i32
    return %c0_i32, %c0_i32_0 : i32, i32
  }
  func.func @transform_6(%arg0: i32) -> (i32, i32) {
    %c0_i32 = arith.constant 0 : i32
    %c0_i32_0 = arith.constant 0 : i32
    %c0_i32_1 = arith.constant 0 : i32
    return %c0_i32, %c0_i32_0 : i32, i32
  }
  func.func @transform_7(%arg0: i32) -> (i32, i32, i32, i32) {
    %c0_i32 = arith.constant 0 : i32
    %c0_i32_0 = arith.constant 0 : i32
    %c0_i32_1 = arith.constant 0 : i32
    %c0_i32_2 = arith.constant 0 : i32
    return %arg0, %c0_i32, %c0_i32_0, %c0_i32_1 : i32, i32, i32, i32
  }
}

</mosaic_0001>

<llo_original>
// kernel: tpu_custom_call.1
$region0: #{tpu_custom_call.1}
  #allocation0 [shape = 'u32[]', space=smem, size = 0x4, offset = 0x4, fixed_abs, tag = 'smem constant byte address 0x4 - core index']
  #allocation1 [shape = 'u32[72,128]{1,0:T(1,128)}', space=vmem, size = 0x9000, scoped, tag = 'internal scratch']
  #allocation2 [shape = 'bf16[10,16,192]{2,1,0:T(8,128)(2,1)}', space=vmem, size = 0x14000, scoped, tag = 'scratch operand']
  #allocation3 [shape = 'f32[10,16,32]{2,1,0:T(8,128)}', space=vmem, size = 0x14000, scoped, tag = 'scratch operand']
  %s0 = inlined_call_operand.vmem [shape: bf16[2,10,10,192], index: 0, kind: input, shape index: {}]
  %s1 = inlined_call_operand.vmem [shape: bf16[3,192,96], index: 1, kind: input, shape index: {}]
  %s2 = inlined_call_operand.vmem [shape: f32[1,32], index: 2, kind: input, shape index: {}]
  %s3 = inlined_call_operand.vmem [shape: f32[3,32,96], index: 3, kind: input, shape index: {}]
  %s4 = inlined_call_operand.vmem [shape: f32[1,32], index: 4, kind: input, shape index: {}]
  %s5 = inlined_call_operand.vmem [shape: f32[1,32], index: 5, kind: input, shape index: {}]
  %s6 = inlined_call_operand.vmem [shape: f32[1,32], index: 6, kind: input, shape index: {}]
  %s7 = inlined_call_operand.hbm [shape: f32[2,8,8,32], index: 7, kind: output, shape index: {}]
  %s8 = sld [smem:[#allocation0]]
  $region61: #{tpu_custom_call.1} parent=0
    _
  %s10 = ssub.s32 1, %s8
  %s11 = scalar_select 0, %s10, %s8
  $region1: #{tpu_custom_call.1} parent=0
    #allocation4 [shape = 'u8[65536]{0}', space=vmem, size = 0x10000, scoped, tag = 'output window, operand 0']
    #allocation5 [shape = 's32[2]{0}', space=sflag, size = 0x8, scoped, tag = 'scoped memory for tpu_custom_call.1']
    %12 = vsyncpa [#allocation5], 0
    %s13 = scalar_lea.sflag [#allocation5], 1
    %14 = vsyncpa %s13, 0
    loop: start=0, step=1, limit=4
    $region2: #{tpu_custom_call.1} parent=1 // loop_pre_header
      _
    $region3: #{tpu_custom_call.1} parent=1 // loop_header
      %s16 = sphi 0, %s20
      %p17 = scmp.ge.s32.totalorder %s16, 4
      %s26 = sphi 0, %s28
      %s29 = sphi 0, %s26
      %s30 = sphi 0, %s29
      %s46 = sphi 0, %s30
      %s50 = sphi 0, %s50
      %s52 = sphi 0, %s50
      %s53 = sphi 0, %s52
      %s67 = sphi 0, %s53
      %s71 = sphi 0, %s71
      %s73 = sphi 0, %s71
      %s74 = sphi 0, %s73
      %s88 = sphi 0, %s74
      %s92 = sphi 0, %s92
      %s94 = sphi 0, %s92
      %s95 = sphi 0, %s94
      %s109 = sphi 0, %s95
      %s113 = sphi 0, %s113
      %s115 = sphi 0, %s113
      %s116 = sphi 0, %s115
      %s130 = sphi 0, %s116
      %s134 = sphi 0, %s134
      %s136 = sphi 0, %s134
      %s137 = sphi 0, %s136
      %s151 = sphi 0, %s137
      %s155 = sphi 0, %s155
      %s157 = sphi 0, %s155
      %s158 = sphi 0, %s157
      %s172 = sphi 0, %s158
      %s178 = sphi 0, %s180
      %s181 = sphi 0, %s178
      %s182 = sphi 0, %s181
      %s198 = sphi 0, %s182
    $region4: #{tpu_custom_call.1} parent=1 // loop_header_branch
      %19 = sbr.rel (%p17) target = $region8
    $region5: #{tpu_custom_call.1} parent=1 // loop_body
      %s21 = ssub.s32 %s16, 1
      %s22 = ssub.s32 %s16, 2
      %s23 = sadd.s32 %s16, 1
      %s24 = ssub.s32 %s16, %s23
      %p25 = scmp.eq.s32.totalorder %s24, 0
      %s27 = sadd.s32 %s26, 1
      %s28 = scalar_select %p25, %s26, %s27
      %p31 = pneg %p25
      %p32 = scmp.eq.s32.totalorder %s16, 1
      %p33 = por %p31, %p32
      %p34 = scmp.ne.s32.totalorder %s26, %s29
      %p35 = scmp.eq.s32.totalorder %s16, 0
      %p36 = por %p34, %p35
      %p37 = scmp.ne.s32.totalorder %s26, %s29
      %p38 = scmp.eq.s32.totalorder %s21, 1
      %p39 = por %p37, %p38
      %p40 = scmp.ne.s32.totalorder %s29, %s30
      %p41 = scmp.eq.s32.totalorder %s21, 0
      %p42 = por %p40, %p41
      %p43 = scmp.ne.s32.totalorder %s29, %s30
      %p44 = scmp.eq.s32.totalorder %s22, 1
      %p45 = por %p43, %p44
      %p47 = scmp.ne.s32.totalorder %s30, %s46
      %p48 = scmp.eq.s32.totalorder %s22, 0
      %p49 = por %p47, %p48
      %s51 = sadd.s32 %s50, 1
      %p54 = scmp.eq.s32.totalorder %s16, 1
      %p55 = scmp.ne.s32.totalorder %s50, %s52
      %p56 = scmp.eq.s32.totalorder %s16, 0
      %p57 = por %p55, %p56
      %p58 = scmp.ne.s32.totalorder %s50, %s52
      %p59 = scmp.eq.s32.totalorder %s21, 1
      %p60 = por %p58, %p59
      %p61 = scmp.ne.s32.totalorder %s52, %s53
      %p62 = scmp.eq.s32.totalorder %s21, 0
      %p63 = por %p61, %p62
      %p64 = scmp.ne.s32.totalorder %s52, %s53
      %p65 = scmp.eq.s32.totalorder %s22, 1
      %p66 = por %p64, %p65
      %p68 = scmp.ne.s32.totalorder %s53, %s67
      %p69 = scmp.eq.s32.totalorder %s22, 0
      %p70 = por %p68, %p69
      %s72 = sadd.s32 %s71, 1
      %p75 = scmp.eq.s32.totalorder %s16, 1
      %p76 = scmp.ne.s32.totalorder %s71, %s73
      %p77 = scmp.eq.s32.totalorder %s16, 0
      %p78 = por %p76, %p77
      %p79 = scmp.ne.s32.totalorder %s71, %s73
      %p80 = scmp.eq.s32.totalorder %s21, 1
      %p81 = por %p79, %p80
      %p82 = scmp.ne.s32.totalorder %s73, %s74
      %p83 = scmp.eq.s32.totalorder %s21, 0
      %p84 = por %p82, %p83
      %p85 = scmp.ne.s32.totalorder %s73, %s74
      %p86 = scmp.eq.s32.totalorder %s22, 1
      %p87 = por %p85, %p86
      %p89 = scmp.ne.s32.totalorder %s74, %s88
      %p90 = scmp.eq.s32.totalorder %s22, 0
      %p91 = por %p89, %p90
      %s93 = sadd.s32 %s92, 1
      %p96 = scmp.eq.s32.totalorder %s16, 1
      %p97 = scmp.ne.s32.totalorder %s92, %s94
      %p98 = scmp.eq.s32.totalorder %s16, 0
      %p99 = por %p97, %p98
      %p100 = scmp.ne.s32.totalorder %s92, %s94
      %p101 = scmp.eq.s32.totalorder %s21, 1
      %p102 = por %p100, %p101
      %p103 = scmp.ne.s32.totalorder %s94, %s95
      %p104 = scmp.eq.s32.totalorder %s21, 0
      %p105 = por %p103, %p104
      %p106 = scmp.ne.s32.totalorder %s94, %s95
      %p107 = scmp.eq.s32.totalorder %s22, 1
      %p108 = por %p106, %p107
      %p110 = scmp.ne.s32.totalorder %s95, %s109
      %p111 = scmp.eq.s32.totalorder %s22, 0
      %p112 = por %p110, %p111
      %s114 = sadd.s32 %s113, 1
      %p117 = scmp.eq.s32.totalorder %s16, 1
      %p118 = scmp.ne.s32.totalorder %s113, %s115
      %p119 = scmp.eq.s32.totalorder %s16, 0
      %p120 = por %p118, %p119
      %p121 = scmp.ne.s32.totalorder %s113, %s115
      %p122 = scmp.eq.s32.totalorder %s21, 1
      %p123 = por %p121, %p122
      %p124 = scmp.ne.s32.totalorder %s115, %s116
      %p125 = scmp.eq.s32.totalorder %s21, 0
      %p126 = por %p124, %p125
      %p127 = scmp.ne.s32.totalorder %s115, %s116
      %p128 = scmp.eq.s32.totalorder %s22, 1
      %p129 = por %p127, %p128
      %p131 = scmp.ne.s32.totalorder %s116, %s130
      %p132 = scmp.eq.s32.totalorder %s22, 0
      %p133 = por %p131, %p132
      %s135 = sadd.s32 %s134, 1
      %p138 = scmp.eq.s32.totalorder %s16, 1
      %p139 = scmp.ne.s32.totalorder %s134, %s136
      %p140 = scmp.eq.s32.totalorder %s16, 0
      %p141 = por %p139, %p140
      %p142 = scmp.ne.s32.totalorder %s134, %s136
      %p143 = scmp.eq.s32.totalorder %s21, 1
      %p144 = por %p142, %p143
      %p145 = scmp.ne.s32.totalorder %s136, %s137
      %p146 = scmp.eq.s32.totalorder %s21, 0
      %p147 = por %p145, %p146
      %p148 = scmp.ne.s32.totalorder %s136, %s137
      %p149 = scmp.eq.s32.totalorder %s22, 1
      %p150 = por %p148, %p149
      %p152 = scmp.ne.s32.totalorder %s137, %s151
      %p153 = scmp.eq.s32.totalorder %s22, 0
      %p154 = por %p152, %p153
      %s156 = sadd.s32 %s155, 1
      %p159 = scmp.eq.s32.totalorder %s16, 1
      %p160 = scmp.ne.s32.totalorder %s155, %s157
      %p161 = scmp.eq.s32.totalorder %s16, 0
      %p162 = por %p160, %p161
      %p163 = scmp.ne.s32.totalorder %s155, %s157
      %p164 = scmp.eq.s32.totalorder %s21, 1
      %p165 = por %p163, %p164
      %p166 = scmp.ne.s32.totalorder %s157, %s158
      %p167 = scmp.eq.s32.totalorder %s21, 0
      %p168 = por %p166, %p167
      %p169 = scmp.ne.s32.totalorder %s157, %s158
      %p170 = scmp.eq.s32.totalorder %s22, 1
      %p171 = por %p169, %p170
      %p173 = scmp.ne.s32.totalorder %s158, %s172
      %p174 = scmp.eq.s32.totalorder %s22, 0
      %p175 = por %p173, %p174
      %s176 = ssub.s32 %s16, %s23
      %p177 = scmp.eq.s32.totalorder %s176, 0
      %s179 = sadd.s32 %s178, 1
      %s180 = scalar_select %p177, %s178, %s179
      %p183 = pneg %p177
      %p184 = scmp.eq.s32.totalorder %s16, 1
      %p185 = por %p183, %p184
      %p186 = scmp.ne.s32.totalorder %s178, %s181
      %p187 = scmp.eq.s32.totalorder %s16, 0
      %p188 = por %p186, %p187
      %p189 = scmp.ne.s32.totalorder %s178, %s181
      %p190 = scmp.eq.s32.totalorder %s21, 1
      %p191 = por %p189, %p190
      %p192 = scmp.ne.s32.totalorder %s181, %s182
      %p193 = scmp.eq.s32.totalorder %s21, 0
      %p194 = por %p192, %p193
      %p195 = scmp.ne.s32.totalorder %s181, %s182
      %p196 = scmp.eq.s32.totalorder %s22, 1
      %p197 = por %p195, %p196
      %p199 = scmp.ne.s32.totalorder %s182, %s198
      %p200 = scmp.eq.s32.totalorder %s22, 0
      %p201 = por %p199, %p200
      %p202 = scmp.le.s32.totalorder 1, %s16
      %p203 = scmp.lt.s32.totalorder %s16, 3
      %p204 = pnand %p202, %p203
      %p205 = pneg %p204
      // Predicated region
      $region9: #{tpu_custom_call.1} parent=5 // pred_check
        _
      $region10: #{tpu_custom_call.1} parent=5 // pred_check_branch
        %207 = sbr.rel (%p204) target = $region12
      $region11: #{tpu_custom_call.1} parent=5 // pred_region
        %s208 = ssub.s32 %s16, 1
        // Predicated region
        $region13: #{tpu_custom_call.1} parent=11 // pred_check
          %p209 = pneg %p63
        $region14: #{tpu_custom_call.1} parent=11 // pred_check_branch
          %211 = sbr.rel (%p209) target = $region16
        $region15: #{tpu_custom_call.1} parent=11 // pred_region
          _
        $region16: #{tpu_custom_call.1} parent=11 // pred_fallthru
          _
        // Predicated region
        $region17: #{tpu_custom_call.1} parent=11 // pred_check
          %p212 = pneg %p84
        $region18: #{tpu_custom_call.1} parent=11 // pred_check_branch
          %214 = sbr.rel (%p212) target = $region20
        $region19: #{tpu_custom_call.1} parent=11 // pred_region
          _
        $region20: #{tpu_custom_call.1} parent=11 // pred_fallthru
          _
        // Predicated region
        $region21: #{tpu_custom_call.1} parent=11 // pred_check
          %p215 = pneg %p105
        $region22: #{tpu_custom_call.1} parent=11 // pred_check_branch
          %217 = sbr.rel (%p215) target = $region24
        $region23: #{tpu_custom_call.1} parent=11 // pred_region
          _
        $region24: #{tpu_custom_call.1} parent=11 // pred_fallthru
          _
        // Predicated region
        $region25: #{tpu_custom_call.1} parent=11 // pred_check
          %p218 = pneg %p126
        $region26: #{tpu_custom_call.1} parent=11 // pred_check_branch
          %220 = sbr.rel (%p218) target = $region28
        $region27: #{tpu_custom_call.1} parent=11 // pred_region
          _
        $region28: #{tpu_custom_call.1} parent=11 // pred_fallthru
          _
        // Predicated region
        $region29: #{tpu_custom_call.1} parent=11 // pred_check
          %p221 = pneg %p147
        $region30: #{tpu_custom_call.1} parent=11 // pred_check_branch
          %223 = sbr.rel (%p221) target = $region32
        $region31: #{tpu_custom_call.1} parent=11 // pred_region
          _
        $region32: #{tpu_custom_call.1} parent=11 // pred_fallthru
          _
        // Predicated region
        $region33: #{tpu_custom_call.1} parent=11 // pred_check
          %p224 = pneg %p168
        $region34: #{tpu_custom_call.1} parent=11 // pred_check_branch
          %226 = sbr.rel (%p224) target = $region36
        $region35: #{tpu_custom_call.1} parent=11 // pred_region
          _
        $region36: #{tpu_custom_call.1} parent=11 // pred_fallthru
          _
      $region12: #{tpu_custom_call.1} parent=5 // pred_fallthru
        _
      %p227 = scmp.lt.s32.totalorder %s16, 2
      // Predicated region
      $region37: #{tpu_custom_call.1} parent=5 // pred_check
        %p228 = pneg %p227
      $region38: #{tpu_custom_call.1} parent=5 // pred_check_branch
        %230 = sbr.rel (%p228) target = $region40
      $region39: #{tpu_custom_call.1} parent=5 // pred_region
        // Predicated region
        $region41: #{tpu_custom_call.1} parent=39 // pred_check
          %p231 = pneg %p36
        $region42: #{tpu_custom_call.1} parent=39 // pred_check_branch
          %233 = sbr.rel (%p231) target = $region44
        $region43: #{tpu_custom_call.1} parent=39 // pred_region
          %p234 = scmp.lt.s32.totalorder %s16, 1
          %s235 = scalar_select %p234, %s16, 1
          %s236 = smul.addr %s235, 40
          %s237 = smul.addr %s236, 4
          %s238 = scalar_lea.vmem %s0, %s237
        $region44: #{tpu_custom_call.1} parent=39 // pred_fallthru
          _
      $region40: #{tpu_custom_call.1} parent=5 // pred_fallthru
        _
      %p239 = scmp.le.s32.totalorder 1, %s16
      %p240 = scmp.lt.s32.totalorder %s16, 3
      %p241 = pnand %p239, %p240
      %p242 = pneg %p241
      // Predicated region
      $region45: #{tpu_custom_call.1} parent=5 // pred_check
        _
      $region46: #{tpu_custom_call.1} parent=5 // pred_check_branch
        %244 = sbr.rel (%p241) target = $region48
      $region47: #{tpu_custom_call.1} parent=5 // pred_region
        %s245 = ssub.s32 %s16, 1
        %p246 = scmp.lt.s32.totalorder %s21, 1
        %s247 = scalar_select %p246, %s21, 1
        %s248 = smul.addr %s247, 40
        %s249 = smul.addr %s248, 4
        %s250 = scalar_lea.vmem %s0, %s249
        %p251 = pneg %p42
        %p252 = pneg %p39
        %p253 = pneg %p63
        %p254 = pneg %p60
        %p255 = pneg %p84
        %p256 = pneg %p81
        %p257 = pneg %p105
        %p258 = pneg %p102
        %p259 = pneg %p126
        %p260 = pneg %p123
        %p261 = pneg %p147
        %p262 = pneg %p144
        %p263 = pneg %p168
        %p264 = pneg %p165
        %p265 = pneg %p194
        %p266 = pneg %p191
        %s267 = sand.u32 %s181, 1
        %s268 = scalar_lea.sflag [#allocation5], %s267
        %s269 = sand.u32 %s181, 1
        %s270 = smul.addr %s269, 64
        %s271 = scalar_lea.vmem [#allocation4], %s270
        %p272 = scmp.lt.s32.totalorder %s21, 1
        %s273 = scalar_select %p272, %s21, 1
        %s274 = smul.addr %s273, 40
        %s275 = smul.addr %s274, 4
        %s276 = scalar_lea.vmem %s0, %s275
        %vm278 = vcmask 1043456
        %vm279 = vcmask 523268
        %vm280 = vmor %vm279, %vm278
        %281 = vst.msk [vmem:[#allocation2] sm:$0xff] %vm280, 0
        %282 = vst.msk [vmem:[#allocation2 + $0x8] sm:$0xff] %vm280, 0
        %283 = vst.msk [vmem:[#allocation2 + $0x10] sm:$0xff] %vm280, 0
        %284 = vst.msk [vmem:[#allocation2 + $0x18] sm:$0xff] %vm280, 0
        %285 = vst.msk [vmem:[#allocation2 + $0x20] sm:$0xff] %vm280, 0
        %286 = vst.msk [vmem:[#allocation2 + $0x28] sm:$0xff] %vm280, 0
        %287 = vst.msk [vmem:[#allocation2 + $0x30] sm:$0xff] %vm280, 0
        %288 = vst.msk [vmem:[#allocation2 + $0x38] sm:$0xff] %vm280, 0
        %289 = vst.msk [vmem:[#allocation2 + $0x40] sm:$0xff] %vm280, 0
        %290 = vst.msk [vmem:[#allocation2 + $0x48] sm:$0xff] %vm280, 0
        %291 = vst.msk [vmem:[#allocation2 + $0x50] sm:$0xff] %vm280, 0
        %292 = vst.msk [vmem:[#allocation2 + $0x58] sm:$0xff] %vm280, 0
        %293 = vst.msk [vmem:[#allocation2 + $0x60] sm:$0xff] %vm280, 0
        %294 = vst.msk [vmem:[#allocation2 + $0x68] sm:$0xff] %vm280, 0
        %295 = vst.msk [vmem:[#allocation2 + $0x70] sm:$0xff] %vm280, 0
        %296 = vst.msk [vmem:[#allocation2 + $0x78] sm:$0xff] %vm280, 0
        %297 = vst.msk [vmem:[#allocation2 + $0x80] sm:$0xff] %vm280, 0
        %298 = vst.msk [vmem:[#allocation2 + $0x88] sm:$0xff] %vm280, 0
        %299 = vst.msk [vmem:[#allocation2 + $0x90] sm:$0xff] %vm280, 0
        %300 = vst.msk [vmem:[#allocation2 + $0x98] sm:$0xff] %vm280, 0
        %vm301 = vcmask 261120
        %302 = vst.msk [vmem:[#allocation3] sm:$0xff] %vm301, 0.0
        %303 = vst.msk [vmem:[#allocation3 + $0x8] sm:$0xff] %vm301, 0.0
        %304 = vst.msk [vmem:[#allocation3 + $0x10] sm:$0xff] %vm301, 0.0
        %305 = vst.msk [vmem:[#allocation3 + $0x18] sm:$0xff] %vm301, 0.0
        %306 = vst.msk [vmem:[#allocation3 + $0x20] sm:$0xff] %vm301, 0.0
        %307 = vst.msk [vmem:[#allocation3 + $0x28] sm:$0xff] %vm301, 0.0
        %308 = vst.msk [vmem:[#allocation3 + $0x30] sm:$0xff] %vm301, 0.0
        %309 = vst.msk [vmem:[#allocation3 + $0x38] sm:$0xff] %vm301, 0.0
        %310 = vst.msk [vmem:[#allocation3 + $0x40] sm:$0xff] %vm301, 0.0
        %311 = vst.msk [vmem:[#allocation3 + $0x48] sm:$0xff] %vm301, 0.0
        %312 = vst.msk [vmem:[#allocation3 + $0x50] sm:$0xff] %vm301, 0.0
        %313 = vst.msk [vmem:[#allocation3 + $0x58] sm:$0xff] %vm301, 0.0
        %314 = vst.msk [vmem:[#allocation3 + $0x60] sm:$0xff] %vm301, 0.0
        %315 = vst.msk [vmem:[#allocation3 + $0x68] sm:$0xff] %vm301, 0.0
        %316 = vst.msk [vmem:[#allocation3 + $0x70] sm:$0xff] %vm301, 0.0
        %317 = vst.msk [vmem:[#allocation3 + $0x78] sm:$0xff] %vm301, 0.0
        %318 = vst.msk [vmem:[#allocation3 + $0x80] sm:$0xff] %vm301, 0.0
        %319 = vst.msk [vmem:[#allocation3 + $0x88] sm:$0xff] %vm301, 0.0
        %320 = vst.msk [vmem:[#allocation3 + $0x90] sm:$0xff] %vm301, 0.0
        %321 = vst.msk [vmem:[#allocation3 + $0x98] sm:$0xff] %vm301, 0.0
        %v322 = vld [vmem:[%s276] sm:$0xff]
        %v323 = vld [vmem:[%s276 + $0x8] sm:$0x11]
        %v324 = vld [vmem:[%s276 + $0x10] sm:$0xff]
        %v325 = vld [vmem:[%s276 + $0x18] sm:$0x11]
        %v326 = vld [vmem:[%s276 + $0x20] sm:$0xff]
        %v327 = vld [vmem:[%s276 + $0x28] sm:$0x11]
        %v328 = vld [vmem:[%s276 + $0x30] sm:$0xff]
        %v329 = vld [vmem:[%s276 + $0x38] sm:$0x11]
        %v330 = vld [vmem:[%s276 + $0x40] sm:$0xff]
        %v331 = vld [vmem:[%s276 + $0x48] sm:$0x11]
        %v332 = vld [vmem:[%s276 + $0x50] sm:$0xff]
        %v333 = vld [vmem:[%s276 + $0x58] sm:$0x11]
        %v334 = vld [vmem:[%s276 + $0x60] sm:$0xff]
        %v335 = vld [vmem:[%s276 + $0x68] sm:$0x11]
        %v336 = vld [vmem:[%s276 + $0x70] sm:$0xff]
        %v337 = vld [vmem:[%s276 + $0x78] sm:$0x11]
        %v338 = vld [vmem:[%s276 + $0x80] sm:$0xff]
        %v339 = vld [vmem:[%s276 + $0x88] sm:$0x11]
        %v340 = vld [vmem:[%s276 + $0x90] sm:$0xff]
        %v341 = vld [vmem:[%s276 + $0x98] sm:$0x11]
        %342 = vst.msk [vmem:[#allocation2] sm:$0xff] %vm280, %v322
        %vm343 = vcmask 1040384
        %vm344 = vcmask 520196
        %vm345 = vmor %vm344, %vm343
        %346 = vst.msk [vmem:[#allocation2 + $0x8] sm:$0x11] %vm345, %v323
        %347 = vst.msk [vmem:[#allocation2 + $0x10] sm:$0xff] %vm280, %v324
        %348 = vst.msk [vmem:[#allocation2 + $0x18] sm:$0x11] %vm345, %v325
        %349 = vst.msk [vmem:[#allocation2 + $0x20] sm:$0xff] %vm280, %v326
        %350 = vst.msk [vmem:[#allocation2 + $0x28] sm:$0x11] %vm345, %v327
        %351 = vst.msk [vmem:[#allocation2 + $0x30] sm:$0xff] %vm280, %v328
        %352 = vst.msk [vmem:[#allocation2 + $0x38] sm:$0x11] %vm345, %v329
        %353 = vst.msk [vmem:[#allocation2 + $0x40] sm:$0xff] %vm280, %v330
        %354 = vst.msk [vmem:[#allocation2 + $0x48] sm:$0x11] %vm345, %v331
        %355 = vst.msk [vmem:[#allocation2 + $0x50] sm:$0xff] %vm280, %v332
        %356 = vst.msk [vmem:[#allocation2 + $0x58] sm:$0x11] %vm345, %v333
        %357 = vst.msk [vmem:[#allocation2 + $0x60] sm:$0xff] %vm280, %v334
        %358 = vst.msk [vmem:[#allocation2 + $0x68] sm:$0x11] %vm345, %v335
        %359 = vst.msk [vmem:[#allocation2 + $0x70] sm:$0xff] %vm280, %v336
        %360 = vst.msk [vmem:[#allocation2 + $0x78] sm:$0x11] %vm345, %v337
        %361 = vst.msk [vmem:[#allocation2 + $0x80] sm:$0xff] %vm280, %v338
        %362 = vst.msk [vmem:[#allocation2 + $0x88] sm:$0x11] %vm345, %v339
        %363 = vst.msk [vmem:[#allocation2 + $0x90] sm:$0xff] %vm280, %v340
        %364 = vst.msk [vmem:[#allocation2 + $0x98] sm:$0x11] %vm345, %v341
        %v365 = vld [vmem:[#allocation2] sm:$0xff]
        %v366 = vld [vmem:[#allocation2 + $0x8] sm:$0xff]
        %v367 = vld [vmem:[#allocation2 + $0x10] sm:$0xff]
        %v368 = vld [vmem:[#allocation2 + $0x18] sm:$0xff]
        %v369 = vld [vmem:[#allocation2 + $0x20] sm:$0xff]
        %v370 = vld [vmem:[#allocation2 + $0x28] sm:$0xff]
        %v371 = vld [vmem:[#allocation2 + $0x30] sm:$0xff]
        %v372 = vld [vmem:[#allocation2 + $0x38] sm:$0xff]
        %v373 = vld [vmem:[#allocation2 + $0x40] sm:$0xff]
        %v374 = vld [vmem:[#allocation2 + $0x48] sm:$0xff]
        %v375 = vld [vmem:[#allocation2 + $0x50] sm:$0xff]
        %v376 = vld [vmem:[#allocation2 + $0x58] sm:$0xff]
        %v377 = vld [vmem:[#allocation2 + $0x60] sm:$0xff]
        %v378 = vld [vmem:[#allocation2 + $0x68] sm:$0xff]
        %v379 = vld [vmem:[#allocation2 + $0x70] sm:$0xff]
        %v380 = vld [vmem:[#allocation2 + $0x78] sm:$0xff]
        %v381 = vld [vmem:[%s1] sm:$0xf]
        %v382 = vld [vmem:[%s1 + $0x4] sm:$0xf]
        %v383 = vld [vmem:[%s1 + $0x8] sm:$0xf]
        %v384 = vld [vmem:[%s1 + $0xc] sm:$0xf]
        %v385 = vld [vmem:[%s1 + $0x10] sm:$0xf]
        %v386 = vld [vmem:[%s1 + $0x14] sm:$0xf]
        %v387 = vld [vmem:[%s1 + $0x18] sm:$0xf]
        %v388 = vld [vmem:[%s1 + $0x1c] sm:$0xf]
        %v389 = vld [vmem:[%s1 + $0x20] sm:$0xf]
        %v390 = vld [vmem:[%s1 + $0x24] sm:$0xf]
        %v391 = vld [vmem:[%s1 + $0x28] sm:$0xf]
        %v392 = vld [vmem:[%s1 + $0x2c] sm:$0xf]
        %v393 = vld [vmem:[%s1 + $0x30] sm:$0xf]
        %v394 = vld [vmem:[%s1 + $0x34] sm:$0xf]
        %v395 = vld [vmem:[%s1 + $0x38] sm:$0xf]
        %v396 = vld [vmem:[%s1 + $0x3c] sm:$0xf]
        %v397 = vld [vmem:[%s1 + $0x40] sm:$0xf]
        %v398 = vld [vmem:[%s1 + $0x44] sm:$0xf]
        %v399 = vld [vmem:[%s1 + $0x48] sm:$0xf]
        %v400 = vld [vmem:[%s1 + $0x4c] sm:$0xf]
        %v401 = vld [vmem:[%s1 + $0x50] sm:$0xf]
        %v402 = vld [vmem:[%s1 + $0x54] sm:$0xf]
        %v403 = vld [vmem:[%s1 + $0x58] sm:$0xf]
        %v404 = vld [vmem:[%s1 + $0x5c] sm:$0xf]
        %v421 = vunpack.c.l.b16 %v365
        %v422 = vunpack.c.h.b16 %v365
        %v423 = vunpack.c.l.b16 %v366
        %v424 = vunpack.c.h.b16 %v366
        %v425 = vunpack.c.l.b16 %v367
        %v426 = vunpack.c.h.b16 %v367
        %v427 = vunpack.c.l.b16 %v368
        %v428 = vunpack.c.h.b16 %v368
        %v429 = vunpack.c.l.b16 %v369
        %v430 = vunpack.c.h.b16 %v369
        %v431 = vunpack.c.l.b16 %v370
        %v432 = vunpack.c.h.b16 %v370
        %v433 = vunpack.c.l.b16 %v371
        %v434 = vunpack.c.h.b16 %v371
        %v435 = vunpack.c.l.b16 %v372
        %v436 = vunpack.c.h.b16 %v372
        %v437 = vunpack.c.l.b16 %v373
        %v438 = vunpack.c.h.b16 %v373
        %v439 = vunpack.c.l.b16 %v374
        %v440 = vunpack.c.h.b16 %v374
        %v441 = vunpack.c.l.b16 %v375
        %v442 = vunpack.c.h.b16 %v375
        %v443 = vunpack.c.l.b16 %v376
        %v444 = vunpack.c.h.b16 %v376
        %v445 = vunpack.c.l.b16 %v377
        %v446 = vunpack.c.h.b16 %v377
        %v447 = vunpack.c.l.b16 %v378
        %v448 = vunpack.c.h.b16 %v378
        %v449 = vunpack.c.l.b16 %v379
        %v450 = vunpack.c.h.b16 %v379
        %v451 = vunpack.c.l.b16 %v380
        %v452 = vunpack.c.h.b16 %v380
        %v453 = vpack.c.b16 %v423, %v421
        %v454 = vpack.c.b16 %v424, %v422
        %v455 = vpack.c.b16 %v427, %v425
        %v456 = vpack.c.b16 %v428, %v426
        %v457 = vpack.c.b16 %v431, %v429
        %v458 = vpack.c.b16 %v432, %v430
        %v459 = vpack.c.b16 %v435, %v433
        %v460 = vpack.c.b16 %v436, %v434
        %v461 = vpack.c.b16 %v439, %v437
        %v462 = vpack.c.b16 %v440, %v438
        %v463 = vpack.c.b16 %v443, %v441
        %v464 = vpack.c.b16 %v444, %v442
        %v465 = vpack.c.b16 %v447, %v445
        %v466 = vpack.c.b16 %v448, %v446
        %v467 = vpack.c.b16 %v451, %v449
        %v468 = vpack.c.b16 %v452, %v450
        %v501 = vunpack.c.l.b16 %v381
        %v502 = vunpack.c.l.b16 %v382
        %v503 = vunpack.c.l.b16 %v383
        %v504 = vunpack.c.l.b16 %v384
        %v505 = vunpack.c.l.b16 %v385
        %v506 = vunpack.c.l.b16 %v386
        %v507 = vunpack.c.l.b16 %v387
        %v508 = vunpack.c.l.b16 %v388
        %v509 = vunpack.c.l.b16 %v389
        %v510 = vunpack.c.l.b16 %v390
        %v511 = vunpack.c.l.b16 %v391
        %v512 = vunpack.c.l.b16 %v392
        %v513 = vunpack.c.l.b16 %v393
        %v514 = vunpack.c.l.b16 %v394
        %v515 = vunpack.c.l.b16 %v395
        %v516 = vunpack.c.l.b16 %v396
        %v517 = vunpack.c.l.b16 %v397
        %v518 = vunpack.c.l.b16 %v398
        %v519 = vunpack.c.l.b16 %v399
        %v520 = vunpack.c.l.b16 %v400
        %v521 = vunpack.c.l.b16 %v401
        %v522 = vunpack.c.l.b16 %v402
        %v523 = vunpack.c.l.b16 %v403
        %v524 = vunpack.c.l.b16 %v404
        %v525 = vpack.c.b16 %v502, %v501
        %v526 = vpack.c.b16 %v504, %v503
        %v527 = vpack.c.b16 %v506, %v505
        %v528 = vpack.c.b16 %v508, %v507
        %v529 = vpack.c.b16 %v510, %v509
        %v530 = vpack.c.b16 %v512, %v511
        %v531 = vpack.c.b16 %v514, %v513
        %v532 = vpack.c.b16 %v516, %v515
        %v533 = vpack.c.b16 %v518, %v517
        %v534 = vpack.c.b16 %v520, %v519
        %v535 = vpack.c.b16 %v522, %v521
        %v536 = vpack.c.b16 %v524, %v523
        %vm549 = vcmask 523264
        %v551 = vsel %vm549, %v454, 0
        %v554 = vsel %vm549, %v456, 0
        %v557 = vsel %vm549, %v458, 0
        %v560 = vsel %vm549, %v460, 0
        %v563 = vsel %vm549, %v462, 0
        %v566 = vsel %vm549, %v464, 0
        %v569 = vsel %vm549, %v466, 0
        %v572 = vsel %vm549, %v468, 0
        %574 = vmatpush.bf16.msra.mxu0 %v532
        %575 = vmatpush.bf16.msra.mxu0 %v531
        %576 = vmatpush.bf16.msra.mxu0 %v530
        %577 = vmatpush.bf16.msra.mxu0 %v529
        %578 = vmatpush.bf16.msra.mxu0 %v528
        %579 = vmatpush.bf16.msra.mxu0 %v527
        %580 = vmatpush.bf16.msra.mxu0 %v526
        %581 = vmatpush.bf16.msra.mxu0 %v525
        %582 = vmatmul.bf16.gmra.mxu0 %v453
        %v583 = vpop.f32.mrf.mxu0
        %v584 = vadd.f32 0.0, %v583
        %v585 = vpop.f32.mrf.mxu0
        %v586 = vadd.f32 0.0, %v585
        %587 = vmatmul.bf16.gmra.mxu0 %v455
        %v588 = vpop.f32.mrf.mxu0
        %v589 = vadd.f32 0.0, %v588
        %v590 = vpop.f32.mrf.mxu0
        %v591 = vadd.f32 0.0, %v590
        %592 = vmatmul.bf16.gmra.mxu0 %v457
        %v593 = vpop.f32.mrf.mxu0
        %v594 = vadd.f32 0.0, %v593
        %v595 = vpop.f32.mrf.mxu0
        %v596 = vadd.f32 0.0, %v595
        %597 = vmatmul.bf16.gmra.mxu0 %v459
        %v598 = vpop.f32.mrf.mxu0
        %v599 = vadd.f32 0.0, %v598
        %v600 = vpop.f32.mrf.mxu0
        %v601 = vadd.f32 0.0, %v600
        %602 = vmatmul.bf16.gmra.mxu0 %v461
        %v603 = vpop.f32.mrf.mxu0
        %v604 = vadd.f32 0.0, %v603
        %v605 = vpop.f32.mrf.mxu0
        %v606 = vadd.f32 0.0, %v605
        %607 = vmatmul.bf16.gmra.mxu0 %v463
        %v608 = vpop.f32.mrf.mxu0
        %v609 = vadd.f32 0.0, %v608
        %v610 = vpop.f32.mrf.mxu0
        %v611 = vadd.f32 0.0, %v610
        %612 = vmatmul.bf16.gmra.mxu0 %v465
        %v613 = vpop.f32.mrf.mxu0
        %v614 = vadd.f32 0.0, %v613
        %v615 = vpop.f32.mrf.mxu0
        %v616 = vadd.f32 0.0, %v615
        %617 = vmatmul.bf16.gmra.mxu0 %v467
        %v618 = vpop.f32.mrf.mxu0
        %v619 = vadd.f32 0.0, %v618
        %v620 = vpop.f32.mrf.mxu0
        %v621 = vadd.f32 0.0, %v620
        %622 = vdwg.mxu0
        %623 = vmatpush.bf16.msra.mxu0 0
        %624 = vmatpush.bf16.msra.mxu0 0
        %625 = vmatpush.bf16.msra.mxu0 0
        %626 = vmatpush.bf16.msra.mxu0 0
        %627 = vmatpush.bf16.msra.mxu0 %v536
        %628 = vmatpush.bf16.msra.mxu0 %v535
        %629 = vmatpush.bf16.msra.mxu0 %v534
        %630 = vmatpush.bf16.msra.mxu0 %v533
        %631 = vmatmul.bf16.gmra.mxu0 %v551
        %v632 = vpop.f32.mrf.mxu0
        %v633 = vadd.f32 %v584, %v632
        %v634 = vpop.f32.mrf.mxu0
        %v635 = vadd.f32 %v586, %v634
        %636 = vmatmul.bf16.gmra.mxu0 %v554
        %v637 = vpop.f32.mrf.mxu0
        %v638 = vadd.f32 %v589, %v637
        %v639 = vpop.f32.mrf.mxu0
        %v640 = vadd.f32 %v591, %v639
        %641 = vmatmul.bf16.gmra.mxu0 %v557
        %v642 = vpop.f32.mrf.mxu0
        %v643 = vadd.f32 %v594, %v642
        %v644 = vpop.f32.mrf.mxu0
        %v645 = vadd.f32 %v596, %v644
        %646 = vmatmul.bf16.gmra.mxu0 %v560
        %v647 = vpop.f32.mrf.mxu0
        %v648 = vadd.f32 %v599, %v647
        %v649 = vpop.f32.mrf.mxu0
        %v650 = vadd.f32 %v601, %v649
        %651 = vmatmul.bf16.gmra.mxu0 %v563
        %v652 = vpop.f32.mrf.mxu0
        %v653 = vadd.f32 %v604, %v652
        %v654 = vpop.f32.mrf.mxu0
        %v655 = vadd.f32 %v606, %v654
        %656 = vmatmul.bf16.gmra.mxu0 %v566
        %v657 = vpop.f32.mrf.mxu0
        %v658 = vadd.f32 %v609, %v657
        %v659 = vpop.f32.mrf.mxu0
        %v660 = vadd.f32 %v611, %v659
        %661 = vmatmul.bf16.gmra.mxu0 %v569
        %v662 = vpop.f32.mrf.mxu0
        %v663 = vadd.f32 %v614, %v662
        %v664 = vpop.f32.mrf.mxu0
        %v665 = vadd.f32 %v616, %v664
        %666 = vmatmul.bf16.gmra.mxu0 %v572
        %v667 = vpop.f32.mrf.mxu0
        %v668 = vadd.f32 %v619, %v667
        %v669 = vpop.f32.mrf.mxu0
        %v670 = vadd.f32 %v621, %v669
        %671 = vdwg.mxu0
        %vm688 = vcmask 1046528
        %v689 = vrot.slane %v633, 1
        %v690 = vrot.slane %v635, 1
        %v691 = vsel %vm688, %v689, %v690
        %v692 = vrot.slane %v638, 1
        %v693 = vrot.slane %v640, 1
        %v694 = vsel %vm688, %v692, %v693
        %v695 = vrot.slane %v643, 1
        %v696 = vrot.slane %v645, 1
        %v697 = vsel %vm688, %v695, %v696
        %v698 = vrot.slane %v648, 1
        %v699 = vrot.slane %v650, 1
        %v700 = vsel %vm688, %v698, %v699
        %v701 = vrot.slane %v653, 1
        %v702 = vrot.slane %v655, 1
        %v703 = vsel %vm688, %v701, %v702
        %v704 = vrot.slane %v658, 1
        %v705 = vrot.slane %v660, 1
        %v706 = vsel %vm688, %v704, %v705
        %v707 = vrot.slane %v663, 1
        %v708 = vrot.slane %v665, 1
        %v709 = vsel %vm688, %v707, %v708
        %v710 = vrot.slane %v668, 1
        %v711 = vrot.slane %v670, 1
        %v712 = vsel %vm688, %v710, %v711
        %713 = vrot.lane.b32.xlu0 %v691, 96
        %v714 = vpop.permute.xlu0 %713
        %715 = vrot.lane.b32.xlu0 %v694, 96
        %v716 = vpop.permute.xlu0 %715
        %717 = vrot.lane.b32.xlu0 %v697, 96
        %v718 = vpop.permute.xlu0 %717
        %719 = vrot.lane.b32.xlu0 %v700, 96
        %v720 = vpop.permute.xlu0 %719
        %721 = vrot.lane.b32.xlu0 %v703, 96
        %v722 = vpop.permute.xlu0 %721
        %723 = vrot.lane.b32.xlu0 %v706, 96
        %v724 = vpop.permute.xlu0 %723
        %725 = vrot.lane.b32.xlu0 %v709, 96
        %v726 = vpop.permute.xlu0 %725
        %727 = vrot.lane.b32.xlu0 %v712, 96
        %v728 = vpop.permute.xlu0 %727
        %v737 = vadd.f32 %v633, %v714
        %v738 = vadd.f32 %v638, %v716
        %v739 = vadd.f32 %v643, %v718
        %v740 = vadd.f32 %v648, %v720
        %v741 = vadd.f32 %v653, %v722
        %v742 = vadd.f32 %v658, %v724
        %v743 = vadd.f32 %v663, %v726
        %v744 = vadd.f32 %v668, %v728
        %vm745 = vcmask 1045504
        %v746 = vrot.slane %v633, 2
        %v747 = vrot.slane %v635, 2
        %v748 = vsel %vm745, %v746, %v747
        %v749 = vrot.slane %v638, 2
        %v750 = vrot.slane %v640, 2
        %v751 = vsel %vm745, %v749, %v750
        %v752 = vrot.slane %v643, 2
        %v753 = vrot.slane %v645, 2
        %v754 = vsel %vm745, %v752, %v753
        %v755 = vrot.slane %v648, 2
        %v756 = vrot.slane %v650, 2
        %v757 = vsel %vm745, %v755, %v756
        %v758 = vrot.slane %v653, 2
        %v759 = vrot.slane %v655, 2
        %v760 = vsel %vm745, %v758, %v759
        %v761 = vrot.slane %v658, 2
        %v762 = vrot.slane %v660, 2
        %v763 = vsel %vm745, %v761, %v762
        %v764 = vrot.slane %v663, 2
        %v765 = vrot.slane %v665, 2
        %v766 = vsel %vm745, %v764, %v765
        %v767 = vrot.slane %v668, 2
        %v768 = vrot.slane %v670, 2
        %v769 = vsel %vm745, %v767, %v768
        %770 = vrot.lane.b32.xlu0 %v748, 64
        %v771 = vpop.permute.xlu0 %770
        %772 = vrot.lane.b32.xlu0 %v751, 64
        %v773 = vpop.permute.xlu0 %772
        %774 = vrot.lane.b32.xlu0 %v754, 64
        %v775 = vpop.permute.xlu0 %774
        %776 = vrot.lane.b32.xlu0 %v757, 64
        %v777 = vpop.permute.xlu0 %776
        %778 = vrot.lane.b32.xlu0 %v760, 64
        %v779 = vpop.permute.xlu0 %778
        %780 = vrot.lane.b32.xlu0 %v763, 64
        %v781 = vpop.permute.xlu0 %780
        %782 = vrot.lane.b32.xlu0 %v766, 64
        %v783 = vpop.permute.xlu0 %782
        %784 = vrot.lane.b32.xlu0 %v769, 64
        %v785 = vpop.permute.xlu0 %784
        %v794 = vadd.f32 %v737, %v771
        %v795 = vadd.f32 %v738, %v773
        %v796 = vadd.f32 %v739, %v775
        %v797 = vadd.f32 %v740, %v777
        %v798 = vadd.f32 %v741, %v779
        %v799 = vadd.f32 %v742, %v781
        %v800 = vadd.f32 %v743, %v783
        %v801 = vadd.f32 %v744, %v785
        %s802 = scalar_lea.vmem [#allocation2], 16
        %v803 = vld [vmem:[%s802] sm:$0xff]
        %v804 = vld [vmem:[%s802 + $0x8] sm:$0xff]
        %v805 = vld [vmem:[%s802 + $0x10] sm:$0xff]
        %v806 = vld [vmem:[%s802 + $0x18] sm:$0xff]
        %v807 = vld [vmem:[%s802 + $0x20] sm:$0xff]
        %v808 = vld [vmem:[%s802 + $0x28] sm:$0xff]
        %v809 = vld [vmem:[%s802 + $0x30] sm:$0xff]
        %v810 = vld [vmem:[%s802 + $0x38] sm:$0xff]
        %v811 = vld [vmem:[%s802 + $0x40] sm:$0xff]
        %v812 = vld [vmem:[%s802 + $0x48] sm:$0xff]
        %v813 = vld [vmem:[%s802 + $0x50] sm:$0xff]
        %v814 = vld [vmem:[%s802 + $0x58] sm:$0xff]
        %v815 = vld [vmem:[%s802 + $0x60] sm:$0xff]
        %v816 = vld [vmem:[%s802 + $0x68] sm:$0xff]
        %v817 = vld [vmem:[%s802 + $0x70] sm:$0xff]
        %v818 = vld [vmem:[%s802 + $0x78] sm:$0xff]
        %s819 = scalar_lea.vmem %s1, 96
        %v820 = vld [vmem:[%s819] sm:$0xf]
        %v821 = vld [vmem:[%s819 + $0x4] sm:$0xf]
        %v822 = vld [vmem:[%s819 + $0x8] sm:$0xf]
        %v823 = vld [vmem:[%s819 + $0xc] sm:$0xf]
        %v824 = vld [vmem:[%s819 + $0x10] sm:$0xf]
        %v825 = vld [vmem:[%s819 + $0x14] sm:$0xf]
        %v826 = vld [vmem:[%s819 + $0x18] sm:$0xf]
        %v827 = vld [vmem:[%s819 + $0x1c] sm:$0xf]
        %v828 = vld [vmem:[%s819 + $0x20] sm:$0xf]
        %v829 = vld [vmem:[%s819 + $0x24] sm:$0xf]
        %v830 = vld [vmem:[%s819 + $0x28] sm:$0xf]
        %v831 = vld [vmem:[%s819 + $0x2c] sm:$0xf]
        %v832 = vld [vmem:[%s819 + $0x30] sm:$0xf]
        %v833 = vld [vmem:[%s819 + $0x34] sm:$0xf]
        %v834 = vld [vmem:[%s819 + $0x38] sm:$0xf]
        %v835 = vld [vmem:[%s819 + $0x3c] sm:$0xf]
        %v836 = vld [vmem:[%s819 + $0x40] sm:$0xf]
        %v837 = vld [vmem:[%s819 + $0x44] sm:$0xf]
        %v838 = vld [vmem:[%s819 + $0x48] sm:$0xf]
        %v839 = vld [vmem:[%s819 + $0x4c] sm:$0xf]
        %v840 = vld [vmem:[%s819 + $0x50] sm:$0xf]
        %v841 = vld [vmem:[%s819 + $0x54] sm:$0xf]
        %v842 = vld [vmem:[%s819 + $0x58] sm:$0xf]
        %v843 = vld [vmem:[%s819 + $0x5c] sm:$0xf]
        %v860 = vunpack.c.l.b16 %v803
        %v861 = vunpack.c.h.b16 %v803
        %v862 = vunpack.c.l.b16 %v804
        %v863 = vunpack.c.h.b16 %v804
        %v864 = vunpack.c.l.b16 %v805
        %v865 = vunpack.c.h.b16 %v805
        %v866 = vunpack.c.l.b16 %v806
        %v867 = vunpack.c.h.b16 %v806
        %v868 = vunpack.c.l.b16 %v807
        %v869 = vunpack.c.h.b16 %v807
        %v870 = vunpack.c.l.b16 %v808
        %v871 = vunpack.c.h.b16 %v808
        %v872 = vunpack.c.l.b16 %v809
        %v873 = vunpack.c.h.b16 %v809
        %v874 = vunpack.c.l.b16 %v810
        %v875 = vunpack.c.h.b16 %v810
        %v876 = vunpack.c.l.b16 %v811
        %v877 = vunpack.c.h.b16 %v811
        %v878 = vunpack.c.l.b16 %v812
        %v879 = vunpack.c.h.b16 %v812
        %v880 = vunpack.c.l.b16 %v813
        %v881 = vunpack.c.h.b16 %v813
        %v882 = vunpack.c.l.b16 %v814
        %v883 = vunpack.c.h.b16 %v814
        %v884 = vunpack.c.l.b16 %v815
        %v885 = vunpack.c.h.b16 %v815
        %v886 = vunpack.c.l.b16 %v816
        %v887 = vunpack.c.h.b16 %v816
        %v888 = vunpack.c.l.b16 %v817
        %v889 = vunpack.c.h.b16 %v817
        %v890 = vunpack.c.l.b16 %v818
        %v891 = vunpack.c.h.b16 %v818
        %v892 = vpack.c.b16 %v862, %v860
        %v893 = vpack.c.b16 %v863, %v861
        %v894 = vpack.c.b16 %v866, %v864
        %v895 = vpack.c.b16 %v867, %v865
        %v896 = vpack.c.b16 %v870, %v868
        %v897 = vpack.c.b16 %v871, %v869
        %v898 = vpack.c.b16 %v874, %v872
        %v899 = vpack.c.b16 %v875, %v873
        %v900 = vpack.c.b16 %v878, %v876
        %v901 = vpack.c.b16 %v879, %v877
        %v902 = vpack.c.b16 %v882, %v880
        %v903 = vpack.c.b16 %v883, %v881
        %v904 = vpack.c.b16 %v886, %v884
        %v905 = vpack.c.b16 %v887, %v885
        %v906 = vpack.c.b16 %v890, %v888
        %v907 = vpack.c.b16 %v891, %v889
        %v940 = vunpack.c.l.b16 %v820
        %v941 = vunpack.c.l.b16 %v821
        %v942 = vunpack.c.l.b16 %v822
        %v943 = vunpack.c.l.b16 %v823
        %v944 = vunpack.c.l.b16 %v824
        %v945 = vunpack.c.l.b16 %v825
        %v946 = vunpack.c.l.b16 %v826
        %v947 = vunpack.c.l.b16 %v827
        %v948 = vunpack.c.l.b16 %v828
        %v949 = vunpack.c.l.b16 %v829
        %v950 = vunpack.c.l.b16 %v830
        %v951 = vunpack.c.l.b16 %v831
        %v952 = vunpack.c.l.b16 %v832
        %v953 = vunpack.c.l.b16 %v833
        %v954 = vunpack.c.l.b16 %v834
        %v955 = vunpack.c.l.b16 %v835
        %v956 = vunpack.c.l.b16 %v836
        %v957 = vunpack.c.l.b16 %v837
        %v958 = vunpack.c.l.b16 %v838
        %v959 = vunpack.c.l.b16 %v839
        %v960 = vunpack.c.l.b16 %v840
        %v961 = vunpack.c.l.b16 %v841
        %v962 = vunpack.c.l.b16 %v842
        %v963 = vunpack.c.l.b16 %v843
        %v964 = vpack.c.b16 %v941, %v940
        %v965 = vpack.c.b16 %v943, %v942
        %v966 = vpack.c.b16 %v945, %v944
        %v967 = vpack.c.b16 %v947, %v946
        %v968 = vpack.c.b16 %v949, %v948
        %v969 = vpack.c.b16 %v951, %v950
        %v970 = vpack.c.b16 %v953, %v952
        %v971 = vpack.c.b16 %v955, %v954
        %v972 = vpack.c.b16 %v957, %v956
        %v973 = vpack.c.b16 %v959, %v958
        %v974 = vpack.c.b16 %v961, %v960
        %v975 = vpack.c.b16 %v963, %v962
        %v989 = vsel %vm549, %v893, 0
        %v992 = vsel %vm549, %v895, 0
        %v995 = vsel %vm549, %v897, 0
        %v998 = vsel %vm549, %v899, 0
        %v1001 = vsel %vm549, %v901, 0
        %v1004 = vsel %vm549, %v903, 0
        %v1007 = vsel %vm549, %v905, 0
        %v1010 = vsel %vm549, %v907, 0
        %1012 = vmatpush.bf16.msra.mxu0 %v971
        %1013 = vmatpush.bf16.msra.mxu0 %v970
        %1014 = vmatpush.bf16.msra.mxu0 %v969
        %1015 = vmatpush.bf16.msra.mxu0 %v968
        %1016 = vmatpush.bf16.msra.mxu0 %v967
        %1017 = vmatpush.bf16.msra.mxu0 %v966
        %1018 = vmatpush.bf16.msra.mxu0 %v965
        %1019 = vmatpush.bf16.msra.mxu0 %v964
        %1020 = vmatmul.bf16.gmra.mxu0 %v892
        %v1021 = vpop.f32.mrf.mxu0
        %v1022 = vadd.f32 0.0, %v1021
        %v1023 = vpop.f32.mrf.mxu0
        %v1024 = vadd.f32 0.0, %v1023
        %1025 = vmatmul.bf16.gmra.mxu0 %v894
        %v1026 = vpop.f32.mrf.mxu0
        %v1027 = vadd.f32 0.0, %v1026
        %v1028 = vpop.f32.mrf.mxu0
        %v1029 = vadd.f32 0.0, %v1028
        %1030 = vmatmul.bf16.gmra.mxu0 %v896
        %v1031 = vpop.f32.mrf.mxu0
        %v1032 = vadd.f32 0.0, %v1031
        %v1033 = vpop.f32.mrf.mxu0
        %v1034 = vadd.f32 0.0, %v1033
        %1035 = vmatmul.bf16.gmra.mxu0 %v898
        %v1036 = vpop.f32.mrf.mxu0
        %v1037 = vadd.f32 0.0, %v1036
        %v1038 = vpop.f32.mrf.mxu0
        %v1039 = vadd.f32 0.0, %v1038
        %1040 = vmatmul.bf16.gmra.mxu0 %v900
        %v1041 = vpop.f32.mrf.mxu0
        %v1042 = vadd.f32 0.0, %v1041
        %v1043 = vpop.f32.mrf.mxu0
        %v1044 = vadd.f32 0.0, %v1043
        %1045 = vmatmul.bf16.gmra.mxu0 %v902
        %v1046 = vpop.f32.mrf.mxu0
        %v1047 = vadd.f32 0.0, %v1046
        %v1048 = vpop.f32.mrf.mxu0
        %v1049 = vadd.f32 0.0, %v1048
        %1050 = vmatmul.bf16.gmra.mxu0 %v904
        %v1051 = vpop.f32.mrf.mxu0
        %v1052 = vadd.f32 0.0, %v1051
        %v1053 = vpop.f32.mrf.mxu0
        %v1054 = vadd.f32 0.0, %v1053
        %1055 = vmatmul.bf16.gmra.mxu0 %v906
        %v1056 = vpop.f32.mrf.mxu0
        %v1057 = vadd.f32 0.0, %v1056
        %v1058 = vpop.f32.mrf.mxu0
        %v1059 = vadd.f32 0.0, %v1058
        %1060 = vdwg.mxu0
        %1061 = vmatpush.bf16.msra.mxu0 0
        %1062 = vmatpush.bf16.msra.mxu0 0
        %1063 = vmatpush.bf16.msra.mxu0 0
        %1064 = vmatpush.bf16.msra.mxu0 0
        %1065 = vmatpush.bf16.msra.mxu0 %v975
        %1066 = vmatpush.bf16.msra.mxu0 %v974
        %1067 = vmatpush.bf16.msra.mxu0 %v973
        %1068 = vmatpush.bf16.msra.mxu0 %v972
        %1069 = vmatmul.bf16.gmra.mxu0 %v989
        %v1070 = vpop.f32.mrf.mxu0
        %v1071 = vadd.f32 %v1022, %v1070
        %v1072 = vpop.f32.mrf.mxu0
        %v1073 = vadd.f32 %v1024, %v1072
        %1074 = vmatmul.bf16.gmra.mxu0 %v992
        %v1075 = vpop.f32.mrf.mxu0
        %v1076 = vadd.f32 %v1027, %v1075
        %v1077 = vpop.f32.mrf.mxu0
        %v1078 = vadd.f32 %v1029, %v1077
        %1079 = vmatmul.bf16.gmra.mxu0 %v995
        %v1080 = vpop.f32.mrf.mxu0
        %v1081 = vadd.f32 %v1032, %v1080
        %v1082 = vpop.f32.mrf.mxu0
        %v1083 = vadd.f32 %v1034, %v1082
        %1084 = vmatmul.bf16.gmra.mxu0 %v998
        %v1085 = vpop.f32.mrf.mxu0
        %v1086 = vadd.f32 %v1037, %v1085
        %v1087 = vpop.f32.mrf.mxu0
        %v1088 = vadd.f32 %v1039, %v1087
        %1089 = vmatmul.bf16.gmra.mxu0 %v1001
        %v1090 = vpop.f32.mrf.mxu0
        %v1091 = vadd.f32 %v1042, %v1090
        %v1092 = vpop.f32.mrf.mxu0
        %v1093 = vadd.f32 %v1044, %v1092
        %1094 = vmatmul.bf16.gmra.mxu0 %v1004
        %v1095 = vpop.f32.mrf.mxu0
        %v1096 = vadd.f32 %v1047, %v1095
        %v1097 = vpop.f32.mrf.mxu0
        %v1098 = vadd.f32 %v1049, %v1097
        %1099 = vmatmul.bf16.gmra.mxu0 %v1007
        %v1100 = vpop.f32.mrf.mxu0
        %v1101 = vadd.f32 %v1052, %v1100
        %v1102 = vpop.f32.mrf.mxu0
        %v1103 = vadd.f32 %v1054, %v1102
        %1104 = vmatmul.bf16.gmra.mxu0 %v1010
        %v1105 = vpop.f32.mrf.mxu0
        %v1106 = vadd.f32 %v1057, %v1105
        %v1107 = vpop.f32.mrf.mxu0
        %v1108 = vadd.f32 %v1059, %v1107
        %1109 = vdwg.mxu0
        %v1126 = vrot.slane %v1071, 1
        %v1127 = vrot.slane %v1073, 1
        %v1128 = vsel %vm688, %v1126, %v1127
        %v1129 = vrot.slane %v1076, 1
        %v1130 = vrot.slane %v1078, 1
        %v1131 = vsel %vm688, %v1129, %v1130
        %v1132 = vrot.slane %v1081, 1
        %v1133 = vrot.slane %v1083, 1
        %v1134 = vsel %vm688, %v1132, %v1133
        %v1135 = vrot.slane %v1086, 1
        %v1136 = vrot.slane %v1088, 1
        %v1137 = vsel %vm688, %v1135, %v1136
        %v1138 = vrot.slane %v1091, 1
        %v1139 = vrot.slane %v1093, 1
        %v1140 = vsel %vm688, %v1138, %v1139
        %v1141 = vrot.slane %v1096, 1
        %v1142 = vrot.slane %v1098, 1
        %v1143 = vsel %vm688, %v1141, %v1142
        %v1144 = vrot.slane %v1101, 1
        %v1145 = vrot.slane %v1103, 1
        %v1146 = vsel %vm688, %v1144, %v1145
        %v1147 = vrot.slane %v1106, 1
        %v1148 = vrot.slane %v1108, 1
        %v1149 = vsel %vm688, %v1147, %v1148
        %1150 = vrot.lane.b32.xlu0 %v1128, 96
        %v1151 = vpop.permute.xlu0 %1150
        %1152 = vrot.lane.b32.xlu0 %v1131, 96
        %v1153 = vpop.permute.xlu0 %1152
        %1154 = vrot.lane.b32.xlu0 %v1134, 96
        %v1155 = vpop.permute.xlu0 %1154
        %1156 = vrot.lane.b32.xlu0 %v1137, 96
        %v1157 = vpop.permute.xlu0 %1156
        %1158 = vrot.lane.b32.xlu0 %v1140, 96
        %v1159 = vpop.permute.xlu0 %1158
        %1160 = vrot.lane.b32.xlu0 %v1143, 96
        %v1161 = vpop.permute.xlu0 %1160
        %1162 = vrot.lane.b32.xlu0 %v1146, 96
        %v1163 = vpop.permute.xlu0 %1162
        %1164 = vrot.lane.b32.xlu0 %v1149, 96
        %v1165 = vpop.permute.xlu0 %1164
        %v1174 = vadd.f32 %v1071, %v1151
        %v1175 = vadd.f32 %v1076, %v1153
        %v1176 = vadd.f32 %v1081, %v1155
        %v1177 = vadd.f32 %v1086, %v1157
        %v1178 = vadd.f32 %v1091, %v1159
        %v1179 = vadd.f32 %v1096, %v1161
        %v1180 = vadd.f32 %v1101, %v1163
        %v1181 = vadd.f32 %v1106, %v1165
        %v1182 = vrot.slane %v1071, 2
        %v1183 = vrot.slane %v1073, 2
        %v1184 = vsel %vm745, %v1182, %v1183
        %v1185 = vrot.slane %v1076, 2
        %v1186 = vrot.slane %v1078, 2
        %v1187 = vsel %vm745, %v1185, %v1186
        %v1188 = vrot.slane %v1081, 2
        %v1189 = vrot.slane %v1083, 2
        %v1190 = vsel %vm745, %v1188, %v1189
        %v1191 = vrot.slane %v1086, 2
        %v1192 = vrot.slane %v1088, 2
        %v1193 = vsel %vm745, %v1191, %v1192
        %v1194 = vrot.slane %v1091, 2
        %v1195 = vrot.slane %v1093, 2
        %v1196 = vsel %vm745, %v1194, %v1195
        %v1197 = vrot.slane %v1096, 2
        %v1198 = vrot.slane %v1098, 2
        %v1199 = vsel %vm745, %v1197, %v1198
        %v1200 = vrot.slane %v1101, 2
        %v1201 = vrot.slane %v1103, 2
        %v1202 = vsel %vm745, %v1200, %v1201
        %v1203 = vrot.slane %v1106, 2
        %v1204 = vrot.slane %v1108, 2
        %v1205 = vsel %vm745, %v1203, %v1204
        %1206 = vrot.lane.b32.xlu0 %v1184, 64
        %v1207 = vpop.permute.xlu0 %1206
        %1208 = vrot.lane.b32.xlu0 %v1187, 64
        %v1209 = vpop.permute.xlu0 %1208
        %1210 = vrot.lane.b32.xlu0 %v1190, 64
        %v1211 = vpop.permute.xlu0 %1210
        %1212 = vrot.lane.b32.xlu0 %v1193, 64
        %v1213 = vpop.permute.xlu0 %1212
        %1214 = vrot.lane.b32.xlu0 %v1196, 64
        %v1215 = vpop.permute.xlu0 %1214
        %1216 = vrot.lane.b32.xlu0 %v1199, 64
        %v1217 = vpop.permute.xlu0 %1216
        %1218 = vrot.lane.b32.xlu0 %v1202, 64
        %v1219 = vpop.permute.xlu0 %1218
        %1220 = vrot.lane.b32.xlu0 %v1205, 64
        %v1221 = vpop.permute.xlu0 %1220
        %v1230 = vadd.f32 %v1174, %v1207
        %v1231 = vadd.f32 %v1175, %v1209
        %v1232 = vadd.f32 %v1176, %v1211
        %v1233 = vadd.f32 %v1177, %v1213
        %v1234 = vadd.f32 %v1178, %v1215
        %v1235 = vadd.f32 %v1179, %v1217
        %v1236 = vadd.f32 %v1180, %v1219
        %v1237 = vadd.f32 %v1181, %v1221
        %v1238 = vadd.f32 %v794, %v1230
        %v1239 = vadd.f32 %v795, %v1231
        %v1240 = vadd.f32 %v796, %v1232
        %v1241 = vadd.f32 %v797, %v1233
        %v1242 = vadd.f32 %v798, %v1234
        %v1243 = vadd.f32 %v799, %v1235
        %v1244 = vadd.f32 %v800, %v1236
        %v1245 = vadd.f32 %v801, %v1237
        %s1246 = scalar_lea.vmem [#allocation2], 32
        %v1247 = vld [vmem:[%s1246] sm:$0xff]
        %v1248 = vld [vmem:[%s1246 + $0x8] sm:$0xff]
        %v1249 = vld [vmem:[%s1246 + $0x10] sm:$0xff]
        %v1250 = vld [vmem:[%s1246 + $0x18] sm:$0xff]
        %v1251 = vld [vmem:[%s1246 + $0x20] sm:$0xff]
        %v1252 = vld [vmem:[%s1246 + $0x28] sm:$0xff]
        %v1253 = vld [vmem:[%s1246 + $0x30] sm:$0xff]
        %v1254 = vld [vmem:[%s1246 + $0x38] sm:$0xff]
        %v1255 = vld [vmem:[%s1246 + $0x40] sm:$0xff]
        %v1256 = vld [vmem:[%s1246 + $0x48] sm:$0xff]
        %v1257 = vld [vmem:[%s1246 + $0x50] sm:$0xff]
        %v1258 = vld [vmem:[%s1246 + $0x58] sm:$0xff]
        %v1259 = vld [vmem:[%s1246 + $0x60] sm:$0xff]
        %v1260 = vld [vmem:[%s1246 + $0x68] sm:$0xff]
        %v1261 = vld [vmem:[%s1246 + $0x70] sm:$0xff]
        %v1262 = vld [vmem:[%s1246 + $0x78] sm:$0xff]
        %s1263 = scalar_lea.vmem %s1, 192
        %v1264 = vld [vmem:[%s1263] sm:$0xf]
        %v1265 = vld [vmem:[%s1263 + $0x4] sm:$0xf]
        %v1266 = vld [vmem:[%s1263 + $0x8] sm:$0xf]
        %v1267 = vld [vmem:[%s1263 + $0xc] sm:$0xf]
        %v1268 = vld [vmem:[%s1263 + $0x10] sm:$0xf]
        %v1269 = vld [vmem:[%s1263 + $0x14] sm:$0xf]
        %v1270 = vld [vmem:[%s1263 + $0x18] sm:$0xf]
        %v1271 = vld [vmem:[%s1263 + $0x1c] sm:$0xf]
        %v1272 = vld [vmem:[%s1263 + $0x20] sm:$0xf]
        %v1273 = vld [vmem:[%s1263 + $0x24] sm:$0xf]
        %v1274 = vld [vmem:[%s1263 + $0x28] sm:$0xf]
        %v1275 = vld [vmem:[%s1263 + $0x2c] sm:$0xf]
        %v1276 = vld [vmem:[%s1263 + $0x30] sm:$0xf]
        %v1277 = vld [vmem:[%s1263 + $0x34] sm:$0xf]
        %v1278 = vld [vmem:[%s1263 + $0x38] sm:$0xf]
        %v1279 = vld [vmem:[%s1263 + $0x3c] sm:$0xf]
        %v1280 = vld [vmem:[%s1263 + $0x40] sm:$0xf]
        %v1281 = vld [vmem:[%s1263 + $0x44] sm:$0xf]
        %v1282 = vld [vmem:[%s1263 + $0x48] sm:$0xf]
        %v1283 = vld [vmem:[%s1263 + $0x4c] sm:$0xf]
        %v1284 = vld [vmem:[%s1263 + $0x50] sm:$0xf]
        %v1285 = vld [vmem:[%s1263 + $0x54] sm:$0xf]
        %v1286 = vld [vmem:[%s1263 + $0x58] sm:$0xf]
        %v1287 = vld [vmem:[%s1263 + $0x5c] sm:$0xf]
        %v1304 = vunpack.c.l.b16 %v1247
        %v1305 = vunpack.c.h.b16 %v1247
        %v1306 = vunpack.c.l.b16 %v1248
        %v1307 = vunpack.c.h.b16 %v1248
        %v1308 = vunpack.c.l.b16 %v1249
        %v1309 = vunpack.c.h.b16 %v1249
        %v1310 = vunpack.c.l.b16 %v1250
        %v1311 = vunpack.c.h.b16 %v1250
        %v1312 = vunpack.c.l.b16 %v1251
        %v1313 = vunpack.c.h.b16 %v1251
        %v1314 = vunpack.c.l.b16 %v1252
        %v1315 = vunpack.c.h.b16 %v1252
        %v1316 = vunpack.c.l.b16 %v1253
        %v1317 = vunpack.c.h.b16 %v1253
        %v1318 = vunpack.c.l.b16 %v1254
        %v1319 = vunpack.c.h.b16 %v1254
        %v1320 = vunpack.c.l.b16 %v1255
        %v1321 = vunpack.c.h.b16 %v1255
        %v1322 = vunpack.c.l.b16 %v1256
        %v1323 = vunpack.c.h.b16 %v1256
        %v1324 = vunpack.c.l.b16 %v1257
        %v1325 = vunpack.c.h.b16 %v1257
        %v1326 = vunpack.c.l.b16 %v1258
        %v1327 = vunpack.c.h.b16 %v1258
        %v1328 = vunpack.c.l.b16 %v1259
        %v1329 = vunpack.c.h.b16 %v1259
        %v1330 = vunpack.c.l.b16 %v1260
        %v1331 = vunpack.c.h.b16 %v1260
        %v1332 = vunpack.c.l.b16 %v1261
        %v1333 = vunpack.c.h.b16 %v1261
        %v1334 = vunpack.c.l.b16 %v1262
        %v1335 = vunpack.c.h.b16 %v1262
        %v1336 = vpack.c.b16 %v1306, %v1304
        %v1337 = vpack.c.b16 %v1307, %v1305
        %v1338 = vpack.c.b16 %v1310, %v1308
        %v1339 = vpack.c.b16 %v1311, %v1309
        %v1340 = vpack.c.b16 %v1314, %v1312
        %v1341 = vpack.c.b16 %v1315, %v1313
        %v1342 = vpack.c.b16 %v1318, %v1316
        %v1343 = vpack.c.b16 %v1319, %v1317
        %v1344 = vpack.c.b16 %v1322, %v1320
        %v1345 = vpack.c.b16 %v1323, %v1321
        %v1346 = vpack.c.b16 %v1326, %v1324
        %v1347 = vpack.c.b16 %v1327, %v1325
        %v1348 = vpack.c.b16 %v1330, %v1328
        %v1349 = vpack.c.b16 %v1331, %v1329
        %v1350 = vpack.c.b16 %v1334, %v1332
        %v1351 = vpack.c.b16 %v1335, %v1333
        %v1384 = vunpack.c.l.b16 %v1264
        %v1385 = vunpack.c.l.b16 %v1265
        %v1386 = vunpack.c.l.b16 %v1266
        %v1387 = vunpack.c.l.b16 %v1267
        %v1388 = vunpack.c.l.b16 %v1268
        %v1389 = vunpack.c.l.b16 %v1269
        %v1390 = vunpack.c.l.b16 %v1270
        %v1391 = vunpack.c.l.b16 %v1271
        %v1392 = vunpack.c.l.b16 %v1272
        %v1393 = vunpack.c.l.b16 %v1273
        %v1394 = vunpack.c.l.b16 %v1274
        %v1395 = vunpack.c.l.b16 %v1275
        %v1396 = vunpack.c.l.b16 %v1276
        %v1397 = vunpack.c.l.b16 %v1277
        %v1398 = vunpack.c.l.b16 %v1278
        %v1399 = vunpack.c.l.b16 %v1279
        %v1400 = vunpack.c.l.b16 %v1280
        %v1401 = vunpack.c.l.b16 %v1281
        %v1402 = vunpack.c.l.b16 %v1282
        %v1403 = vunpack.c.l.b16 %v1283
        %v1404 = vunpack.c.l.b16 %v1284
        %v1405 = vunpack.c.l.b16 %v1285
        %v1406 = vunpack.c.l.b16 %v1286
        %v1407 = vunpack.c.l.b16 %v1287
        %v1408 = vpack.c.b16 %v1385, %v1384
        %v1409 = vpack.c.b16 %v1387, %v1386
        %v1410 = vpack.c.b16 %v1389, %v1388
        %v1411 = vpack.c.b16 %v1391, %v1390
        %v1412 = vpack.c.b16 %v1393, %v1392
        %v1413 = vpack.c.b16 %v1395, %v1394
        %v1414 = vpack.c.b16 %v1397, %v1396
        %v1415 = vpack.c.b16 %v1399, %v1398
        %v1416 = vpack.c.b16 %v1401, %v1400
        %v1417 = vpack.c.b16 %v1403, %v1402
        %v1418 = vpack.c.b16 %v1405, %v1404
        %v1419 = vpack.c.b16 %v1407, %v1406
        %v1433 = vsel %vm549, %v1337, 0
        %v1436 = vsel %vm549, %v1339, 0
        %v1439 = vsel %vm549, %v1341, 0
        %v1442 = vsel %vm549, %v1343, 0
        %v1445 = vsel %vm549, %v1345, 0
        %v1448 = vsel %vm549, %v1347, 0
        %v1451 = vsel %vm549, %v1349, 0
        %v1454 = vsel %vm549, %v1351, 0
        %1456 = vmatpush.bf16.msra.mxu0 %v1415
        %1457 = vmatpush.bf16.msra.mxu0 %v1414
        %1458 = vmatpush.bf16.msra.mxu0 %v1413
        %1459 = vmatpush.bf16.msra.mxu0 %v1412
        %1460 = vmatpush.bf16.msra.mxu0 %v1411
        %1461 = vmatpush.bf16.msra.mxu0 %v1410
        %1462 = vmatpush.bf16.msra.mxu0 %v1409
        %1463 = vmatpush.bf16.msra.mxu0 %v1408
        %1464 = vmatmul.bf16.gmra.mxu0 %v1336
        %v1465 = vpop.f32.mrf.mxu0
        %v1466 = vadd.f32 0.0, %v1465
        %v1467 = vpop.f32.mrf.mxu0
        %v1468 = vadd.f32 0.0, %v1467
        %1469 = vmatmul.bf16.gmra.mxu0 %v1338
        %v1470 = vpop.f32.mrf.mxu0
        %v1471 = vadd.f32 0.0, %v1470
        %v1472 = vpop.f32.mrf.mxu0
        %v1473 = vadd.f32 0.0, %v1472
        %1474 = vmatmul.bf16.gmra.mxu0 %v1340
        %v1475 = vpop.f32.mrf.mxu0
        %v1476 = vadd.f32 0.0, %v1475
        %v1477 = vpop.f32.mrf.mxu0
        %v1478 = vadd.f32 0.0, %v1477
        %1479 = vmatmul.bf16.gmra.mxu0 %v1342
        %v1480 = vpop.f32.mrf.mxu0
        %v1481 = vadd.f32 0.0, %v1480
        %v1482 = vpop.f32.mrf.mxu0
        %v1483 = vadd.f32 0.0, %v1482
        %1484 = vmatmul.bf16.gmra.mxu0 %v1344
        %v1485 = vpop.f32.mrf.mxu0
        %v1486 = vadd.f32 0.0, %v1485
        %v1487 = vpop.f32.mrf.mxu0
        %v1488 = vadd.f32 0.0, %v1487
        %1489 = vmatmul.bf16.gmra.mxu0 %v1346
        %v1490 = vpop.f32.mrf.mxu0
        %v1491 = vadd.f32 0.0, %v1490
        %v1492 = vpop.f32.mrf.mxu0
        %v1493 = vadd.f32 0.0, %v1492
        %1494 = vmatmul.bf16.gmra.mxu0 %v1348
        %v1495 = vpop.f32.mrf.mxu0
        %v1496 = vadd.f32 0.0, %v1495
        %v1497 = vpop.f32.mrf.mxu0
        %v1498 = vadd.f32 0.0, %v1497
        %1499 = vmatmul.bf16.gmra.mxu0 %v1350
        %v1500 = vpop.f32.mrf.mxu0
        %v1501 = vadd.f32 0.0, %v1500
        %v1502 = vpop.f32.mrf.mxu0
        %v1503 = vadd.f32 0.0, %v1502
        %1504 = vdwg.mxu0
        %1505 = vmatpush.bf16.msra.mxu0 0
        %1506 = vmatpush.bf16.msra.mxu0 0
        %1507 = vmatpush.bf16.msra.mxu0 0
        %1508 = vmatpush.bf16.msra.mxu0 0
        %1509 = vmatpush.bf16.msra.mxu0 %v1419
        %1510 = vmatpush.bf16.msra.mxu0 %v1418
        %1511 = vmatpush.bf16.msra.mxu0 %v1417
        %1512 = vmatpush.bf16.msra.mxu0 %v1416
        %1513 = vmatmul.bf16.gmra.mxu0 %v1433
        %v1514 = vpop.f32.mrf.mxu0
        %v1515 = vadd.f32 %v1466, %v1514
        %v1516 = vpop.f32.mrf.mxu0
        %v1517 = vadd.f32 %v1468, %v1516
        %1518 = vmatmul.bf16.gmra.mxu0 %v1436
        %v1519 = vpop.f32.mrf.mxu0
        %v1520 = vadd.f32 %v1471, %v1519
        %v1521 = vpop.f32.mrf.mxu0
        %v1522 = vadd.f32 %v1473, %v1521
        %1523 = vmatmul.bf16.gmra.mxu0 %v1439
        %v1524 = vpop.f32.mrf.mxu0
        %v1525 = vadd.f32 %v1476, %v1524
        %v1526 = vpop.f32.mrf.mxu0
        %v1527 = vadd.f32 %v1478, %v1526
        %1528 = vmatmul.bf16.gmra.mxu0 %v1442
        %v1529 = vpop.f32.mrf.mxu0
        %v1530 = vadd.f32 %v1481, %v1529
        %v1531 = vpop.f32.mrf.mxu0
        %v1532 = vadd.f32 %v1483, %v1531
        %1533 = vmatmul.bf16.gmra.mxu0 %v1445
        %v1534 = vpop.f32.mrf.mxu0
        %v1535 = vadd.f32 %v1486, %v1534
        %v1536 = vpop.f32.mrf.mxu0
        %v1537 = vadd.f32 %v1488, %v1536
        %1538 = vmatmul.bf16.gmra.mxu0 %v1448
        %v1539 = vpop.f32.mrf.mxu0
        %v1540 = vadd.f32 %v1491, %v1539
        %v1541 = vpop.f32.mrf.mxu0
        %v1542 = vadd.f32 %v1493, %v1541
        %1543 = vmatmul.bf16.gmra.mxu0 %v1451
        %v1544 = vpop.f32.mrf.mxu0
        %v1545 = vadd.f32 %v1496, %v1544
        %v1546 = vpop.f32.mrf.mxu0
        %v1547 = vadd.f32 %v1498, %v1546
        %1548 = vmatmul.bf16.gmra.mxu0 %v1454
        %v1549 = vpop.f32.mrf.mxu0
        %v1550 = vadd.f32 %v1501, %v1549
        %v1551 = vpop.f32.mrf.mxu0
        %v1552 = vadd.f32 %v1503, %v1551
        %1553 = vdwg.mxu0
        %v1570 = vrot.slane %v1515, 1
        %v1571 = vrot.slane %v1517, 1
        %v1572 = vsel %vm688, %v1570, %v1571
        %v1573 = vrot.slane %v1520, 1
        %v1574 = vrot.slane %v1522, 1
        %v1575 = vsel %vm688, %v1573, %v1574
        %v1576 = vrot.slane %v1525, 1
        %v1577 = vrot.slane %v1527, 1
        %v1578 = vsel %vm688, %v1576, %v1577
        %v1579 = vrot.slane %v1530, 1
        %v1580 = vrot.slane %v1532, 1
        %v1581 = vsel %vm688, %v1579, %v1580
        %v1582 = vrot.slane %v1535, 1
        %v1583 = vrot.slane %v1537, 1
        %v1584 = vsel %vm688, %v1582, %v1583
        %v1585 = vrot.slane %v1540, 1
        %v1586 = vrot.slane %v1542, 1
        %v1587 = vsel %vm688, %v1585, %v1586
        %v1588 = vrot.slane %v1545, 1
        %v1589 = vrot.slane %v1547, 1
        %v1590 = vsel %vm688, %v1588, %v1589
        %v1591 = vrot.slane %v1550, 1
        %v1592 = vrot.slane %v1552, 1
        %v1593 = vsel %vm688, %v1591, %v1592
        %1594 = vrot.lane.b32.xlu0 %v1572, 96
        %v1595 = vpop.permute.xlu0 %1594
        %1596 = vrot.lane.b32.xlu0 %v1575, 96
        %v1597 = vpop.permute.xlu0 %1596
        %1598 = vrot.lane.b32.xlu0 %v1578, 96
        %v1599 = vpop.permute.xlu0 %1598
        %1600 = vrot.lane.b32.xlu0 %v1581, 96
        %v1601 = vpop.permute.xlu0 %1600
        %1602 = vrot.lane.b32.xlu0 %v1584, 96
        %v1603 = vpop.permute.xlu0 %1602
        %1604 = vrot.lane.b32.xlu0 %v1587, 96
        %v1605 = vpop.permute.xlu0 %1604
        %1606 = vrot.lane.b32.xlu0 %v1590, 96
        %v1607 = vpop.permute.xlu0 %1606
        %1608 = vrot.lane.b32.xlu0 %v1593, 96
        %v1609 = vpop.permute.xlu0 %1608
        %v1618 = vadd.f32 %v1515, %v1595
        %v1619 = vadd.f32 %v1520, %v1597
        %v1620 = vadd.f32 %v1525, %v1599
        %v1621 = vadd.f32 %v1530, %v1601
        %v1622 = vadd.f32 %v1535, %v1603
        %v1623 = vadd.f32 %v1540, %v1605
        %v1624 = vadd.f32 %v1545, %v1607
        %v1625 = vadd.f32 %v1550, %v1609
        %v1626 = vrot.slane %v1515, 2
        %v1627 = vrot.slane %v1517, 2
        %v1628 = vsel %vm745, %v1626, %v1627
        %v1629 = vrot.slane %v1520, 2
        %v1630 = vrot.slane %v1522, 2
        %v1631 = vsel %vm745, %v1629, %v1630
        %v1632 = vrot.slane %v1525, 2
        %v1633 = vrot.slane %v1527, 2
        %v1634 = vsel %vm745, %v1632, %v1633
        %v1635 = vrot.slane %v1530, 2
        %v1636 = vrot.slane %v1532, 2
        %v1637 = vsel %vm745, %v1635, %v1636
        %v1638 = vrot.slane %v1535, 2
        %v1639 = vrot.slane %v1537, 2
        %v1640 = vsel %vm745, %v1638, %v1639
        %v1641 = vrot.slane %v1540, 2
        %v1642 = vrot.slane %v1542, 2
        %v1643 = vsel %vm745, %v1641, %v1642
        %v1644 = vrot.slane %v1545, 2
        %v1645 = vrot.slane %v1547, 2
        %v1646 = vsel %vm745, %v1644, %v1645
        %v1647 = vrot.slane %v1550, 2
        %v1648 = vrot.slane %v1552, 2
        %v1649 = vsel %vm745, %v1647, %v1648
        %1650 = vrot.lane.b32.xlu0 %v1628, 64
        %v1651 = vpop.permute.xlu0 %1650
        %1652 = vrot.lane.b32.xlu0 %v1631, 64
        %v1653 = vpop.permute.xlu0 %1652
        %1654 = vrot.lane.b32.xlu0 %v1634, 64
        %v1655 = vpop.permute.xlu0 %1654
        %1656 = vrot.lane.b32.xlu0 %v1637, 64
        %v1657 = vpop.permute.xlu0 %1656
        %1658 = vrot.lane.b32.xlu0 %v1640, 64
        %v1659 = vpop.permute.xlu0 %1658
        %1660 = vrot.lane.b32.xlu0 %v1643, 64
        %v1661 = vpop.permute.xlu0 %1660
        %1662 = vrot.lane.b32.xlu0 %v1646, 64
        %v1663 = vpop.permute.xlu0 %1662
        %1664 = vrot.lane.b32.xlu0 %v1649, 64
        %v1665 = vpop.permute.xlu0 %1664
        %v1674 = vadd.f32 %v1618, %v1651
        %v1675 = vadd.f32 %v1619, %v1653
        %v1676 = vadd.f32 %v1620, %v1655
        %v1677 = vadd.f32 %v1621, %v1657
        %v1678 = vadd.f32 %v1622, %v1659
        %v1679 = vadd.f32 %v1623, %v1661
        %v1680 = vadd.f32 %v1624, %v1663
        %v1681 = vadd.f32 %v1625, %v1665
        %v1682 = vadd.f32 %v1238, %v1674
        %v1683 = vadd.f32 %v1239, %v1675
        %v1684 = vadd.f32 %v1240, %v1676
        %v1685 = vadd.f32 %v1241, %v1677
        %v1686 = vadd.f32 %v1242, %v1678
        %v1687 = vadd.f32 %v1243, %v1679
        %v1688 = vadd.f32 %v1244, %v1680
        %v1689 = vadd.f32 %v1245, %v1681
        %v1690 = vld [vmem:[%s2] sm:$0x1]
        %v1692 = vperm.slane %v1690, 0
        %v1694 = vadd.f32 %v1682, %v1692
        %v1695 = vadd.f32 %v1683, %v1692
        %v1696 = vadd.f32 %v1684, %v1692
        %v1697 = vadd.f32 %v1685, %v1692
        %v1698 = vadd.f32 %v1686, %v1692
        %v1699 = vadd.f32 %v1687, %v1692
        %v1700 = vadd.f32 %v1688, %v1692
        %v1701 = vadd.f32 %v1689, %v1692
        %v1702 = vsel %vm301, %v1694, 0.0
        %1703 = vadd.xlane.f32.xlu0 %v1702
        %v1704 = vpop.xlane.xlu0 %1703
        %v1705 = vsel %vm301, %v1695, 0.0
        %1706 = vadd.xlane.f32.xlu0 %v1705
        %v1707 = vpop.xlane.xlu0 %1706
        %v1708 = vsel %vm301, %v1696, 0.0
        %1709 = vadd.xlane.f32.xlu0 %v1708
        %v1710 = vpop.xlane.xlu0 %1709
        %v1711 = vsel %vm301, %v1697, 0.0
        %1712 = vadd.xlane.f32.xlu0 %v1711
        %v1713 = vpop.xlane.xlu0 %1712
        %v1714 = vsel %vm301, %v1698, 0.0
        %1715 = vadd.xlane.f32.xlu0 %v1714
        %v1716 = vpop.xlane.xlu0 %1715
        %v1717 = vsel %vm301, %v1699, 0.0
        %1718 = vadd.xlane.f32.xlu0 %v1717
        %v1719 = vpop.xlane.xlu0 %1718
        %v1720 = vsel %vm301, %v1700, 0.0
        %1721 = vadd.xlane.f32.xlu0 %v1720
        %v1722 = vpop.xlane.xlu0 %1721
        %v1723 = vsel %vm301, %v1701, 0.0
        %1724 = vadd.xlane.f32.xlu0 %v1723
        %v1725 = vpop.xlane.xlu0 %1724
        %v1726 = vrcp.pop 32.0
        %v1727 = vmul.f32 32.0, %v1726
        %v1728 = vsub.f32 1.0, %v1727
        %v1729 = vmul.f32 %v1726, %v1728
        %v1730 = vadd.f32 %v1726, %v1729
        %vm1731 = vweird.f32 %v1726
        %v1732 = vsel %vm1731, %v1726, %v1730
        %v1733 = vmul.f32 %v1704, %v1732
        %v1734 = vmul.f32 %v1707, %v1732
        %v1735 = vmul.f32 %v1710, %v1732
        %v1736 = vmul.f32 %v1713, %v1732
        %v1737 = vmul.f32 %v1716, %v1732
        %v1738 = vmul.f32 %v1719, %v1732
        %v1739 = vmul.f32 %v1722, %v1732
        %v1740 = vmul.f32 %v1725, %v1732
        %v1741 = vsub.f32 %v1694, %v1733
        %v1742 = vsub.f32 %v1695, %v1734
        %v1743 = vsub.f32 %v1696, %v1735
        %v1744 = vsub.f32 %v1697, %v1736
        %v1745 = vsub.f32 %v1698, %v1737
        %v1746 = vsub.f32 %v1699, %v1738
        %v1747 = vsub.f32 %v1700, %v1739
        %v1748 = vsub.f32 %v1701, %v1740
        %v1749 = vmul.f32 %v1741, %v1741
        %v1750 = vmul.f32 %v1742, %v1742
        %v1751 = vmul.f32 %v1743, %v1743
        %v1752 = vmul.f32 %v1744, %v1744
        %v1753 = vmul.f32 %v1745, %v1745
        %v1754 = vmul.f32 %v1746, %v1746
        %v1755 = vmul.f32 %v1747, %v1747
        %v1756 = vmul.f32 %v1748, %v1748
        %v1757 = vsel %vm301, %v1749, 0.0
        %1758 = vadd.xlane.f32.xlu0 %v1757
        %v1759 = vpop.xlane.xlu0 %1758
        %v1760 = vsel %vm301, %v1750, 0.0
        %1761 = vadd.xlane.f32.xlu0 %v1760
        %v1762 = vpop.xlane.xlu0 %1761
        %v1763 = vsel %vm301, %v1751, 0.0
        %1764 = vadd.xlane.f32.xlu0 %v1763
        %v1765 = vpop.xlane.xlu0 %1764
        %v1766 = vsel %vm301, %v1752, 0.0
        %1767 = vadd.xlane.f32.xlu0 %v1766
        %v1768 = vpop.xlane.xlu0 %1767
        %v1769 = vsel %vm301, %v1753, 0.0
        %1770 = vadd.xlane.f32.xlu0 %v1769
        %v1771 = vpop.xlane.xlu0 %1770
        %v1772 = vsel %vm301, %v1754, 0.0
        %1773 = vadd.xlane.f32.xlu0 %v1772
        %v1774 = vpop.xlane.xlu0 %1773
        %v1775 = vsel %vm301, %v1755, 0.0
        %1776 = vadd.xlane.f32.xlu0 %v1775
        %v1777 = vpop.xlane.xlu0 %1776
        %v1778 = vsel %vm301, %v1756, 0.0
        %1779 = vadd.xlane.f32.xlu0 %v1778
        %v1780 = vpop.xlane.xlu0 %1779
        %v1781 = vmul.f32 %v1759, %v1732
        %v1782 = vmul.f32 %v1762, %v1732
        %v1783 = vmul.f32 %v1765, %v1732
        %v1784 = vmul.f32 %v1768, %v1732
        %v1785 = vmul.f32 %v1771, %v1732
        %v1786 = vmul.f32 %v1774, %v1732
        %v1787 = vmul.f32 %v1777, %v1732
        %v1788 = vmul.f32 %v1780, %v1732
        %v1789 = vadd.f32 %v1781, 1e-06
        %v1790 = vadd.f32 %v1782, 1e-06
        %v1791 = vadd.f32 %v1783, 1e-06
        %v1792 = vadd.f32 %v1784, 1e-06
        %v1793 = vadd.f32 %v1785, 1e-06
        %v1794 = vadd.f32 %v1786, 1e-06
        %v1795 = vadd.f32 %v1787, 1e-06
        %v1796 = vadd.f32 %v1788, 1e-06
        %v1797 = vrsqrt.pop %v1789
        %v1798 = vmul.f32 %v1797, %v1789
        %v1799 = vmul.f32 %v1798, %v1797
        %v1800 = vmul.f32 0.5, %v1799
        %v1801 = vsub.f32 1.5, %v1800
        %v1802 = vmul.f32 %v1797, %v1801
        %vm1803 = vweird.f32 %v1789
        %vm1804 = vweird.f32 %v1797
        %vm1805 = vmor %vm1803, %vm1804
        %v1806 = vsel %vm1805, %v1797, %v1802
        %v1807 = vrsqrt.pop %v1790
        %v1808 = vmul.f32 %v1807, %v1790
        %v1809 = vmul.f32 %v1808, %v1807
        %v1810 = vmul.f32 0.5, %v1809
        %v1811 = vsub.f32 1.5, %v1810
        %v1812 = vmul.f32 %v1807, %v1811
        %vm1813 = vweird.f32 %v1790
        %vm1814 = vweird.f32 %v1807
        %vm1815 = vmor %vm1813, %vm1814
        %v1816 = vsel %vm1815, %v1807, %v1812
        %v1817 = vrsqrt.pop %v1791
        %v1818 = vmul.f32 %v1817, %v1791
        %v1819 = vmul.f32 %v1818, %v1817
        %v1820 = vmul.f32 0.5, %v1819
        %v1821 = vsub.f32 1.5, %v1820
        %v1822 = vmul.f32 %v1817, %v1821
        %vm1823 = vweird.f32 %v1791
        %vm1824 = vweird.f32 %v1817
        %vm1825 = vmor %vm1823, %vm1824
        %v1826 = vsel %vm1825, %v1817, %v1822
        %v1827 = vrsqrt.pop %v1792
        %v1828 = vmul.f32 %v1827, %v1792
        %v1829 = vmul.f32 %v1828, %v1827
        %v1830 = vmul.f32 0.5, %v1829
        %v1831 = vsub.f32 1.5, %v1830
        %v1832 = vmul.f32 %v1827, %v1831
        %vm1833 = vweird.f32 %v1792
        %vm1834 = vweird.f32 %v1827
        %vm1835 = vmor %vm1833, %vm1834
        %v1836 = vsel %vm1835, %v1827, %v1832
        %v1837 = vrsqrt.pop %v1793
        %v1838 = vmul.f32 %v1837, %v1793
        %v1839 = vmul.f32 %v1838, %v1837
        %v1840 = vmul.f32 0.5, %v1839
        %v1841 = vsub.f32 1.5, %v1840
        %v1842 = vmul.f32 %v1837, %v1841
        %vm1843 = vweird.f32 %v1793
        %vm1844 = vweird.f32 %v1837
        %vm1845 = vmor %vm1843, %vm1844
        %v1846 = vsel %vm1845, %v1837, %v1842
        %v1847 = vrsqrt.pop %v1794
        %v1848 = vmul.f32 %v1847, %v1794
        %v1849 = vmul.f32 %v1848, %v1847
        %v1850 = vmul.f32 0.5, %v1849
        %v1851 = vsub.f32 1.5, %v1850
        %v1852 = vmul.f32 %v1847, %v1851
        %vm1853 = vweird.f32 %v1794
        %vm1854 = vweird.f32 %v1847
        %vm1855 = vmor %vm1853, %vm1854
        %v1856 = vsel %vm1855, %v1847, %v1852
        %v1857 = vrsqrt.pop %v1795
        %v1858 = vmul.f32 %v1857, %v1795
        %v1859 = vmul.f32 %v1858, %v1857
        %v1860 = vmul.f32 0.5, %v1859
        %v1861 = vsub.f32 1.5, %v1860
        %v1862 = vmul.f32 %v1857, %v1861
        %vm1863 = vweird.f32 %v1795
        %vm1864 = vweird.f32 %v1857
        %vm1865 = vmor %vm1863, %vm1864
        %v1866 = vsel %vm1865, %v1857, %v1862
        %v1867 = vrsqrt.pop %v1796
        %v1868 = vmul.f32 %v1867, %v1796
        %v1869 = vmul.f32 %v1868, %v1867
        %v1870 = vmul.f32 0.5, %v1869
        %v1871 = vsub.f32 1.5, %v1870
        %v1872 = vmul.f32 %v1867, %v1871
        %vm1873 = vweird.f32 %v1796
        %vm1874 = vweird.f32 %v1867
        %vm1875 = vmor %vm1873, %vm1874
        %v1876 = vsel %vm1875, %v1867, %v1872
        %v1877 = vmul.f32 %v1741, %v1806
        %v1878 = vmul.f32 %v1742, %v1816
        %v1879 = vmul.f32 %v1743, %v1826
        %v1880 = vmul.f32 %v1744, %v1836
        %v1881 = vmul.f32 %v1745, %v1846
        %v1882 = vmul.f32 %v1746, %v1856
        %v1883 = vmul.f32 %v1747, %v1866
        %v1884 = vmul.f32 %v1748, %v1876
        %v1885 = vld [vmem:[%s5] sm:$0x1]
        %v1887 = vperm.slane %v1885, 0
        %v1889 = vmul.f32 %v1877, %v1887
        %v1890 = vmul.f32 %v1878, %v1887
        %v1891 = vmul.f32 %v1879, %v1887
        %v1892 = vmul.f32 %v1880, %v1887
        %v1893 = vmul.f32 %v1881, %v1887
        %v1894 = vmul.f32 %v1882, %v1887
        %v1895 = vmul.f32 %v1883, %v1887
        %v1896 = vmul.f32 %v1884, %v1887
        %v1897 = vld [vmem:[%s6] sm:$0x1]
        %v1899 = vperm.slane %v1897, 0
        %v1901 = vadd.f32 %v1889, %v1899
        %v1902 = vadd.f32 %v1890, %v1899
        %v1903 = vadd.f32 %v1891, %v1899
        %v1904 = vadd.f32 %v1892, %v1899
        %v1905 = vadd.f32 %v1893, %v1899
        %v1906 = vadd.f32 %v1894, %v1899
        %v1907 = vadd.f32 %v1895, %v1899
        %v1908 = vadd.f32 %v1896, %v1899
        %v1909 = vmul.f32 %v1901, 0.5
        %v1910 = vmul.f32 %v1902, 0.5
        %v1911 = vmul.f32 %v1903, 0.5
        %v1912 = vmul.f32 %v1904, 0.5
        %v1913 = vmul.f32 %v1905, 0.5
        %v1914 = vmul.f32 %v1906, 0.5
        %v1915 = vmul.f32 %v1907, 0.5
        %v1916 = vmul.f32 %v1908, 0.5
        %v1917 = vmul.f32 %v1901, 0.70710677
        %v1918 = vmul.f32 %v1902, 0.70710677
        %v1919 = vmul.f32 %v1903, 0.70710677
        %v1920 = vmul.f32 %v1904, 0.70710677
        %v1921 = vmul.f32 %v1905, 0.70710677
        %v1922 = vmul.f32 %v1906, 0.70710677
        %v1923 = vmul.f32 %v1907, 0.70710677
        %v1924 = vmul.f32 %v1908, 0.70710677
        %v1925 = vand.u32 2147483647, %v1917
        %v1926 = vand.u32 2147483647, %v1918
        %v1927 = vand.u32 2147483647, %v1919
        %v1928 = vand.u32 2147483647, %v1920
        %v1929 = vand.u32 2147483647, %v1921
        %v1930 = vand.u32 2147483647, %v1922
        %v1931 = vand.u32 2147483647, %v1923
        %v1932 = vand.u32 2147483647, %v1924
        %v1933 = vmul.f32 %v1925, 0.3275911
        %v1934 = vmul.f32 %v1926, 0.3275911
        %v1935 = vmul.f32 %v1927, 0.3275911
        %v1936 = vmul.f32 %v1928, 0.3275911
        %v1937 = vmul.f32 %v1929, 0.3275911
        %v1938 = vmul.f32 %v1930, 0.3275911
        %v1939 = vmul.f32 %v1931, 0.3275911
        %v1940 = vmul.f32 %v1932, 0.3275911
        %v1941 = vadd.f32 %v1933, 1.0
        %v1942 = vadd.f32 %v1934, 1.0
        %v1943 = vadd.f32 %v1935, 1.0
        %v1944 = vadd.f32 %v1936, 1.0
        %v1945 = vadd.f32 %v1937, 1.0
        %v1946 = vadd.f32 %v1938, 1.0
        %v1947 = vadd.f32 %v1939, 1.0
        %v1948 = vadd.f32 %v1940, 1.0
        %v1949 = vrcp.pop %v1941
        %v1950 = vmul.f32 %v1941, %v1949
        %v1951 = vsub.f32 1.0, %v1950
        %v1952 = vmul.f32 %v1949, %v1951
        %v1953 = vadd.f32 %v1949, %v1952
        %vm1954 = vweird.f32 %v1941
        %vm1955 = vweird.f32 %v1949
        %vm1956 = vmor %vm1954, %vm1955
        %v1957 = vsel %vm1956, %v1949, %v1953
        %v1958 = vand.u32 2147483647, %v1941
        %vm1959 = vcmp.eq.f32.partialorder %v1958, 8.507059e+37
        %v1960 = vand.u32 %v1941, 2147483648
        %v1961 = vor.u32 1.1754944e-38, %v1960
        %v1962 = vsel %vm1959, %v1961, %v1957
        %v1963 = vmul.f32 1.0, %v1962
        %v1964 = vrcp.pop %v1942
        %v1965 = vmul.f32 %v1942, %v1964
        %v1966 = vsub.f32 1.0, %v1965
        %v1967 = vmul.f32 %v1964, %v1966
        %v1968 = vadd.f32 %v1964, %v1967
        %vm1969 = vweird.f32 %v1942
        %vm1970 = vweird.f32 %v1964
        %vm1971 = vmor %vm1969, %vm1970
        %v1972 = vsel %vm1971, %v1964, %v1968
        %v1973 = vand.u32 2147483647, %v1942
        %vm1974 = vcmp.eq.f32.partialorder %v1973, 8.507059e+37
        %v1975 = vand.u32 %v1942, 2147483648
        %v1976 = vor.u32 1.1754944e-38, %v1975
        %v1977 = vsel %vm1974, %v1976, %v1972
        %v1978 = vmul.f32 1.0, %v1977
        %v1979 = vrcp.pop %v1943
        %v1980 = vmul.f32 %v1943, %v1979
        %v1981 = vsub.f32 1.0, %v1980
        %v1982 = vmul.f32 %v1979, %v1981
        %v1983 = vadd.f32 %v1979, %v1982
        %vm1984 = vweird.f32 %v1943
        %vm1985 = vweird.f32 %v1979
        %vm1986 = vmor %vm1984, %vm1985
        %v1987 = vsel %vm1986, %v1979, %v1983
        %v1988 = vand.u32 2147483647, %v1943
        %vm1989 = vcmp.eq.f32.partialorder %v1988, 8.507059e+37
        %v1990 = vand.u32 %v1943, 2147483648
        %v1991 = vor.u32 1.1754944e-38, %v1990
        %v1992 = vsel %vm1989, %v1991, %v1987
        %v1993 = vmul.f32 1.0, %v1992
        %v1994 = vrcp.pop %v1944
        %v1995 = vmul.f32 %v1944, %v1994
        %v1996 = vsub.f32 1.0, %v1995
        %v1997 = vmul.f32 %v1994, %v1996
        %v1998 = vadd.f32 %v1994, %v1997
        %vm1999 = vweird.f32 %v1944
        %vm2000 = vweird.f32 %v1994
        %vm2001 = vmor %vm1999, %vm2000
        %v2002 = vsel %vm2001, %v1994, %v1998
        %v2003 = vand.u32 2147483647, %v1944
        %vm2004 = vcmp.eq.f32.partialorder %v2003, 8.507059e+37
        %v2005 = vand.u32 %v1944, 2147483648
        %v2006 = vor.u32 1.1754944e-38, %v2005
        %v2007 = vsel %vm2004, %v2006, %v2002
        %v2008 = vmul.f32 1.0, %v2007
        %v2009 = vrcp.pop %v1945
        %v2010 = vmul.f32 %v1945, %v2009
        %v2011 = vsub.f32 1.0, %v2010
        %v2012 = vmul.f32 %v2009, %v2011
        %v2013 = vadd.f32 %v2009, %v2012
        %vm2014 = vweird.f32 %v1945
        %vm2015 = vweird.f32 %v2009
        %vm2016 = vmor %vm2014, %vm2015
        %v2017 = vsel %vm2016, %v2009, %v2013
        %v2018 = vand.u32 2147483647, %v1945
        %vm2019 = vcmp.eq.f32.partialorder %v2018, 8.507059e+37
        %v2020 = vand.u32 %v1945, 2147483648
        %v2021 = vor.u32 1.1754944e-38, %v2020
        %v2022 = vsel %vm2019, %v2021, %v2017
        %v2023 = vmul.f32 1.0, %v2022
        %v2024 = vrcp.pop %v1946
        %v2025 = vmul.f32 %v1946, %v2024
        %v2026 = vsub.f32 1.0, %v2025
        %v2027 = vmul.f32 %v2024, %v2026
        %v2028 = vadd.f32 %v2024, %v2027
        %vm2029 = vweird.f32 %v1946
        %vm2030 = vweird.f32 %v2024
        %vm2031 = vmor %vm2029, %vm2030
        %v2032 = vsel %vm2031, %v2024, %v2028
        %v2033 = vand.u32 2147483647, %v1946
        %vm2034 = vcmp.eq.f32.partialorder %v2033, 8.507059e+37
        %v2035 = vand.u32 %v1946, 2147483648
        %v2036 = vor.u32 1.1754944e-38, %v2035
        %v2037 = vsel %vm2034, %v2036, %v2032
        %v2038 = vmul.f32 1.0, %v2037
        %v2039 = vrcp.pop %v1947
        %v2040 = vmul.f32 %v1947, %v2039
        %v2041 = vsub.f32 1.0, %v2040
        %v2042 = vmul.f32 %v2039, %v2041
        %v2043 = vadd.f32 %v2039, %v2042
        %vm2044 = vweird.f32 %v1947
        %vm2045 = vweird.f32 %v2039
        %vm2046 = vmor %vm2044, %vm2045
        %v2047 = vsel %vm2046, %v2039, %v2043
        %v2048 = vand.u32 2147483647, %v1947
        %vm2049 = vcmp.eq.f32.partialorder %v2048, 8.507059e+37
        %v2050 = vand.u32 %v1947, 2147483648
        %v2051 = vor.u32 1.1754944e-38, %v2050
        %v2052 = vsel %vm2049, %v2051, %v2047
        %v2053 = vmul.f32 1.0, %v2052
        %v2054 = vrcp.pop %v1948
        %v2055 = vmul.f32 %v1948, %v2054
        %v2056 = vsub.f32 1.0, %v2055
        %v2057 = vmul.f32 %v2054, %v2056
        %v2058 = vadd.f32 %v2054, %v2057
        %vm2059 = vweird.f32 %v1948
        %vm2060 = vweird.f32 %v2054
        %vm2061 = vmor %vm2059, %vm2060
        %v2062 = vsel %vm2061, %v2054, %v2058
        %v2063 = vand.u32 2147483647, %v1948
        %vm2064 = vcmp.eq.f32.partialorder %v2063, 8.507059e+37
        %v2065 = vand.u32 %v1948, 2147483648
        %v2066 = vor.u32 1.1754944e-38, %v2065
        %v2067 = vsel %vm2064, %v2066, %v2062
        %v2068 = vmul.f32 1.0, %v2067
        %v2069 = vmul.f32 %v1963, 1.0614054
        %v2070 = vmul.f32 %v1978, 1.0614054
        %v2071 = vmul.f32 %v1993, 1.0614054
        %v2072 = vmul.f32 %v2008, 1.0614054
        %v2073 = vmul.f32 %v2023, 1.0614054
        %v2074 = vmul.f32 %v2038, 1.0614054
        %v2075 = vmul.f32 %v2053, 1.0614054
        %v2076 = vmul.f32 %v2068, 1.0614054
        %v2077 = vadd.f32 %v2069, -1.4531521
        %v2078 = vadd.f32 %v2070, -1.4531521
        %v2079 = vadd.f32 %v2071, -1.4531521
        %v2080 = vadd.f32 %v2072, -1.4531521
        %v2081 = vadd.f32 %v2073, -1.4531521
        %v2082 = vadd.f32 %v2074, -1.4531521
        %v2083 = vadd.f32 %v2075, -1.4531521
        %v2084 = vadd.f32 %v2076, -1.4531521
        %v2085 = vmul.f32 %v2077, %v1963
        %v2086 = vmul.f32 %v2078, %v1978
        %v2087 = vmul.f32 %v2079, %v1993
        %v2088 = vmul.f32 %v2080, %v2008
        %v2089 = vmul.f32 %v2081, %v2023
        %v2090 = vmul.f32 %v2082, %v2038
        %v2091 = vmul.f32 %v2083, %v2053
        %v2092 = vmul.f32 %v2084, %v2068
        %v2093 = vadd.f32 %v2085, 1.4214138
        %v2094 = vadd.f32 %v2086, 1.4214138
        %v2095 = vadd.f32 %v2087, 1.4214138
        %v2096 = vadd.f32 %v2088, 1.4214138
        %v2097 = vadd.f32 %v2089, 1.4214138
        %v2098 = vadd.f32 %v2090, 1.4214138
        %v2099 = vadd.f32 %v2091, 1.4214138
        %v2100 = vadd.f32 %v2092, 1.4214138
        %v2101 = vmul.f32 %v2093, %v1963
        %v2102 = vmul.f32 %v2094, %v1978
        %v2103 = vmul.f32 %v2095, %v1993
        %v2104 = vmul.f32 %v2096, %v2008
        %v2105 = vmul.f32 %v2097, %v2023
        %v2106 = vmul.f32 %v2098, %v2038
        %v2107 = vmul.f32 %v2099, %v2053
        %v2108 = vmul.f32 %v2100, %v2068
        %v2109 = vadd.f32 %v2101, -0.28449672
        %v2110 = vadd.f32 %v2102, -0.28449672
        %v2111 = vadd.f32 %v2103, -0.28449672
        %v2112 = vadd.f32 %v2104, -0.28449672
        %v2113 = vadd.f32 %v2105, -0.28449672
        %v2114 = vadd.f32 %v2106, -0.28449672
        %v2115 = vadd.f32 %v2107, -0.28449672
        %v2116 = vadd.f32 %v2108, -0.28449672
        %v2117 = vmul.f32 %v2109, %v1963
        %v2118 = vmul.f32 %v2110, %v1978
        %v2119 = vmul.f32 %v2111, %v1993
        %v2120 = vmul.f32 %v2112, %v2008
        %v2121 = vmul.f32 %v2113, %v2023
        %v2122 = vmul.f32 %v2114, %v2038
        %v2123 = vmul.f32 %v2115, %v2053
        %v2124 = vmul.f32 %v2116, %v2068
        %v2125 = vadd.f32 %v2117, 0.2548296
        %v2126 = vadd.f32 %v2118, 0.2548296
        %v2127 = vadd.f32 %v2119, 0.2548296
        %v2128 = vadd.f32 %v2120, 0.2548296
        %v2129 = vadd.f32 %v2121, 0.2548296
        %v2130 = vadd.f32 %v2122, 0.2548296
        %v2131 = vadd.f32 %v2123, 0.2548296
        %v2132 = vadd.f32 %v2124, 0.2548296
        %v2133 = vmul.f32 %v2125, %v1963
        %v2134 = vmul.f32 %v2126, %v1978
        %v2135 = vmul.f32 %v2127, %v1993
        %v2136 = vmul.f32 %v2128, %v2008
        %v2137 = vmul.f32 %v2129, %v2023
        %v2138 = vmul.f32 %v2130, %v2038
        %v2139 = vmul.f32 %v2131, %v2053
        %v2140 = vmul.f32 %v2132, %v2068
        %v2141 = vsub.f32 0.0, %v1925
        %v2142 = vsub.f32 0.0, %v1926
        %v2143 = vsub.f32 0.0, %v1927
        %v2144 = vsub.f32 0.0, %v1928
        %v2145 = vsub.f32 0.0, %v1929
        %v2146 = vsub.f32 0.0, %v1930
        %v2147 = vsub.f32 0.0, %v1931
        %v2148 = vsub.f32 0.0, %v1932
        %v2149 = vmul.f32 %v2141, %v1925
        %v2150 = vmul.f32 %v2142, %v1926
        %v2151 = vmul.f32 %v2143, %v1927
        %v2152 = vmul.f32 %v2144, %v1928
        %v2153 = vmul.f32 %v2145, %v1929
        %v2154 = vmul.f32 %v2146, %v1930
        %v2155 = vmul.f32 %v2147, %v1931
        %v2156 = vmul.f32 %v2148, %v1932
        %v2157 = vmul.f32 %v2149, 1.442695
        %v2158 = vpow.pop %v2157
        %v2159 = vmul.f32 %v2150, 1.442695
        %v2160 = vpow.pop %v2159
        %v2161 = vmul.f32 %v2151, 1.442695
        %v2162 = vpow.pop %v2161
        %v2163 = vmul.f32 %v2152, 1.442695
        %v2164 = vpow.pop %v2163
        %v2165 = vmul.f32 %v2153, 1.442695
        %v2166 = vpow.pop %v2165
        %v2167 = vmul.f32 %v2154, 1.442695
        %v2168 = vpow.pop %v2167
        %v2169 = vmul.f32 %v2155, 1.442695
        %v2170 = vpow.pop %v2169
        %v2171 = vmul.f32 %v2156, 1.442695
        %v2172 = vpow.pop %v2171
        %v2173 = vmul.f32 %v2133, %v2158
        %v2174 = vmul.f32 %v2134, %v2160
        %v2175 = vmul.f32 %v2135, %v2162
        %v2176 = vmul.f32 %v2136, %v2164
        %v2177 = vmul.f32 %v2137, %v2166
        %v2178 = vmul.f32 %v2138, %v2168
        %v2179 = vmul.f32 %v2139, %v2170
        %v2180 = vmul.f32 %v2140, %v2172
        %v2181 = vsub.f32 1.0, %v2173
        %v2182 = vsub.f32 1.0, %v2174
        %v2183 = vsub.f32 1.0, %v2175
        %v2184 = vsub.f32 1.0, %v2176
        %v2185 = vsub.f32 1.0, %v2177
        %v2186 = vsub.f32 1.0, %v2178
        %v2187 = vsub.f32 1.0, %v2179
        %v2188 = vsub.f32 1.0, %v2180
        %vm2189 = vcmp.lt.f32.partialorder %v1917, 0.0
        %vm2190 = vcmp.lt.f32.partialorder %v1918, 0.0
        %vm2191 = vcmp.lt.f32.partialorder %v1919, 0.0
        %vm2192 = vcmp.lt.f32.partialorder %v1920, 0.0
        %vm2193 = vcmp.lt.f32.partialorder %v1921, 0.0
        %vm2194 = vcmp.lt.f32.partialorder %v1922, 0.0
        %vm2195 = vcmp.lt.f32.partialorder %v1923, 0.0
        %vm2196 = vcmp.lt.f32.partialorder %v1924, 0.0
        %v2197 = vsub.f32 0.0, %v2181
        %v2198 = vsub.f32 0.0, %v2182
        %v2199 = vsub.f32 0.0, %v2183
        %v2200 = vsub.f32 0.0, %v2184
        %v2201 = vsub.f32 0.0, %v2185
        %v2202 = vsub.f32 0.0, %v2186
        %v2203 = vsub.f32 0.0, %v2187
        %v2204 = vsub.f32 0.0, %v2188
        %v2205 = vsel %vm2189, %v2197, %v2181
        %v2206 = vsel %vm2190, %v2198, %v2182
        %v2207 = vsel %vm2191, %v2199, %v2183
        %v2208 = vsel %vm2192, %v2200, %v2184
        %v2209 = vsel %vm2193, %v2201, %v2185
        %v2210 = vsel %vm2194, %v2202, %v2186
        %v2211 = vsel %vm2195, %v2203, %v2187
        %v2212 = vsel %vm2196, %v2204, %v2188
        %v2213 = vadd.f32 %v2205, 1.0
        %v2214 = vadd.f32 %v2206, 1.0
        %v2215 = vadd.f32 %v2207, 1.0
        %v2216 = vadd.f32 %v2208, 1.0
        %v2217 = vadd.f32 %v2209, 1.0
        %v2218 = vadd.f32 %v2210, 1.0
        %v2219 = vadd.f32 %v2211, 1.0
        %v2220 = vadd.f32 %v2212, 1.0
        %v2221 = vmul.f32 %v1909, %v2213
        %v2222 = vmul.f32 %v1910, %v2214
        %v2223 = vmul.f32 %v1911, %v2215
        %v2224 = vmul.f32 %v1912, %v2216
        %v2225 = vmul.f32 %v1913, %v2217
        %v2226 = vmul.f32 %v1914, %v2218
        %v2227 = vmul.f32 %v1915, %v2219
        %v2228 = vmul.f32 %v1916, %v2220
        %s2229 = scalar_lea.vmem [#allocation3], 16
        %2230 = vst.msk [vmem:[%s2229 + $0x1] sm:$0xff] %vm301, %v2221
        %2231 = vst.msk [vmem:[%s2229 + $0x11] sm:$0xff] %vm301, %v2222
        %2232 = vst.msk [vmem:[%s2229 + $0x21] sm:$0xff] %vm301, %v2223
        %2233 = vst.msk [vmem:[%s2229 + $0x31] sm:$0xff] %vm301, %v2224
        %2234 = vst.msk [vmem:[%s2229 + $0x41] sm:$0xff] %vm301, %v2225
        %2235 = vst.msk [vmem:[%s2229 + $0x51] sm:$0xff] %vm301, %v2226
        %2236 = vst.msk [vmem:[%s2229 + $0x61] sm:$0xff] %vm301, %v2227
        %2237 = vst.msk [vmem:[%s2229 + $0x71] sm:$0xff] %vm301, %v2228
        %v2238 = vld [vmem:[#allocation3] sm:$0xff]
        %v2239 = vld [vmem:[#allocation3 + $0x8] sm:$0xff]
        %v2240 = vld [vmem:[#allocation3 + $0x10] sm:$0xff]
        %v2241 = vld [vmem:[#allocation3 + $0x18] sm:$0xff]
        %v2242 = vld [vmem:[#allocation3 + $0x20] sm:$0xff]
        %v2243 = vld [vmem:[#allocation3 + $0x28] sm:$0xff]
        %v2244 = vld [vmem:[#allocation3 + $0x30] sm:$0xff]
        %v2245 = vld [vmem:[#allocation3 + $0x38] sm:$0xff]
        %v2246 = vld [vmem:[#allocation3 + $0x40] sm:$0xff]
        %v2247 = vld [vmem:[#allocation3 + $0x48] sm:$0xff]
        %v2248 = vld [vmem:[#allocation3 + $0x50] sm:$0xff]
        %v2249 = vld [vmem:[#allocation3 + $0x58] sm:$0xff]
        %v2250 = vld [vmem:[#allocation3 + $0x60] sm:$0xff]
        %v2251 = vld [vmem:[#allocation3 + $0x68] sm:$0xff]
        %v2252 = vld [vmem:[#allocation3 + $0x70] sm:$0xff]
        %v2253 = vld [vmem:[#allocation3 + $0x78] sm:$0xff]
        %v2254 = vld [vmem:[%s3] sm:$0xff]
        %v2255 = vld [vmem:[%s3 + $0x8] sm:$0xff]
        %v2256 = vld [vmem:[%s3 + $0x10] sm:$0xff]
        %v2257 = vld [vmem:[%s3 + $0x18] sm:$0xff]
        %v2259 = vsel %vm301, %v2238, 0
        %v2262 = vsel %vm301, %v2239, 0
        %v2265 = vsel %vm301, %v2240, 0
        %v2268 = vsel %vm301, %v2241, 0
        %v2271 = vsel %vm301, %v2242, 0
        %v2274 = vsel %vm301, %v2243, 0
        %v2277 = vsel %vm301, %v2244, 0
        %v2280 = vsel %vm301, %v2245, 0
        %v2283 = vsel %vm301, %v2246, 0
        %v2286 = vsel %vm301, %v2247, 0
        %v2289 = vsel %vm301, %v2248, 0
        %v2292 = vsel %vm301, %v2249, 0
        %v2295 = vsel %vm301, %v2250, 0
        %v2298 = vsel %vm301, %v2251, 0
        %v2301 = vsel %vm301, %v2252, 0
        %v2304 = vsel %vm301, %v2253, 0
        %2306 = vmatpush.msra.mxu0 0.0
        %2307 = vmatpush.msra.mxu0 0.0
        %2308 = vmatpush.msra.mxu0 0.0
        %2309 = vmatpush.msra.mxu0 0.0
        %2310 = vmatpush.msra.mxu0 0.0
        %2311 = vmatpush.msra.mxu0 0.0
        %2312 = vmatpush.msra.mxu0 0.0
        %2313 = vmatpush.msra.mxu0 0.0
        %2314 = vmatpush.msra.mxu0 0.0
        %2315 = vmatpush.msra.mxu0 0.0
        %2316 = vmatpush.msra.mxu0 0.0
        %2317 = vmatpush.msra.mxu0 0.0
        %2318 = vmatpush.msra.mxu0 %v2257
        %2319 = vmatpush.msra.mxu0 %v2256
        %2320 = vmatpush.msra.mxu0 %v2255
        %2321 = vmatpush.msra.mxu0 %v2254
        %2322 = vmatmul.f32.gmra.mxu0 %v2259
        %v2323 = vpop.f32.mrf.mxu0
        %v2324 = vadd.f32 0.0, %v2323
        %2325 = vmatmul.f32.gmra.mxu0 %v2262
        %v2326 = vpop.f32.mrf.mxu0
        %v2327 = vadd.f32 0.0, %v2326
        %2328 = vmatmul.f32.gmra.mxu0 %v2265
        %v2329 = vpop.f32.mrf.mxu0
        %v2330 = vadd.f32 0.0, %v2329
        %2331 = vmatmul.f32.gmra.mxu0 %v2268
        %v2332 = vpop.f32.mrf.mxu0
        %v2333 = vadd.f32 0.0, %v2332
        %2334 = vmatmul.f32.gmra.mxu0 %v2271
        %v2335 = vpop.f32.mrf.mxu0
        %v2336 = vadd.f32 0.0, %v2335
        %2337 = vmatmul.f32.gmra.mxu0 %v2274
        %v2338 = vpop.f32.mrf.mxu0
        %v2339 = vadd.f32 0.0, %v2338
        %2340 = vmatmul.f32.gmra.mxu0 %v2277
        %v2341 = vpop.f32.mrf.mxu0
        %v2342 = vadd.f32 0.0, %v2341
        %2343 = vmatmul.f32.gmra.mxu0 %v2280
        %v2344 = vpop.f32.mrf.mxu0
        %v2345 = vadd.f32 0.0, %v2344
        %2346 = vmatmul.f32.gmra.mxu0 %v2283
        %v2347 = vpop.f32.mrf.mxu0
        %v2348 = vadd.f32 0.0, %v2347
        %2349 = vmatmul.f32.gmra.mxu0 %v2286
        %v2350 = vpop.f32.mrf.mxu0
        %v2351 = vadd.f32 0.0, %v2350
        %2352 = vmatmul.f32.gmra.mxu0 %v2289
        %v2353 = vpop.f32.mrf.mxu0
        %v2354 = vadd.f32 0.0, %v2353
        %2355 = vmatmul.f32.gmra.mxu0 %v2292
        %v2356 = vpop.f32.mrf.mxu0
        %v2357 = vadd.f32 0.0, %v2356
        %2358 = vmatmul.f32.gmra.mxu0 %v2295
        %v2359 = vpop.f32.mrf.mxu0
        %v2360 = vadd.f32 0.0, %v2359
        %2361 = vmatmul.f32.gmra.mxu0 %v2298
        %v2362 = vpop.f32.mrf.mxu0
        %v2363 = vadd.f32 0.0, %v2362
        %2364 = vmatmul.f32.gmra.mxu0 %v2301
        %v2365 = vpop.f32.mrf.mxu0
        %v2366 = vadd.f32 0.0, %v2365
        %2367 = vmatmul.f32.gmra.mxu0 %v2304
        %v2368 = vpop.f32.mrf.mxu0
        %v2369 = vadd.f32 0.0, %v2368
        %2370 = vdwg.mxu0
        %v2387 = vrot.slane %v2324, 1
        %v2388 = vrot.slane %v2327, 1
        %v2389 = vsel %vm688, %v2387, %v2388
        %v2390 = vrot.slane %v2330, 1
        %v2391 = vrot.slane %v2333, 1
        %v2392 = vsel %vm688, %v2390, %v2391
        %v2393 = vrot.slane %v2336, 1
        %v2394 = vrot.slane %v2339, 1
        %v2395 = vsel %vm688, %v2393, %v2394
        %v2396 = vrot.slane %v2342, 1
        %v2397 = vrot.slane %v2345, 1
        %v2398 = vsel %vm688, %v2396, %v2397
        %v2399 = vrot.slane %v2348, 1
        %v2400 = vrot.slane %v2351, 1
        %v2401 = vsel %vm688, %v2399, %v2400
        %v2402 = vrot.slane %v2354, 1
        %v2403 = vrot.slane %v2357, 1
        %v2404 = vsel %vm688, %v2402, %v2403
        %v2405 = vrot.slane %v2360, 1
        %v2406 = vrot.slane %v2363, 1
        %v2407 = vsel %vm688, %v2405, %v2406
        %v2408 = vrot.slane %v2366, 1
        %v2409 = vrot.slane %v2369, 1
        %v2410 = vsel %vm688, %v2408, %v2409
        %2411 = vrot.lane.b32.xlu0 %v2389, 96
        %v2412 = vpop.permute.xlu0 %2411
        %2413 = vrot.lane.b32.xlu0 %v2392, 96
        %v2414 = vpop.permute.xlu0 %2413
        %2415 = vrot.lane.b32.xlu0 %v2395, 96
        %v2416 = vpop.permute.xlu0 %2415
        %2417 = vrot.lane.b32.xlu0 %v2398, 96
        %v2418 = vpop.permute.xlu0 %2417
        %2419 = vrot.lane.b32.xlu0 %v2401, 96
        %v2420 = vpop.permute.xlu0 %2419
        %2421 = vrot.lane.b32.xlu0 %v2404, 96
        %v2422 = vpop.permute.xlu0 %2421
        %2423 = vrot.lane.b32.xlu0 %v2407, 96
        %v2424 = vpop.permute.xlu0 %2423
        %2425 = vrot.lane.b32.xlu0 %v2410, 96
        %v2426 = vpop.permute.xlu0 %2425
        %v2435 = vadd.f32 %v2324, %v2412
        %v2436 = vadd.f32 %v2330, %v2414
        %v2437 = vadd.f32 %v2336, %v2416
        %v2438 = vadd.f32 %v2342, %v2418
        %v2439 = vadd.f32 %v2348, %v2420
        %v2440 = vadd.f32 %v2354, %v2422
        %v2441 = vadd.f32 %v2360, %v2424
        %v2442 = vadd.f32 %v2366, %v2426
        %v2443 = vrot.slane %v2324, 2
        %v2444 = vrot.slane %v2327, 2
        %v2445 = vsel %vm745, %v2443, %v2444
        %v2446 = vrot.slane %v2330, 2
        %v2447 = vrot.slane %v2333, 2
        %v2448 = vsel %vm745, %v2446, %v2447
        %v2449 = vrot.slane %v2336, 2
        %v2450 = vrot.slane %v2339, 2
        %v2451 = vsel %vm745, %v2449, %v2450
        %v2452 = vrot.slane %v2342, 2
        %v2453 = vrot.slane %v2345, 2
        %v2454 = vsel %vm745, %v2452, %v2453
        %v2455 = vrot.slane %v2348, 2
        %v2456 = vrot.slane %v2351, 2
        %v2457 = vsel %vm745, %v2455, %v2456
        %v2458 = vrot.slane %v2354, 2
        %v2459 = vrot.slane %v2357, 2
        %v2460 = vsel %vm745, %v2458, %v2459
        %v2461 = vrot.slane %v2360, 2
        %v2462 = vrot.slane %v2363, 2
        %v2463 = vsel %vm745, %v2461, %v2462
        %v2464 = vrot.slane %v2366, 2
        %v2465 = vrot.slane %v2369, 2
        %v2466 = vsel %vm745, %v2464, %v2465
        %2467 = vrot.lane.b32.xlu0 %v2445, 64
        %v2468 = vpop.permute.xlu0 %2467
        %2469 = vrot.lane.b32.xlu0 %v2448, 64
        %v2470 = vpop.permute.xlu0 %2469
        %2471 = vrot.lane.b32.xlu0 %v2451, 64
        %v2472 = vpop.permute.xlu0 %2471
        %2473 = vrot.lane.b32.xlu0 %v2454, 64
        %v2474 = vpop.permute.xlu0 %2473
        %2475 = vrot.lane.b32.xlu0 %v2457, 64
        %v2476 = vpop.permute.xlu0 %2475
        %2477 = vrot.lane.b32.xlu0 %v2460, 64
        %v2478 = vpop.permute.xlu0 %2477
        %2479 = vrot.lane.b32.xlu0 %v2463, 64
        %v2480 = vpop.permute.xlu0 %2479
        %2481 = vrot.lane.b32.xlu0 %v2466, 64
        %v2482 = vpop.permute.xlu0 %2481
        %v2491 = vadd.f32 %v2435, %v2468
        %v2492 = vadd.f32 %v2436, %v2470
        %v2493 = vadd.f32 %v2437, %v2472
        %v2494 = vadd.f32 %v2438, %v2474
        %v2495 = vadd.f32 %v2439, %v2476
        %v2496 = vadd.f32 %v2440, %v2478
        %v2497 = vadd.f32 %v2441, %v2480
        %v2498 = vadd.f32 %v2442, %v2482
        %v2499 = vld [vmem:[%s2229] sm:$0xff]
        %v2500 = vld [vmem:[%s2229 + $0x8] sm:$0xff]
        %v2501 = vld [vmem:[%s2229 + $0x10] sm:$0xff]
        %v2502 = vld [vmem:[%s2229 + $0x18] sm:$0xff]
        %v2503 = vld [vmem:[%s2229 + $0x20] sm:$0xff]
        %v2504 = vld [vmem:[%s2229 + $0x28] sm:$0xff]
        %v2505 = vld [vmem:[%s2229 + $0x30] sm:$0xff]
        %v2506 = vld [vmem:[%s2229 + $0x38] sm:$0xff]
        %v2507 = vld [vmem:[%s2229 + $0x40] sm:$0xff]
        %v2508 = vld [vmem:[%s2229 + $0x48] sm:$0xff]
        %v2509 = vld [vmem:[%s2229 + $0x50] sm:$0xff]
        %v2510 = vld [vmem:[%s2229 + $0x58] sm:$0xff]
        %v2511 = vld [vmem:[%s2229 + $0x60] sm:$0xff]
        %v2512 = vld [vmem:[%s2229 + $0x68] sm:$0xff]
        %v2513 = vld [vmem:[%s2229 + $0x70] sm:$0xff]
        %v2514 = vld [vmem:[%s2229 + $0x78] sm:$0xff]
        %s2515 = scalar_lea.vmem %s3, 32
        %v2516 = vld [vmem:[%s2515] sm:$0xff]
        %v2517 = vld [vmem:[%s2515 + $0x8] sm:$0xff]
        %v2518 = vld [vmem:[%s2515 + $0x10] sm:$0xff]
        %v2519 = vld [vmem:[%s2515 + $0x18] sm:$0xff]
        %v2521 = vsel %vm301, %v2499, 0
        %v2524 = vsel %vm301, %v2500, 0
        %v2527 = vsel %vm301, %v2501, 0
        %v2530 = vsel %vm301, %v2502, 0
        %v2533 = vsel %vm301, %v2503, 0
        %v2536 = vsel %vm301, %v2504, 0
        %v2539 = vsel %vm301, %v2505, 0
        %v2542 = vsel %vm301, %v2506, 0
        %v2545 = vsel %vm301, %v2507, 0
        %v2548 = vsel %vm301, %v2508, 0
        %v2551 = vsel %vm301, %v2509, 0
        %v2554 = vsel %vm301, %v2510, 0
        %v2557 = vsel %vm301, %v2511, 0
        %v2560 = vsel %vm301, %v2512, 0
        %v2563 = vsel %vm301, %v2513, 0
        %v2566 = vsel %vm301, %v2514, 0
        %2568 = vmatpush.msra.mxu0 0.0
        %2569 = vmatpush.msra.mxu0 0.0
        %2570 = vmatpush.msra.mxu0 0.0
        %2571 = vmatpush.msra.mxu0 0.0
        %2572 = vmatpush.msra.mxu0 0.0
        %2573 = vmatpush.msra.mxu0 0.0
        %2574 = vmatpush.msra.mxu0 0.0
        %2575 = vmatpush.msra.mxu0 0.0
        %2576 = vmatpush.msra.mxu0 0.0
        %2577 = vmatpush.msra.mxu0 0.0
        %2578 = vmatpush.msra.mxu0 0.0
        %2579 = vmatpush.msra.mxu0 0.0
        %2580 = vmatpush.msra.mxu0 %v2519
        %2581 = vmatpush.msra.mxu0 %v2518
        %2582 = vmatpush.msra.mxu0 %v2517
        %2583 = vmatpush.msra.mxu0 %v2516
        %2584 = vmatmul.f32.gmra.mxu0 %v2521
        %v2585 = vpop.f32.mrf.mxu0
        %v2586 = vadd.f32 0.0, %v2585
        %2587 = vmatmul.f32.gmra.mxu0 %v2524
        %v2588 = vpop.f32.mrf.mxu0
        %v2589 = vadd.f32 0.0, %v2588
        %2590 = vmatmul.f32.gmra.mxu0 %v2527
        %v2591 = vpop.f32.mrf.mxu0
        %v2592 = vadd.f32 0.0, %v2591
        %2593 = vmatmul.f32.gmra.mxu0 %v2530
        %v2594 = vpop.f32.mrf.mxu0
        %v2595 = vadd.f32 0.0, %v2594
        %2596 = vmatmul.f32.gmra.mxu0 %v2533
        %v2597 = vpop.f32.mrf.mxu0
        %v2598 = vadd.f32 0.0, %v2597
        %2599 = vmatmul.f32.gmra.mxu0 %v2536
        %v2600 = vpop.f32.mrf.mxu0
        %v2601 = vadd.f32 0.0, %v2600
        %2602 = vmatmul.f32.gmra.mxu0 %v2539
        %v2603 = vpop.f32.mrf.mxu0
        %v2604 = vadd.f32 0.0, %v2603
        %2605 = vmatmul.f32.gmra.mxu0 %v2542
        %v2606 = vpop.f32.mrf.mxu0
        %v2607 = vadd.f32 0.0, %v2606
        %2608 = vmatmul.f32.gmra.mxu0 %v2545
        %v2609 = vpop.f32.mrf.mxu0
        %v2610 = vadd.f32 0.0, %v2609
        %2611 = vmatmul.f32.gmra.mxu0 %v2548
        %v2612 = vpop.f32.mrf.mxu0
        %v2613 = vadd.f32 0.0, %v2612
        %2614 = vmatmul.f32.gmra.mxu0 %v2551
        %v2615 = vpop.f32.mrf.mxu0
        %v2616 = vadd.f32 0.0, %v2615
        %2617 = vmatmul.f32.gmra.mxu0 %v2554
        %v2618 = vpop.f32.mrf.mxu0
        %v2619 = vadd.f32 0.0, %v2618
        %2620 = vmatmul.f32.gmra.mxu0 %v2557
        %v2621 = vpop.f32.mrf.mxu0
        %v2622 = vadd.f32 0.0, %v2621
        %2623 = vmatmul.f32.gmra.mxu0 %v2560
        %v2624 = vpop.f32.mrf.mxu0
        %v2625 = vadd.f32 0.0, %v2624
        %2626 = vmatmul.f32.gmra.mxu0 %v2563
        %v2627 = vpop.f32.mrf.mxu0
        %v2628 = vadd.f32 0.0, %v2627
        %2629 = vmatmul.f32.gmra.mxu0 %v2566
        %v2630 = vpop.f32.mrf.mxu0
        %v2631 = vadd.f32 0.0, %v2630
        %2632 = vdwg.mxu0
        %v2649 = vrot.slane %v2586, 1
        %v2650 = vrot.slane %v2589, 1
        %v2651 = vsel %vm688, %v2649, %v2650
        %v2652 = vrot.slane %v2592, 1
        %v2653 = vrot.slane %v2595, 1
        %v2654 = vsel %vm688, %v2652, %v2653
        %v2655 = vrot.slane %v2598, 1
        %v2656 = vrot.slane %v2601, 1
        %v2657 = vsel %vm688, %v2655, %v2656
        %v2658 = vrot.slane %v2604, 1
        %v2659 = vrot.slane %v2607, 1
        %v2660 = vsel %vm688, %v2658, %v2659
        %v2661 = vrot.slane %v2610, 1
        %v2662 = vrot.slane %v2613, 1
        %v2663 = vsel %vm688, %v2661, %v2662
        %v2664 = vrot.slane %v2616, 1
        %v2665 = vrot.slane %v2619, 1
        %v2666 = vsel %vm688, %v2664, %v2665
        %v2667 = vrot.slane %v2622, 1
        %v2668 = vrot.slane %v2625, 1
        %v2669 = vsel %vm688, %v2667, %v2668
        %v2670 = vrot.slane %v2628, 1
        %v2671 = vrot.slane %v2631, 1
        %v2672 = vsel %vm688, %v2670, %v2671
        %2673 = vrot.lane.b32.xlu0 %v2651, 96
        %v2674 = vpop.permute.xlu0 %2673
        %2675 = vrot.lane.b32.xlu0 %v2654, 96
        %v2676 = vpop.permute.xlu0 %2675
        %2677 = vrot.lane.b32.xlu0 %v2657, 96
        %v2678 = vpop.permute.xlu0 %2677
        %2679 = vrot.lane.b32.xlu0 %v2660, 96
        %v2680 = vpop.permute.xlu0 %2679
        %2681 = vrot.lane.b32.xlu0 %v2663, 96
        %v2682 = vpop.permute.xlu0 %2681
        %2683 = vrot.lane.b32.xlu0 %v2666, 96
        %v2684 = vpop.permute.xlu0 %2683
        %2685 = vrot.lane.b32.xlu0 %v2669, 96
        %v2686 = vpop.permute.xlu0 %2685
        %2687 = vrot.lane.b32.xlu0 %v2672, 96
        %v2688 = vpop.permute.xlu0 %2687
        %v2697 = vadd.f32 %v2586, %v2674
        %v2698 = vadd.f32 %v2592, %v2676
        %v2699 = vadd.f32 %v2598, %v2678
        %v2700 = vadd.f32 %v2604, %v2680
        %v2701 = vadd.f32 %v2610, %v2682
        %v2702 = vadd.f32 %v2616, %v2684
        %v2703 = vadd.f32 %v2622, %v2686
        %v2704 = vadd.f32 %v2628, %v2688
        %v2705 = vrot.slane %v2586, 2
        %v2706 = vrot.slane %v2589, 2
        %v2707 = vsel %vm745, %v2705, %v2706
        %v2708 = vrot.slane %v2592, 2
        %v2709 = vrot.slane %v2595, 2
        %v2710 = vsel %vm745, %v2708, %v2709
        %v2711 = vrot.slane %v2598, 2
        %v2712 = vrot.slane %v2601, 2
        %v2713 = vsel %vm745, %v2711, %v2712
        %v2714 = vrot.slane %v2604, 2
        %v2715 = vrot.slane %v2607, 2
        %v2716 = vsel %vm745, %v2714, %v2715
        %v2717 = vrot.slane %v2610, 2
        %v2718 = vrot.slane %v2613, 2
        %v2719 = vsel %vm745, %v2717, %v2718
        %v2720 = vrot.slane %v2616, 2
        %v2721 = vrot.slane %v2619, 2
        %v2722 = vsel %vm745, %v2720, %v2721
        %v2723 = vrot.slane %v2622, 2
        %v2724 = vrot.slane %v2625, 2
        %v2725 = vsel %vm745, %v2723, %v2724
        %v2726 = vrot.slane %v2628, 2
        %v2727 = vrot.slane %v2631, 2
        %v2728 = vsel %vm745, %v2726, %v2727
        %2729 = vrot.lane.b32.xlu0 %v2707, 64
        %v2730 = vpop.permute.xlu0 %2729
        %2731 = vrot.lane.b32.xlu0 %v2710, 64
        %v2732 = vpop.permute.xlu0 %2731
        %2733 = vrot.lane.b32.xlu0 %v2713, 64
        %v2734 = vpop.permute.xlu0 %2733
        %2735 = vrot.lane.b32.xlu0 %v2716, 64
        %v2736 = vpop.permute.xlu0 %2735
        %2737 = vrot.lane.b32.xlu0 %v2719, 64
        %v2738 = vpop.permute.xlu0 %2737
        %2739 = vrot.lane.b32.xlu0 %v2722, 64
        %v2740 = vpop.permute.xlu0 %2739
        %2741 = vrot.lane.b32.xlu0 %v2725, 64
        %v2742 = vpop.permute.xlu0 %2741
        %2743 = vrot.lane.b32.xlu0 %v2728, 64
        %v2744 = vpop.permute.xlu0 %2743
        %v2753 = vadd.f32 %v2697, %v2730
        %v2754 = vadd.f32 %v2698, %v2732
        %v2755 = vadd.f32 %v2699, %v2734
        %v2756 = vadd.f32 %v2700, %v2736
        %v2757 = vadd.f32 %v2701, %v2738
        %v2758 = vadd.f32 %v2702, %v2740
        %v2759 = vadd.f32 %v2703, %v2742
        %v2760 = vadd.f32 %v2704, %v2744
        %v2761 = vadd.f32 %v2491, %v2753
        %v2762 = vadd.f32 %v2492, %v2754
        %v2763 = vadd.f32 %v2493, %v2755
        %v2764 = vadd.f32 %v2494, %v2756
        %v2765 = vadd.f32 %v2495, %v2757
        %v2766 = vadd.f32 %v2496, %v2758
        %v2767 = vadd.f32 %v2497, %v2759
        %v2768 = vadd.f32 %v2498, %v2760
        %s2769 = scalar_lea.vmem [#allocation3], 32
        %v2770 = vld [vmem:[%s2769] sm:$0xff]
        %v2771 = vld [vmem:[%s2769 + $0x8] sm:$0xff]
        %v2772 = vld [vmem:[%s2769 + $0x10] sm:$0xff]
        %v2773 = vld [vmem:[%s2769 + $0x18] sm:$0xff]
        %v2774 = vld [vmem:[%s2769 + $0x20] sm:$0xff]
        %v2775 = vld [vmem:[%s2769 + $0x28] sm:$0xff]
        %v2776 = vld [vmem:[%s2769 + $0x30] sm:$0xff]
        %v2777 = vld [vmem:[%s2769 + $0x38] sm:$0xff]
        %v2778 = vld [vmem:[%s2769 + $0x40] sm:$0xff]
        %v2779 = vld [vmem:[%s2769 + $0x48] sm:$0xff]
        %v2780 = vld [vmem:[%s2769 + $0x50] sm:$0xff]
        %v2781 = vld [vmem:[%s2769 + $0x58] sm:$0xff]
        %v2782 = vld [vmem:[%s2769 + $0x60] sm:$0xff]
        %v2783 = vld [vmem:[%s2769 + $0x68] sm:$0xff]
        %v2784 = vld [vmem:[%s2769 + $0x70] sm:$0xff]
        %v2785 = vld [vmem:[%s2769 + $0x78] sm:$0xff]
        %s2786 = scalar_lea.vmem %s3, 64
        %v2787 = vld [vmem:[%s2786] sm:$0xff]
        %v2788 = vld [vmem:[%s2786 + $0x8] sm:$0xff]
        %v2789 = vld [vmem:[%s2786 + $0x10] sm:$0xff]
        %v2790 = vld [vmem:[%s2786 + $0x18] sm:$0xff]
        %v2792 = vsel %vm301, %v2770, 0
        %v2795 = vsel %vm301, %v2771, 0
        %v2798 = vsel %vm301, %v2772, 0
        %v2801 = vsel %vm301, %v2773, 0
        %v2804 = vsel %vm301, %v2774, 0
        %v2807 = vsel %vm301, %v2775, 0
        %v2810 = vsel %vm301, %v2776, 0
        %v2813 = vsel %vm301, %v2777, 0
        %v2816 = vsel %vm301, %v2778, 0
        %v2819 = vsel %vm301, %v2779, 0
        %v2822 = vsel %vm301, %v2780, 0
        %v2825 = vsel %vm301, %v2781, 0
        %v2828 = vsel %vm301, %v2782, 0
        %v2831 = vsel %vm301, %v2783, 0
        %v2834 = vsel %vm301, %v2784, 0
        %v2837 = vsel %vm301, %v2785, 0
        %2839 = vmatpush.msra.mxu0 0.0
        %2840 = vmatpush.msra.mxu0 0.0
        %2841 = vmatpush.msra.mxu0 0.0
        %2842 = vmatpush.msra.mxu0 0.0
        %2843 = vmatpush.msra.mxu0 0.0
        %2844 = vmatpush.msra.mxu0 0.0
        %2845 = vmatpush.msra.mxu0 0.0
        %2846 = vmatpush.msra.mxu0 0.0
        %2847 = vmatpush.msra.mxu0 0.0
        %2848 = vmatpush.msra.mxu0 0.0
        %2849 = vmatpush.msra.mxu0 0.0
        %2850 = vmatpush.msra.mxu0 0.0
        %2851 = vmatpush.msra.mxu0 %v2790
        %2852 = vmatpush.msra.mxu0 %v2789
        %2853 = vmatpush.msra.mxu0 %v2788
        %2854 = vmatpush.msra.mxu0 %v2787
        %2855 = vmatmul.f32.gmra.mxu0 %v2792
        %v2856 = vpop.f32.mrf.mxu0
        %v2857 = vadd.f32 0.0, %v2856
        %2858 = vmatmul.f32.gmra.mxu0 %v2795
        %v2859 = vpop.f32.mrf.mxu0
        %v2860 = vadd.f32 0.0, %v2859
        %2861 = vmatmul.f32.gmra.mxu0 %v2798
        %v2862 = vpop.f32.mrf.mxu0
        %v2863 = vadd.f32 0.0, %v2862
        %2864 = vmatmul.f32.gmra.mxu0 %v2801
        %v2865 = vpop.f32.mrf.mxu0
        %v2866 = vadd.f32 0.0, %v2865
        %2867 = vmatmul.f32.gmra.mxu0 %v2804
        %v2868 = vpop.f32.mrf.mxu0
        %v2869 = vadd.f32 0.0, %v2868
        %2870 = vmatmul.f32.gmra.mxu0 %v2807
        %v2871 = vpop.f32.mrf.mxu0
        %v2872 = vadd.f32 0.0, %v2871
        %2873 = vmatmul.f32.gmra.mxu0 %v2810
        %v2874 = vpop.f32.mrf.mxu0
        %v2875 = vadd.f32 0.0, %v2874
        %2876 = vmatmul.f32.gmra.mxu0 %v2813
        %v2877 = vpop.f32.mrf.mxu0
        %v2878 = vadd.f32 0.0, %v2877
        %2879 = vmatmul.f32.gmra.mxu0 %v2816
        %v2880 = vpop.f32.mrf.mxu0
        %v2881 = vadd.f32 0.0, %v2880
        %2882 = vmatmul.f32.gmra.mxu0 %v2819
        %v2883 = vpop.f32.mrf.mxu0
        %v2884 = vadd.f32 0.0, %v2883
        %2885 = vmatmul.f32.gmra.mxu0 %v2822
        %v2886 = vpop.f32.mrf.mxu0
        %v2887 = vadd.f32 0.0, %v2886
        %2888 = vmatmul.f32.gmra.mxu0 %v2825
        %v2889 = vpop.f32.mrf.mxu0
        %v2890 = vadd.f32 0.0, %v2889
        %2891 = vmatmul.f32.gmra.mxu0 %v2828
        %v2892 = vpop.f32.mrf.mxu0
        %v2893 = vadd.f32 0.0, %v2892
        %2894 = vmatmul.f32.gmra.mxu0 %v2831
        %v2895 = vpop.f32.mrf.mxu0
        %v2896 = vadd.f32 0.0, %v2895
        %2897 = vmatmul.f32.gmra.mxu0 %v2834
        %v2898 = vpop.f32.mrf.mxu0
        %v2899 = vadd.f32 0.0, %v2898
        %2900 = vmatmul.f32.gmra.mxu0 %v2837
        %v2901 = vpop.f32.mrf.mxu0
        %v2902 = vadd.f32 0.0, %v2901
        %2903 = vdwg.mxu0
        %v2920 = vrot.slane %v2857, 1
        %v2921 = vrot.slane %v2860, 1
        %v2922 = vsel %vm688, %v2920, %v2921
        %v2923 = vrot.slane %v2863, 1
        %v2924 = vrot.slane %v2866, 1
        %v2925 = vsel %vm688, %v2923, %v2924
        %v2926 = vrot.slane %v2869, 1
        %v2927 = vrot.slane %v2872, 1
        %v2928 = vsel %vm688, %v2926, %v2927
        %v2929 = vrot.slane %v2875, 1
        %v2930 = vrot.slane %v2878, 1
        %v2931 = vsel %vm688, %v2929, %v2930
        %v2932 = vrot.slane %v2881, 1
        %v2933 = vrot.slane %v2884, 1
        %v2934 = vsel %vm688, %v2932, %v2933
        %v2935 = vrot.slane %v2887, 1
        %v2936 = vrot.slane %v2890, 1
        %v2937 = vsel %vm688, %v2935, %v2936
        %v2938 = vrot.slane %v2893, 1
        %v2939 = vrot.slane %v2896, 1
        %v2940 = vsel %vm688, %v2938, %v2939
        %v2941 = vrot.slane %v2899, 1
        %v2942 = vrot.slane %v2902, 1
        %v2943 = vsel %vm688, %v2941, %v2942
        %2944 = vrot.lane.b32.xlu0 %v2922, 96
        %v2945 = vpop.permute.xlu0 %2944
        %2946 = vrot.lane.b32.xlu0 %v2925, 96
        %v2947 = vpop.permute.xlu0 %2946
        %2948 = vrot.lane.b32.xlu0 %v2928, 96
        %v2949 = vpop.permute.xlu0 %2948
        %2950 = vrot.lane.b32.xlu0 %v2931, 96
        %v2951 = vpop.permute.xlu0 %2950
        %2952 = vrot.lane.b32.xlu0 %v2934, 96
        %v2953 = vpop.permute.xlu0 %2952
        %2954 = vrot.lane.b32.xlu0 %v2937, 96
        %v2955 = vpop.permute.xlu0 %2954
        %2956 = vrot.lane.b32.xlu0 %v2940, 96
        %v2957 = vpop.permute.xlu0 %2956
        %2958 = vrot.lane.b32.xlu0 %v2943, 96
        %v2959 = vpop.permute.xlu0 %2958
        %v2968 = vadd.f32 %v2857, %v2945
        %v2969 = vadd.f32 %v2863, %v2947
        %v2970 = vadd.f32 %v2869, %v2949
        %v2971 = vadd.f32 %v2875, %v2951
        %v2972 = vadd.f32 %v2881, %v2953
        %v2973 = vadd.f32 %v2887, %v2955
        %v2974 = vadd.f32 %v2893, %v2957
        %v2975 = vadd.f32 %v2899, %v2959
        %v2976 = vrot.slane %v2857, 2
        %v2977 = vrot.slane %v2860, 2
        %v2978 = vsel %vm745, %v2976, %v2977
        %v2979 = vrot.slane %v2863, 2
        %v2980 = vrot.slane %v2866, 2
        %v2981 = vsel %vm745, %v2979, %v2980
        %v2982 = vrot.slane %v2869, 2
        %v2983 = vrot.slane %v2872, 2
        %v2984 = vsel %vm745, %v2982, %v2983
        %v2985 = vrot.slane %v2875, 2
        %v2986 = vrot.slane %v2878, 2
        %v2987 = vsel %vm745, %v2985, %v2986
        %v2988 = vrot.slane %v2881, 2
        %v2989 = vrot.slane %v2884, 2
        %v2990 = vsel %vm745, %v2988, %v2989
        %v2991 = vrot.slane %v2887, 2
        %v2992 = vrot.slane %v2890, 2
        %v2993 = vsel %vm745, %v2991, %v2992
        %v2994 = vrot.slane %v2893, 2
        %v2995 = vrot.slane %v2896, 2
        %v2996 = vsel %vm745, %v2994, %v2995
        %v2997 = vrot.slane %v2899, 2
        %v2998 = vrot.slane %v2902, 2
        %v2999 = vsel %vm745, %v2997, %v2998
        %3000 = vrot.lane.b32.xlu0 %v2978, 64
        %v3001 = vpop.permute.xlu0 %3000
        %3002 = vrot.lane.b32.xlu0 %v2981, 64
        %v3003 = vpop.permute.xlu0 %3002
        %3004 = vrot.lane.b32.xlu0 %v2984, 64
        %v3005 = vpop.permute.xlu0 %3004
        %3006 = vrot.lane.b32.xlu0 %v2987, 64
        %v3007 = vpop.permute.xlu0 %3006
        %3008 = vrot.lane.b32.xlu0 %v2990, 64
        %v3009 = vpop.permute.xlu0 %3008
        %3010 = vrot.lane.b32.xlu0 %v2993, 64
        %v3011 = vpop.permute.xlu0 %3010
        %3012 = vrot.lane.b32.xlu0 %v2996, 64
        %v3013 = vpop.permute.xlu0 %3012
        %3014 = vrot.lane.b32.xlu0 %v2999, 64
        %v3015 = vpop.permute.xlu0 %3014
        %v3024 = vadd.f32 %v2968, %v3001
        %v3025 = vadd.f32 %v2969, %v3003
        %v3026 = vadd.f32 %v2970, %v3005
        %v3027 = vadd.f32 %v2971, %v3007
        %v3028 = vadd.f32 %v2972, %v3009
        %v3029 = vadd.f32 %v2973, %v3011
        %v3030 = vadd.f32 %v2974, %v3013
        %v3031 = vadd.f32 %v2975, %v3015
        %v3032 = vadd.f32 %v2761, %v3024
        %v3033 = vadd.f32 %v2762, %v3025
        %v3034 = vadd.f32 %v2763, %v3026
        %v3035 = vadd.f32 %v2764, %v3027
        %v3036 = vadd.f32 %v2765, %v3028
        %v3037 = vadd.f32 %v2766, %v3029
        %v3038 = vadd.f32 %v2767, %v3030
        %v3039 = vadd.f32 %v2768, %v3031
        %v3040 = vld [vmem:[%s4] sm:$0x1]
        %v3042 = vperm.slane %v3040, 0
        %v3044 = vadd.f32 %v3032, %v3042
        %v3045 = vadd.f32 %v3033, %v3042
        %v3046 = vadd.f32 %v3034, %v3042
        %v3047 = vadd.f32 %v3035, %v3042
        %v3048 = vadd.f32 %v3036, %v3042
        %v3049 = vadd.f32 %v3037, %v3042
        %v3050 = vadd.f32 %v3038, %v3042
        %v3051 = vadd.f32 %v3039, %v3042
        %v3052 = vsel %vm301, %v3044, 0.0
        %3053 = vadd.xlane.f32.xlu0 %v3052
        %v3054 = vpop.xlane.xlu0 %3053
        %v3055 = vsel %vm301, %v3045, 0.0
        %3056 = vadd.xlane.f32.xlu0 %v3055
        %v3057 = vpop.xlane.xlu0 %3056
        %v3058 = vsel %vm301, %v3046, 0.0
        %3059 = vadd.xlane.f32.xlu0 %v3058
        %v3060 = vpop.xlane.xlu0 %3059
        %v3061 = vsel %vm301, %v3047, 0.0
        %3062 = vadd.xlane.f32.xlu0 %v3061
        %v3063 = vpop.xlane.xlu0 %3062
        %v3064 = vsel %vm301, %v3048, 0.0
        %3065 = vadd.xlane.f32.xlu0 %v3064
        %v3066 = vpop.xlane.xlu0 %3065
        %v3067 = vsel %vm301, %v3049, 0.0
        %3068 = vadd.xlane.f32.xlu0 %v3067
        %v3069 = vpop.xlane.xlu0 %3068
        %v3070 = vsel %vm301, %v3050, 0.0
        %3071 = vadd.xlane.f32.xlu0 %v3070
        %v3072 = vpop.xlane.xlu0 %3071
        %v3073 = vsel %vm301, %v3051, 0.0
        %3074 = vadd.xlane.f32.xlu0 %v3073
        %v3075 = vpop.xlane.xlu0 %3074
        %v3076 = vmul.f32 %v3054, %v1732
        %v3077 = vmul.f32 %v3057, %v1732
        %v3078 = vmul.f32 %v3060, %v1732
        %v3079 = vmul.f32 %v3063, %v1732
        %v3080 = vmul.f32 %v3066, %v1732
        %v3081 = vmul.f32 %v3069, %v1732
        %v3082 = vmul.f32 %v3072, %v1732
        %v3083 = vmul.f32 %v3075, %v1732
        %v3084 = vsub.f32 %v3044, %v3076
        %v3085 = vsub.f32 %v3045, %v3077
        %v3086 = vsub.f32 %v3046, %v3078
        %v3087 = vsub.f32 %v3047, %v3079
        %v3088 = vsub.f32 %v3048, %v3080
        %v3089 = vsub.f32 %v3049, %v3081
        %v3090 = vsub.f32 %v3050, %v3082
        %v3091 = vsub.f32 %v3051, %v3083
        %v3092 = vmul.f32 %v3084, %v3084
        %v3093 = vmul.f32 %v3085, %v3085
        %v3094 = vmul.f32 %v3086, %v3086
        %v3095 = vmul.f32 %v3087, %v3087
        %v3096 = vmul.f32 %v3088, %v3088
        %v3097 = vmul.f32 %v3089, %v3089
        %v3098 = vmul.f32 %v3090, %v3090
        %v3099 = vmul.f32 %v3091, %v3091
        %v3100 = vsel %vm301, %v3092, 0.0
        %3101 = vadd.xlane.f32.xlu0 %v3100
        %v3102 = vpop.xlane.xlu0 %3101
        %v3103 = vsel %vm301, %v3093, 0.0
        %3104 = vadd.xlane.f32.xlu0 %v3103
        %v3105 = vpop.xlane.xlu0 %3104
        %v3106 = vsel %vm301, %v3094, 0.0
        %3107 = vadd.xlane.f32.xlu0 %v3106
        %v3108 = vpop.xlane.xlu0 %3107
        %v3109 = vsel %vm301, %v3095, 0.0
        %3110 = vadd.xlane.f32.xlu0 %v3109
        %v3111 = vpop.xlane.xlu0 %3110
        %v3112 = vsel %vm301, %v3096, 0.0
        %3113 = vadd.xlane.f32.xlu0 %v3112
        %v3114 = vpop.xlane.xlu0 %3113
        %v3115 = vsel %vm301, %v3097, 0.0
        %3116 = vadd.xlane.f32.xlu0 %v3115
        %v3117 = vpop.xlane.xlu0 %3116
        %v3118 = vsel %vm301, %v3098, 0.0
        %3119 = vadd.xlane.f32.xlu0 %v3118
        %v3120 = vpop.xlane.xlu0 %3119
        %v3121 = vsel %vm301, %v3099, 0.0
        %3122 = vadd.xlane.f32.xlu0 %v3121
        %v3123 = vpop.xlane.xlu0 %3122
        %v3124 = vmul.f32 %v3102, %v1732
        %v3125 = vmul.f32 %v3105, %v1732
        %v3126 = vmul.f32 %v3108, %v1732
        %v3127 = vmul.f32 %v3111, %v1732
        %v3128 = vmul.f32 %v3114, %v1732
        %v3129 = vmul.f32 %v3117, %v1732
        %v3130 = vmul.f32 %v3120, %v1732
        %v3131 = vmul.f32 %v3123, %v1732
        %v3132 = vadd.f32 %v3124, 1e-06
        %v3133 = vadd.f32 %v3125, 1e-06
        %v3134 = vadd.f32 %v3126, 1e-06
        %v3135 = vadd.f32 %v3127, 1e-06
        %v3136 = vadd.f32 %v3128, 1e-06
        %v3137 = vadd.f32 %v3129, 1e-06
        %v3138 = vadd.f32 %v3130, 1e-06
        %v3139 = vadd.f32 %v3131, 1e-06
        %v3140 = vrsqrt.pop %v3132
        %v3141 = vmul.f32 %v3140, %v3132
        %v3142 = vmul.f32 %v3141, %v3140
        %v3143 = vmul.f32 0.5, %v3142
        %v3144 = vsub.f32 1.5, %v3143
        %v3145 = vmul.f32 %v3140, %v3144
        %vm3146 = vweird.f32 %v3132
        %vm3147 = vweird.f32 %v3140
        %vm3148 = vmor %vm3146, %vm3147
        %v3149 = vsel %vm3148, %v3140, %v3145
        %v3150 = vrsqrt.pop %v3133
        %v3151 = vmul.f32 %v3150, %v3133
        %v3152 = vmul.f32 %v3151, %v3150
        %v3153 = vmul.f32 0.5, %v3152
        %v3154 = vsub.f32 1.5, %v3153
        %v3155 = vmul.f32 %v3150, %v3154
        %vm3156 = vweird.f32 %v3133
        %vm3157 = vweird.f32 %v3150
        %vm3158 = vmor %vm3156, %vm3157
        %v3159 = vsel %vm3158, %v3150, %v3155
        %v3160 = vrsqrt.pop %v3134
        %v3161 = vmul.f32 %v3160, %v3134
        %v3162 = vmul.f32 %v3161, %v3160
        %v3163 = vmul.f32 0.5, %v3162
        %v3164 = vsub.f32 1.5, %v3163
        %v3165 = vmul.f32 %v3160, %v3164
        %vm3166 = vweird.f32 %v3134
        %vm3167 = vweird.f32 %v3160
        %vm3168 = vmor %vm3166, %vm3167
        %v3169 = vsel %vm3168, %v3160, %v3165
        %v3170 = vrsqrt.pop %v3135
        %v3171 = vmul.f32 %v3170, %v3135
        %v3172 = vmul.f32 %v3171, %v3170
        %v3173 = vmul.f32 0.5, %v3172
        %v3174 = vsub.f32 1.5, %v3173
        %v3175 = vmul.f32 %v3170, %v3174
        %vm3176 = vweird.f32 %v3135
        %vm3177 = vweird.f32 %v3170
        %vm3178 = vmor %vm3176, %vm3177
        %v3179 = vsel %vm3178, %v3170, %v3175
        %v3180 = vrsqrt.pop %v3136
        %v3181 = vmul.f32 %v3180, %v3136
        %v3182 = vmul.f32 %v3181, %v3180
        %v3183 = vmul.f32 0.5, %v3182
        %v3184 = vsub.f32 1.5, %v3183
        %v3185 = vmul.f32 %v3180, %v3184
        %vm3186 = vweird.f32 %v3136
        %vm3187 = vweird.f32 %v3180
        %vm3188 = vmor %vm3186, %vm3187
        %v3189 = vsel %vm3188, %v3180, %v3185
        %v3190 = vrsqrt.pop %v3137
        %v3191 = vmul.f32 %v3190, %v3137
        %v3192 = vmul.f32 %v3191, %v3190
        %v3193 = vmul.f32 0.5, %v3192
        %v3194 = vsub.f32 1.5, %v3193
        %v3195 = vmul.f32 %v3190, %v3194
        %vm3196 = vweird.f32 %v3137
        %vm3197 = vweird.f32 %v3190
        %vm3198 = vmor %vm3196, %vm3197
        %v3199 = vsel %vm3198, %v3190, %v3195
        %v3200 = vrsqrt.pop %v3138
        %v3201 = vmul.f32 %v3200, %v3138
        %v3202 = vmul.f32 %v3201, %v3200
        %v3203 = vmul.f32 0.5, %v3202
        %v3204 = vsub.f32 1.5, %v3203
        %v3205 = vmul.f32 %v3200, %v3204
        %vm3206 = vweird.f32 %v3138
        %vm3207 = vweird.f32 %v3200
        %vm3208 = vmor %vm3206, %vm3207
        %v3209 = vsel %vm3208, %v3200, %v3205
        %v3210 = vrsqrt.pop %v3139
        %v3211 = vmul.f32 %v3210, %v3139
        %v3212 = vmul.f32 %v3211, %v3210
        %v3213 = vmul.f32 0.5, %v3212
        %v3214 = vsub.f32 1.5, %v3213
        %v3215 = vmul.f32 %v3210, %v3214
        %vm3216 = vweird.f32 %v3139
        %vm3217 = vweird.f32 %v3210
        %vm3218 = vmor %vm3216, %vm3217
        %v3219 = vsel %vm3218, %v3210, %v3215
        %v3220 = vmul.f32 %v3084, %v3149
        %v3221 = vmul.f32 %v3085, %v3159
        %v3222 = vmul.f32 %v3086, %v3169
        %v3223 = vmul.f32 %v3087, %v3179
        %v3224 = vmul.f32 %v3088, %v3189
        %v3225 = vmul.f32 %v3089, %v3199
        %v3226 = vmul.f32 %v3090, %v3209
        %v3227 = vmul.f32 %v3091, %v3219
        %v3228 = vld [vmem:[%s5] sm:$0x1]
        %v3230 = vperm.slane %v3228, 0
        %v3232 = vmul.f32 %v3220, %v3230
        %v3233 = vmul.f32 %v3221, %v3230
        %v3234 = vmul.f32 %v3222, %v3230
        %v3235 = vmul.f32 %v3223, %v3230
        %v3236 = vmul.f32 %v3224, %v3230
        %v3237 = vmul.f32 %v3225, %v3230
        %v3238 = vmul.f32 %v3226, %v3230
        %v3239 = vmul.f32 %v3227, %v3230
        %v3240 = vld [vmem:[%s6] sm:$0x1]
        %v3242 = vperm.slane %v3240, 0
        %v3244 = vadd.f32 %v3232, %v3242
        %v3245 = vadd.f32 %v3233, %v3242
        %v3246 = vadd.f32 %v3234, %v3242
        %v3247 = vadd.f32 %v3235, %v3242
        %v3248 = vadd.f32 %v3236, %v3242
        %v3249 = vadd.f32 %v3237, %v3242
        %v3250 = vadd.f32 %v3238, %v3242
        %v3251 = vadd.f32 %v3239, %v3242
        %v3252 = vmul.f32 %v3244, 0.5
        %v3253 = vmul.f32 %v3245, 0.5
        %v3254 = vmul.f32 %v3246, 0.5
        %v3255 = vmul.f32 %v3247, 0.5
        %v3256 = vmul.f32 %v3248, 0.5
        %v3257 = vmul.f32 %v3249, 0.5
        %v3258 = vmul.f32 %v3250, 0.5
        %v3259 = vmul.f32 %v3251, 0.5
        %v3260 = vmul.f32 %v3244, 0.70710677
        %v3261 = vmul.f32 %v3245, 0.70710677
        %v3262 = vmul.f32 %v3246, 0.70710677
        %v3263 = vmul.f32 %v3247, 0.70710677
        %v3264 = vmul.f32 %v3248, 0.70710677
        %v3265 = vmul.f32 %v3249, 0.70710677
        %v3266 = vmul.f32 %v3250, 0.70710677
        %v3267 = vmul.f32 %v3251, 0.70710677
        %v3268 = vand.u32 2147483647, %v3260
        %v3269 = vand.u32 2147483647, %v3261
        %v3270 = vand.u32 2147483647, %v3262
        %v3271 = vand.u32 2147483647, %v3263
        %v3272 = vand.u32 2147483647, %v3264
        %v3273 = vand.u32 2147483647, %v3265
        %v3274 = vand.u32 2147483647, %v3266
        %v3275 = vand.u32 2147483647, %v3267
        %v3276 = vmul.f32 %v3268, 0.3275911
        %v3277 = vmul.f32 %v3269, 0.3275911
        %v3278 = vmul.f32 %v3270, 0.3275911
        %v3279 = vmul.f32 %v3271, 0.3275911
        %v3280 = vmul.f32 %v3272, 0.3275911
        %v3281 = vmul.f32 %v3273, 0.3275911
        %v3282 = vmul.f32 %v3274, 0.3275911
        %v3283 = vmul.f32 %v3275, 0.3275911
        %v3284 = vadd.f32 %v3276, 1.0
        %v3285 = vadd.f32 %v3277, 1.0
        %v3286 = vadd.f32 %v3278, 1.0
        %v3287 = vadd.f32 %v3279, 1.0
        %v3288 = vadd.f32 %v3280, 1.0
        %v3289 = vadd.f32 %v3281, 1.0
        %v3290 = vadd.f32 %v3282, 1.0
        %v3291 = vadd.f32 %v3283, 1.0
        %v3292 = vrcp.pop %v3284
        %v3293 = vmul.f32 %v3284, %v3292
        %v3294 = vsub.f32 1.0, %v3293
        %v3295 = vmul.f32 %v3292, %v3294
        %v3296 = vadd.f32 %v3292, %v3295
        %vm3297 = vweird.f32 %v3284
        %vm3298 = vweird.f32 %v3292
        %vm3299 = vmor %vm3297, %vm3298
        %v3300 = vsel %vm3299, %v3292, %v3296
        %v3301 = vand.u32 2147483647, %v3284
        %vm3302 = vcmp.eq.f32.partialorder %v3301, 8.507059e+37
        %v3303 = vand.u32 %v3284, 2147483648
        %v3304 = vor.u32 1.1754944e-38, %v3303
        %v3305 = vsel %vm3302, %v3304, %v3300
        %v3306 = vmul.f32 1.0, %v3305
        %v3307 = vrcp.pop %v3285
        %v3308 = vmul.f32 %v3285, %v3307
        %v3309 = vsub.f32 1.0, %v3308
        %v3310 = vmul.f32 %v3307, %v3309
        %v3311 = vadd.f32 %v3307, %v3310
        %vm3312 = vweird.f32 %v3285
        %vm3313 = vweird.f32 %v3307
        %vm3314 = vmor %vm3312, %vm3313
        %v3315 = vsel %vm3314, %v3307, %v3311
        %v3316 = vand.u32 2147483647, %v3285
        %vm3317 = vcmp.eq.f32.partialorder %v3316, 8.507059e+37
        %v3318 = vand.u32 %v3285, 2147483648
        %v3319 = vor.u32 1.1754944e-38, %v3318
        %v3320 = vsel %vm3317, %v3319, %v3315
        %v3321 = vmul.f32 1.0, %v3320
        %v3322 = vrcp.pop %v3286
        %v3323 = vmul.f32 %v3286, %v3322
        %v3324 = vsub.f32 1.0, %v3323
        %v3325 = vmul.f32 %v3322, %v3324
        %v3326 = vadd.f32 %v3322, %v3325
        %vm3327 = vweird.f32 %v3286
        %vm3328 = vweird.f32 %v3322
        %vm3329 = vmor %vm3327, %vm3328
        %v3330 = vsel %vm3329, %v3322, %v3326
        %v3331 = vand.u32 2147483647, %v3286
        %vm3332 = vcmp.eq.f32.partialorder %v3331, 8.507059e+37
        %v3333 = vand.u32 %v3286, 2147483648
        %v3334 = vor.u32 1.1754944e-38, %v3333
        %v3335 = vsel %vm3332, %v3334, %v3330
        %v3336 = vmul.f32 1.0, %v3335
        %v3337 = vrcp.pop %v3287
        %v3338 = vmul.f32 %v3287, %v3337
        %v3339 = vsub.f32 1.0, %v3338
        %v3340 = vmul.f32 %v3337, %v3339
        %v3341 = vadd.f32 %v3337, %v3340
        %vm3342 = vweird.f32 %v3287
        %vm3343 = vweird.f32 %v3337
        %vm3344 = vmor %vm3342, %vm3343
        %v3345 = vsel %vm3344, %v3337, %v3341
        %v3346 = vand.u32 2147483647, %v3287
        %vm3347 = vcmp.eq.f32.partialorder %v3346, 8.507059e+37
        %v3348 = vand.u32 %v3287, 2147483648
        %v3349 = vor.u32 1.1754944e-38, %v3348
        %v3350 = vsel %vm3347, %v3349, %v3345
        %v3351 = vmul.f32 1.0, %v3350
        %v3352 = vrcp.pop %v3288
        %v3353 = vmul.f32 %v3288, %v3352
        %v3354 = vsub.f32 1.0, %v3353
        %v3355 = vmul.f32 %v3352, %v3354
        %v3356 = vadd.f32 %v3352, %v3355
        %vm3357 = vweird.f32 %v3288
        %vm3358 = vweird.f32 %v3352
        %vm3359 = vmor %vm3357, %vm3358
        %v3360 = vsel %vm3359, %v3352, %v3356
        %v3361 = vand.u32 2147483647, %v3288
        %vm3362 = vcmp.eq.f32.partialorder %v3361, 8.507059e+37
        %v3363 = vand.u32 %v3288, 2147483648
        %v3364 = vor.u32 1.1754944e-38, %v3363
        %v3365 = vsel %vm3362, %v3364, %v3360
        %v3366 = vmul.f32 1.0, %v3365
        %v3367 = vrcp.pop %v3289
        %v3368 = vmul.f32 %v3289, %v3367
        %v3369 = vsub.f32 1.0, %v3368
        %v3370 = vmul.f32 %v3367, %v3369
        %v3371 = vadd.f32 %v3367, %v3370
        %vm3372 = vweird.f32 %v3289
        %vm3373 = vweird.f32 %v3367
        %vm3374 = vmor %vm3372, %vm3373
        %v3375 = vsel %vm3374, %v3367, %v3371
        %v3376 = vand.u32 2147483647, %v3289
        %vm3377 = vcmp.eq.f32.partialorder %v3376, 8.507059e+37
        %v3378 = vand.u32 %v3289, 2147483648
        %v3379 = vor.u32 1.1754944e-38, %v3378
        %v3380 = vsel %vm3377, %v3379, %v3375
        %v3381 = vmul.f32 1.0, %v3380
        %v3382 = vrcp.pop %v3290
        %v3383 = vmul.f32 %v3290, %v3382
        %v3384 = vsub.f32 1.0, %v3383
        %v3385 = vmul.f32 %v3382, %v3384
        %v3386 = vadd.f32 %v3382, %v3385
        %vm3387 = vweird.f32 %v3290
        %vm3388 = vweird.f32 %v3382
        %vm3389 = vmor %vm3387, %vm3388
        %v3390 = vsel %vm3389, %v3382, %v3386
        %v3391 = vand.u32 2147483647, %v3290
        %vm3392 = vcmp.eq.f32.partialorder %v3391, 8.507059e+37
        %v3393 = vand.u32 %v3290, 2147483648
        %v3394 = vor.u32 1.1754944e-38, %v3393
        %v3395 = vsel %vm3392, %v3394, %v3390
        %v3396 = vmul.f32 1.0, %v3395
        %v3397 = vrcp.pop %v3291
        %v3398 = vmul.f32 %v3291, %v3397
        %v3399 = vsub.f32 1.0, %v3398
        %v3400 = vmul.f32 %v3397, %v3399
        %v3401 = vadd.f32 %v3397, %v3400
        %vm3402 = vweird.f32 %v3291
        %vm3403 = vweird.f32 %v3397
        %vm3404 = vmor %vm3402, %vm3403
        %v3405 = vsel %vm3404, %v3397, %v3401
        %v3406 = vand.u32 2147483647, %v3291
        %vm3407 = vcmp.eq.f32.partialorder %v3406, 8.507059e+37
        %v3408 = vand.u32 %v3291, 2147483648
        %v3409 = vor.u32 1.1754944e-38, %v3408
        %v3410 = vsel %vm3407, %v3409, %v3405
        %v3411 = vmul.f32 1.0, %v3410
        %v3412 = vmul.f32 %v3306, 1.0614054
        %v3413 = vmul.f32 %v3321, 1.0614054
        %v3414 = vmul.f32 %v3336, 1.0614054
        %v3415 = vmul.f32 %v3351, 1.0614054
        %v3416 = vmul.f32 %v3366, 1.0614054
        %v3417 = vmul.f32 %v3381, 1.0614054
        %v3418 = vmul.f32 %v3396, 1.0614054
        %v3419 = vmul.f32 %v3411, 1.0614054
        %v3420 = vadd.f32 %v3412, -1.4531521
        %v3421 = vadd.f32 %v3413, -1.4531521
        %v3422 = vadd.f32 %v3414, -1.4531521
        %v3423 = vadd.f32 %v3415, -1.4531521
        %v3424 = vadd.f32 %v3416, -1.4531521
        %v3425 = vadd.f32 %v3417, -1.4531521
        %v3426 = vadd.f32 %v3418, -1.4531521
        %v3427 = vadd.f32 %v3419, -1.4531521
        %v3428 = vmul.f32 %v3420, %v3306
        %v3429 = vmul.f32 %v3421, %v3321
        %v3430 = vmul.f32 %v3422, %v3336
        %v3431 = vmul.f32 %v3423, %v3351
        %v3432 = vmul.f32 %v3424, %v3366
        %v3433 = vmul.f32 %v3425, %v3381
        %v3434 = vmul.f32 %v3426, %v3396
        %v3435 = vmul.f32 %v3427, %v3411
        %v3436 = vadd.f32 %v3428, 1.4214138
        %v3437 = vadd.f32 %v3429, 1.4214138
        %v3438 = vadd.f32 %v3430, 1.4214138
        %v3439 = vadd.f32 %v3431, 1.4214138
        %v3440 = vadd.f32 %v3432, 1.4214138
        %v3441 = vadd.f32 %v3433, 1.4214138
        %v3442 = vadd.f32 %v3434, 1.4214138
        %v3443 = vadd.f32 %v3435, 1.4214138
        %v3444 = vmul.f32 %v3436, %v3306
        %v3445 = vmul.f32 %v3437, %v3321
        %v3446 = vmul.f32 %v3438, %v3336
        %v3447 = vmul.f32 %v3439, %v3351
        %v3448 = vmul.f32 %v3440, %v3366
        %v3449 = vmul.f32 %v3441, %v3381
        %v3450 = vmul.f32 %v3442, %v3396
        %v3451 = vmul.f32 %v3443, %v3411
        %v3452 = vadd.f32 %v3444, -0.28449672
        %v3453 = vadd.f32 %v3445, -0.28449672
        %v3454 = vadd.f32 %v3446, -0.28449672
        %v3455 = vadd.f32 %v3447, -0.28449672
        %v3456 = vadd.f32 %v3448, -0.28449672
        %v3457 = vadd.f32 %v3449, -0.28449672
        %v3458 = vadd.f32 %v3450, -0.28449672
        %v3459 = vadd.f32 %v3451, -0.28449672
        %v3460 = vmul.f32 %v3452, %v3306
        %v3461 = vmul.f32 %v3453, %v3321
        %v3462 = vmul.f32 %v3454, %v3336
        %v3463 = vmul.f32 %v3455, %v3351
        %v3464 = vmul.f32 %v3456, %v3366
        %v3465 = vmul.f32 %v3457, %v3381
        %v3466 = vmul.f32 %v3458, %v3396
        %v3467 = vmul.f32 %v3459, %v3411
        %v3468 = vadd.f32 %v3460, 0.2548296
        %v3469 = vadd.f32 %v3461, 0.2548296
        %v3470 = vadd.f32 %v3462, 0.2548296
        %v3471 = vadd.f32 %v3463, 0.2548296
        %v3472 = vadd.f32 %v3464, 0.2548296
        %v3473 = vadd.f32 %v3465, 0.2548296
        %v3474 = vadd.f32 %v3466, 0.2548296
        %v3475 = vadd.f32 %v3467, 0.2548296
        %v3476 = vmul.f32 %v3468, %v3306
        %v3477 = vmul.f32 %v3469, %v3321
        %v3478 = vmul.f32 %v3470, %v3336
        %v3479 = vmul.f32 %v3471, %v3351
        %v3480 = vmul.f32 %v3472, %v3366
        %v3481 = vmul.f32 %v3473, %v3381
        %v3482 = vmul.f32 %v3474, %v3396
        %v3483 = vmul.f32 %v3475, %v3411
        %v3484 = vsub.f32 0.0, %v3268
        %v3485 = vsub.f32 0.0, %v3269
        %v3486 = vsub.f32 0.0, %v3270
        %v3487 = vsub.f32 0.0, %v3271
        %v3488 = vsub.f32 0.0, %v3272
        %v3489 = vsub.f32 0.0, %v3273
        %v3490 = vsub.f32 0.0, %v3274
        %v3491 = vsub.f32 0.0, %v3275
        %v3492 = vmul.f32 %v3484, %v3268
        %v3493 = vmul.f32 %v3485, %v3269
        %v3494 = vmul.f32 %v3486, %v3270
        %v3495 = vmul.f32 %v3487, %v3271
        %v3496 = vmul.f32 %v3488, %v3272
        %v3497 = vmul.f32 %v3489, %v3273
        %v3498 = vmul.f32 %v3490, %v3274
        %v3499 = vmul.f32 %v3491, %v3275
        %v3500 = vmul.f32 %v3492, 1.442695
        %v3501 = vpow.pop %v3500
        %v3502 = vmul.f32 %v3493, 1.442695
        %v3503 = vpow.pop %v3502
        %v3504 = vmul.f32 %v3494, 1.442695
        %v3505 = vpow.pop %v3504
        %v3506 = vmul.f32 %v3495, 1.442695
        %v3507 = vpow.pop %v3506
        %v3508 = vmul.f32 %v3496, 1.442695
        %v3509 = vpow.pop %v3508
        %v3510 = vmul.f32 %v3497, 1.442695
        %v3511 = vpow.pop %v3510
        %v3512 = vmul.f32 %v3498, 1.442695
        %v3513 = vpow.pop %v3512
        %v3514 = vmul.f32 %v3499, 1.442695
        %v3515 = vpow.pop %v3514
        %v3516 = vmul.f32 %v3476, %v3501
        %v3517 = vmul.f32 %v3477, %v3503
        %v3518 = vmul.f32 %v3478, %v3505
        %v3519 = vmul.f32 %v3479, %v3507
        %v3520 = vmul.f32 %v3480, %v3509
        %v3521 = vmul.f32 %v3481, %v3511
        %v3522 = vmul.f32 %v3482, %v3513
        %v3523 = vmul.f32 %v3483, %v3515
        %v3524 = vsub.f32 1.0, %v3516
        %v3525 = vsub.f32 1.0, %v3517
        %v3526 = vsub.f32 1.0, %v3518
        %v3527 = vsub.f32 1.0, %v3519
        %v3528 = vsub.f32 1.0, %v3520
        %v3529 = vsub.f32 1.0, %v3521
        %v3530 = vsub.f32 1.0, %v3522
        %v3531 = vsub.f32 1.0, %v3523
        %vm3532 = vcmp.lt.f32.partialorder %v3260, 0.0
        %vm3533 = vcmp.lt.f32.partialorder %v3261, 0.0
        %vm3534 = vcmp.lt.f32.partialorder %v3262, 0.0
        %vm3535 = vcmp.lt.f32.partialorder %v3263, 0.0
        %vm3536 = vcmp.lt.f32.partialorder %v3264, 0.0
        %vm3537 = vcmp.lt.f32.partialorder %v3265, 0.0
        %vm3538 = vcmp.lt.f32.partialorder %v3266, 0.0
        %vm3539 = vcmp.lt.f32.partialorder %v3267, 0.0
        %v3540 = vsub.f32 0.0, %v3524
        %v3541 = vsub.f32 0.0, %v3525
        %v3542 = vsub.f32 0.0, %v3526
        %v3543 = vsub.f32 0.0, %v3527
        %v3544 = vsub.f32 0.0, %v3528
        %v3545 = vsub.f32 0.0, %v3529
        %v3546 = vsub.f32 0.0, %v3530
        %v3547 = vsub.f32 0.0, %v3531
        %v3548 = vsel %vm3532, %v3540, %v3524
        %v3549 = vsel %vm3533, %v3541, %v3525
        %v3550 = vsel %vm3534, %v3542, %v3526
        %v3551 = vsel %vm3535, %v3543, %v3527
        %v3552 = vsel %vm3536, %v3544, %v3528
        %v3553 = vsel %vm3537, %v3545, %v3529
        %v3554 = vsel %vm3538, %v3546, %v3530
        %v3555 = vsel %vm3539, %v3547, %v3531
        %v3556 = vadd.f32 %v3548, 1.0
        %v3557 = vadd.f32 %v3549, 1.0
        %v3558 = vadd.f32 %v3550, 1.0
        %v3559 = vadd.f32 %v3551, 1.0
        %v3560 = vadd.f32 %v3552, 1.0
        %v3561 = vadd.f32 %v3553, 1.0
        %v3562 = vadd.f32 %v3554, 1.0
        %v3563 = vadd.f32 %v3555, 1.0
        %v3564 = vmul.f32 %v3252, %v3556
        %v3565 = vmul.f32 %v3253, %v3557
        %v3566 = vmul.f32 %v3254, %v3558
        %v3567 = vmul.f32 %v3255, %v3559
        %v3568 = vmul.f32 %v3256, %v3560
        %v3569 = vmul.f32 %v3257, %v3561
        %v3570 = vmul.f32 %v3258, %v3562
        %v3571 = vmul.f32 %v3259, %v3563
        %3572 = vst.msk [vmem:[%s271] sm:$0xff] %vm301, %v3564
        %3573 = vst.msk [vmem:[%s271 + $0x8] sm:$0xff] %vm301, %v3565
        %3574 = vst.msk [vmem:[%s271 + $0x10] sm:$0xff] %vm301, %v3566
        %3575 = vst.msk [vmem:[%s271 + $0x18] sm:$0xff] %vm301, %v3567
        %3576 = vst.msk [vmem:[%s271 + $0x20] sm:$0xff] %vm301, %v3568
        %3577 = vst.msk [vmem:[%s271 + $0x28] sm:$0xff] %vm301, %v3569
        %3578 = vst.msk [vmem:[%s271 + $0x30] sm:$0xff] %vm301, %v3570
        %3579 = vst.msk [vmem:[%s271 + $0x38] sm:$0xff] %vm301, %v3571
        %s3580 = sand.u32 %s181, 1
        %s3581 = scalar_lea.sflag [#allocation5], %s3580
        %s3582 = sand.u32 %s181, 1
        %s3583 = smul.addr %s3582, 64
        %s3584 = scalar_lea.vmem [#allocation4], %s3583
        // Predicated region
        $region49: #{tpu_custom_call.1} parent=47 // pred_check
          %p3585 = pneg %p191
        $region50: #{tpu_custom_call.1} parent=47 // pred_check_branch
          %3587 = sbr.rel (%p3585) target = $region52
        $region51: #{tpu_custom_call.1} parent=47 // pred_region
          %3589 = vsyncadd %s3581, 0
          %s3590 = smul.addr %s21, 8
          %s3591 = smul.addr %s3590, 8
          %s3592 = scalar_lea.hbm %s7, %s3591
          %s3593 = sshll.u32 %s3584, 4
          %s3594 = int_to_ptr.vmem [resolvable:$true] %s3593
          %s3595 = sshll.u32 %s3592, 4
          %s3596 = int_to_ptr.hbm [resolvable:$true] %s3595
          %3601 = dma.vmem_to_hbm [thread:$0]  %s3594, 1024, %s3596, %s3581, 128, 128, 8
        $region52: #{tpu_custom_call.1} parent=47 // pred_fallthru
          _
      $region48: #{tpu_custom_call.1} parent=5 // pred_fallthru
        _
      %p3602 = scmp.le.s32.totalorder 2, %s16
      // Predicated region
      $region53: #{tpu_custom_call.1} parent=5 // pred_check
        %p3603 = pneg %p3602
      $region54: #{tpu_custom_call.1} parent=5 // pred_check_branch
        %3605 = sbr.rel (%p3603) target = $region56
      $region55: #{tpu_custom_call.1} parent=5 // pred_region
        %s3606 = ssub.s32 %s16, 2
        // Predicated region
        $region57: #{tpu_custom_call.1} parent=55 // pred_check
          %p3607 = pneg %p197
        $region58: #{tpu_custom_call.1} parent=55 // pred_check_branch
          %3609 = sbr.rel (%p3607) target = $region60
        $region59: #{tpu_custom_call.1} parent=55 // pred_region
          %s3610 = sand.u32 %s182, 1
          %s3611 = scalar_lea.sflag [#allocation5], %s3610
          %s3612 = sand.u32 %s182, 1
          %s3613 = smul.addr %s3612, 64
          %s3614 = scalar_lea.vmem [#allocation4], %s3613
          %3616 = dma.done %s3611, 1024
        $region60: #{tpu_custom_call.1} parent=55 // pred_fallthru
          _
      $region56: #{tpu_custom_call.1} parent=5 // pred_fallthru
        _
    $region6: #{tpu_custom_call.1} parent=1 // loop_footer
      %s20 = sadd.s32 1, %s16
    $region7: #{tpu_custom_call.1} parent=1 // loop_footer_branch
      %15 = sbr.rel target = $region3
    $region8: #{tpu_custom_call.1} parent=1 // loop_exit
      _
    %3617 = vsyncpa [#allocation5], 1
    %s3618 = scalar_lea.sflag [#allocation5], 1
    %3619 = vsyncpa %s3618, 1

</llo_original>
